<compile_context>
chip_gen: v6e
topology: v6e:2x2x1
jax: 0.10.0
libtpu: 0.0.40
codegen_flags: <defaults>
</compile_context>

<pallas_src>
import functools

import jax
import jax.numpy as jnp
from jax.experimental import pallas as pl
from jax.experimental.pallas import tpu as pltpu

EPS = 1e-5
LANE = 128                      # channel padding target (vreg lane width)
TM_CAP = 1024                   # max rows per 1x1/finalize tile
TM_BUDGET = 4 << 20             # per-block VMEM budget used to cap TM
VMEM_LIMIT = 32 * 1024 * 1024   # explicit scoped-VMEM cap (safe on v5e/v6e/v7x)


# --------------------------------------------------------------------------
# small host-side helpers
# --------------------------------------------------------------------------
def _rup(n, m):
    return -(-n // m) * m


def _pad_last(a, target):
    pad = target - a.shape[-1]
    if pad == 0:
        return a
    cfg = [(0, 0)] * (a.ndim - 1) + [(0, pad)]
    return jnp.pad(a, cfg)


def _choose_tm(m, bytes_per_row, budget=TM_BUDGET, cap=TM_CAP):
    """Largest multiple of 8 that divides m, capped by VMEM budget; 0 if none."""
    limit = min(cap, max(8, budget // max(bytes_per_row, 1)))
    limit = (limit // 8) * 8
    best = 0
    t = 8
    while t <= min(limit, m):
        if m % t == 0:
            best = t
        t += 8
    return best


def _bn_fold(stats, count, gamma, beta, cp):
    """Reduce per-tile (sum, sumsq) partials -> folded BN scale/shift [1, cp]."""
    s = jnp.sum(stats.astype(jnp.float32), axis=0)            # [2, cp]
    mu = s[0] / count
    var = jnp.maximum(s[1] / count - mu * mu, 0.0)             # E[y^2] - mu^2
    inv = jax.lax.rsqrt(var + EPS)
    gamma_p = _pad_last(jnp.reshape(gamma, (1, -1)).astype(jnp.float32), cp)
    beta_p = _pad_last(jnp.reshape(beta, (1, -1)).astype(jnp.float32), cp)
    scale = gamma_p * inv[None, :]
    shift = beta_p - mu[None, :] * scale
    return scale, shift


# --------------------------------------------------------------------------
# kernel bodies
# --------------------------------------------------------------------------
def _matmul_stats_kernel(x_ref, w_ref, scale_ref, shift_ref, y_ref, stats_ref,
                         *, tm, m_total, apply_bn_relu, mask_rows):
    """(optional folded-BN + ReLU) -> 1x1 conv (matmul) -> per-tile BN partials.

    Stats are computed from the f32 accumulator; the activation is stored bf16.
    """
    x = x_ref[...]
    if apply_bn_relu:
        a = jnp.maximum(scale_ref[...] * x.astype(jnp.float32) + shift_ref[...], 0.0)
        a = a.astype(jnp.bfloat16)
    else:
        a = x.astype(jnp.bfloat16)          # in-kernel cast (no host-side bf16 copy)
    y = jnp.dot(a, w_ref[...], preferred_element_type=jnp.float32)  # [tm, Cout_p] f32
    y_ref[...] = y.astype(y_ref.dtype)

    if mask_rows:
        # only needed when the row count was padded (mp != m); compiled out otherwise
        row = pl.program_id(0) * tm + jax.lax.broadcasted_iota(jnp.int32, (tm, 1), 0)
        yv = jnp.where(row < m_total, y, 0.0)
    else:
        yv = y
    s1 = jnp.sum(yv, axis=0, keepdims=True)              # [1, Cout_p]
    s2 = jnp.sum(yv * yv, axis=0, keepdims=True)         # [1, Cout_p]
    stats_ref[...] = jnp.concatenate([s1, s2], axis=0)[None]


def _conv3x3_kernel(y1_ref, w2_ref, scale_ref, shift_ref, y2_ref, stats_ref,
                    *, h, w):
    """folded-BN1 + ReLU -> 3x3 conv as 3 tap-grouped matmuls -> BN partials.

    Reads a flat (H*W, C) bf16 row-block, reshapes in-kernel, builds a 1-pixel
    bf16 halo, accumulates 3 matmuls (one per ky row of the kernel, K = 3*C).
    """
    hw, cp = y1_ref.shape
    a = jnp.maximum(scale_ref[...] * y1_ref[...].astype(jnp.float32)
                    + shift_ref[...], 0.0).astype(jnp.bfloat16)   # bf16 before halo
    a = a.reshape(h, w, cp)

    # 1-pixel halo built as an in-register bf16 value (no VMEM scratch round trip)
    zrow = jnp.zeros((1, w, cp), jnp.bfloat16)
    zcol = jnp.zeros((h + 2, 1, cp), jnp.bfloat16)
    ap = jnp.concatenate([zrow, a, zrow], axis=0)
    ap = jnp.concatenate([zcol, ap, zcol], axis=1)                # [h+2, w+2, cp]

    acc = jnp.zeros((hw, cp), jnp.float32)
    for dy in range(3):                                           # static unroll
        slab = ap[dy:dy + h]                                      # [h, w+2, cp]
        grp = jnp.concatenate([slab[:, dx:dx + w, :] for dx in range(3)], axis=-1)
        acc = acc + jnp.dot(grp.reshape(hw, 3 * cp), w2_ref[dy],
                            preferred_element_type=jnp.float32)   # [hw, cp]

    y2_ref[...] = acc.astype(y2_ref.dtype)
    s1 = jnp.sum(acc, axis=0, keepdims=True)
    s2 = jnp.sum(acc * acc, axis=0, keepdims=True)
    stats_ref[...] = jnp.concatenate([s1, s2], axis=0)[None]


def _finalize_kernel(y3_ref, x_ref, scale_ref, shift_ref, o_ref):
    """folded-BN3 + identity residual + ReLU (f32 math, bf16 y3 input)."""
    y = scale_ref[...] * y3_ref[...].astype(jnp.float32) + shift_ref[...] + x_ref[...]
    o_ref[...] = jnp.maximum(y, 0.0)


# --------------------------------------------------------------------------
# pallas_call wrappers
# --------------------------------------------------------------------------
_CPARAMS = pltpu.CompilerParams(dimension_semantics=("parallel",),
                                vmem_limit_bytes=VMEM_LIMIT)


def _conv1x1_stats(x, w, scale, shift, *, tm, m_total, apply_bn_relu):
    mp, cin_p = x.shape
    cout_p = w.shape[1]
    t = mp // tm
    kernel = functools.partial(_matmul_stats_kernel, tm=tm, m_total=m_total,
                               apply_bn_relu=apply_bn_relu,
                               mask_rows=(mp != m_total))
    return pl.pallas_call(
        kernel,
        grid=(t,),
        in_specs=[
            pl.BlockSpec((tm, cin_p), lambda i: (i, 0)),
            pl.BlockSpec((cin_p, cout_p), lambda i: (0, 0)),
            pl.BlockSpec((1, cin_p), lambda i: (0, 0)),
            pl.BlockSpec((1, cin_p), lambda i: (0, 0)),
        ],
        out_specs=[
            pl.BlockSpec((tm, cout_p), lambda i: (i, 0)),
            pl.BlockSpec((1, 2, cout_p), lambda i: (i, 0, 0)),
        ],
        out_shape=[
            jax.ShapeDtypeStruct((mp, cout_p), jnp.bfloat16),     # bf16 activation
            jax.ShapeDtypeStruct((t, 2, cout_p), jnp.float32),    # exact f32 partials
        ],
        compiler_params=_CPARAMS,
    )(x, w, scale, shift)


def _conv3x3_stats(y1_flat, w2g, scale, shift, *, n, h, w):
    cp = y1_flat.shape[1]
    hw = h * w
    kernel = functools.partial(_conv3x3_kernel, h=h, w=w)
    return pl.pallas_call(
        kernel,
        grid=(n,),
        in_specs=[
            pl.BlockSpec((hw, cp), lambda i: (i, 0)),             # flat rows, no host reshape
            pl.BlockSpec(w2g.shape, lambda i: (0, 0, 0)),
            pl.BlockSpec((1, cp), lambda i: (0, 0)),
            pl.BlockSpec((1, cp), lambda i: (0, 0)),
        ],
        out_specs=[
            pl.BlockSpec((hw, cp), lambda i: (i, 0)),
            pl.BlockSpec((1, 2, cp), lambda i: (i, 0, 0)),
        ],
        out_shape=[
            jax.ShapeDtypeStruct((n * hw, cp), jnp.bfloat16),
            jax.ShapeDtypeStruct((n, 2, cp), jnp.float32),
        ],
        compiler_params=_CPARAMS,
    )(y1_flat, w2g, scale, shift)


def _finalize(y3, x_rows, scale, shift, *, tm):
    mp, cout_p = y3.shape
    t = mp // tm
    return pl.pallas_call(
        _finalize_kernel,
        grid=(t,),
        in_specs=[
            pl.BlockSpec((tm, cout_p), lambda i: (i, 0)),
            pl.BlockSpec((tm, cout_p), lambda i: (i, 0)),
            pl.BlockSpec((1, cout_p), lambda i: (0, 0)),
            pl.BlockSpec((1, cout_p), lambda i: (0, 0)),
        ],
        out_specs=pl.BlockSpec((tm, cout_p), lambda i: (i, 0)),
        out_shape=jax.ShapeDtypeStruct((mp, cout_p), jnp.float32),
        compiler_params=_CPARAMS,
    )(y3, x_rows, scale, shift)


# --------------------------------------------------------------------------
# public forward
# --------------------------------------------------------------------------
def bottleneck_forward(x_nchw, params):
    """x_nchw: [N, Cin, H, W] float32, Cin must equal out_channels * 4."""
    x = jnp.transpose(x_nchw, (0, 2, 3, 1)).astype(jnp.float32)   # -> NHWC
    n, h, w, cin = x.shape
    cmid = params["w1"].shape[1]
    cout = params["w3"].shape[1]
    assert cin == cout, "identity skip (stride=1, i_downsample=None) needs in_channels == out_channels*4"
    assert (h * w) % 8 == 0, "3x3 pass needs H*W to be a multiple of 8"

    cpi, cpm, cpo = _rup(cin, LANE), _rup(cmid, LANE), _rup(cout, LANE)
    m = n * h * w

    # row tile: largest multiple of 8 dividing M (so mp == m, no mask / padding)
    max_c = max(cpi, cpm, cpo)
    tm = _choose_tm(m, bytes_per_row=10 * max_c)
    if tm == 0:                       # fallback: pad rows and mask stats
        tm = 256
        mp = _rup(m, tm)
    else:
        mp = m

    # lane-pad channels, flatten spatial; f32 rows are reused for the residual.
    x_rows = _pad_last(x, cpi).reshape(m, cpi)
    if mp != m:
        x_rows = jnp.pad(x_rows, ((0, mp - m), (0, 0)))

    # lane-padded bf16 weights (conv biases unused: cancelled by training-mode BN)
    w1 = jnp.pad(params["w1"], ((0, cpi - cin), (0, cpm - cmid))).astype(jnp.bfloat16)
    w2 = jnp.pad(params["w2"], ((0, 0), (0, 0), (0, cpm - cmid), (0, cpm - cmid)))
    w2g = w2.reshape(3, 3 * cpm, cpm).astype(jnp.bfloat16)        # grouped per ky
    w3 = jnp.pad(params["w3"], ((0, cpm - cmid), (0, cpo - cout))).astype(jnp.bfloat16)

    dummy_s = jnp.ones((1, cpi), jnp.float32)
    dummy_b = jnp.zeros((1, cpi), jnp.float32)

    # pass 1: conv1 (1x1) + BN1 partial stats (f32 input cast to bf16 in-kernel)
    y1, st1 = _conv1x1_stats(x_rows, w1, dummy_s, dummy_b,
                             tm=tm, m_total=m, apply_bn_relu=False)
    sc1, sh1 = _bn_fold(st1, m, params["g1"], params["be1"], cpm)

    # pass 2: BN1+ReLU -> conv2 (3x3, tap-grouped matmuls) + BN2 partial stats
    y2, st2 = _conv3x3_stats(y1, w2g, sc1, sh1, n=n, h=h, w=w)
    sc2, sh2 = _bn_fold(st2, m, params["g2"], params["be2"], cpm)

    # pass 3: BN2+ReLU -> conv3 (1x1) + BN3 partial stats
    if mp != m:
        y2 = jnp.pad(y2, ((0, mp - m), (0, 0)))
    y3, st3 = _conv1x1_stats(y2, w3, sc2, sh2,
                             tm=tm, m_total=m, apply_bn_relu=True)
    sc3, sh3 = _bn_fold(st3, m, params["g3"], params["be3"], cpo)

    # pass 4: BN3 + identity residual + ReLU
    out = _finalize(y3, x_rows, sc3, sh3, tm=tm)

    out = out[:m, :cout].reshape(n, h, w, cout)
    return jnp.transpose(out, (0, 3, 1, 2))   # back to NCHW


# --------------------------------------------------------------------------
# synthetic parameters (shapes match the PyTorch module)
# --------------------------------------------------------------------------
def make_params(key, in_channels, out_channels):
    exp = 4
    cout = out_channels * exp
    ks = jax.random.split(key, 6)
    f32 = jnp.float32
    return {
        # conv1: 1x1, in -> mid   (stored as [Cin, Cmid] for y = x @ w)
        "w1": jax.random.normal(ks[0], (in_channels, out_channels), f32) * 0.1,
        # conv biases exist in the PyTorch module but are exactly cancelled by
        # training-mode BatchNorm's mean subtraction -> not used in the kernels.
        "b1": jax.random.normal(ks[1], (1, out_channels), f32) * 0.01,
        "g1": jnp.ones((1, out_channels), f32),
        "be1": jnp.zeros((1, out_channels), f32),
        # conv2: 3x3, mid -> mid  (stored as [kh, kw, Cin, Cout])
        "w2": jax.random.normal(ks[2], (3, 3, out_channels, out_channels), f32) * 0.1,
        "b2": jax.random.normal(ks[3], (1, out_channels), f32) * 0.01,
        "g2": jnp.ones((1, out_channels), f32),
        "be2": jnp.zeros((1, out_channels), f32),
        # conv3: 1x1, mid -> mid*4
        "w3": jax.random.normal(ks[4], (out_channels, cout), f32) * 0.1,
        "b3": jax.random.normal(ks[5], (1, cout), f32) * 0.01,
        "g3": jnp.ones((1, cout), f32),
        "be3": jnp.zeros((1, cout), f32),
    }


if __name__ == "__main__":
    key = jax.random.PRNGKey(0)
    k_x, k_p = jax.random.split(key)

    N, out_channels, H, W = 2, 4, 16, 16
    in_channels = out_channels * 4            # 16, so identity skip is shape-legal

    x = jax.random.normal(k_x, (N, in_channels, H, W), jnp.float32)   # NCHW input
    params = make_params(k_p, in_channels, out_channels)

    fwd = jax.jit(functools.partial(bottleneck_forward, params=params))
    y = fwd(x)
    jax.block_until_ready(y)

    assert y.shape == (N, in_channels, H, W)
    assert bool(jnp.all(jnp.isfinite(y)))
    assert bool(jnp.all(y >= 0.0))            # final ReLU
    print("KERNEL_OK")
</pallas_src>

<mosaic_0001>
module attributes {stable_mosaic.version = 11 : i64} {
  func.func @_matmul_stats_kernel(%arg0: i32, %arg1: memref<512x128xf32, #tpu.memory_space<vmem>>, %arg2: memref<128x128xbf16, #tpu.memory_space<vmem>>, %arg3: memref<1x128xf32, #tpu.memory_space<vmem>>, %arg4: memref<1x128xf32, #tpu.memory_space<vmem>>, %arg5: memref<512x128xbf16, #tpu.memory_space<vmem>>, %arg6: memref<1x2x128xf32, #tpu.memory_space<vmem>>) attributes {dimension_semantics = [#tpu.dimension_semantics<parallel>], iteration_bounds = array<i64: 1>, scalar_prefetch = 0 : i64, scratch_operands = 0 : i64, tpu.core_type = #tpu.core_type<tc>, window_params = [{transform_indices = @transform_0, window_bounds = array<i64: 512, 128>}, {pipeline_mode = #tpu.pipeline_mode<synchronous>, transform_indices = @transform_1, window_bounds = array<i64: 128, 128>}, {pipeline_mode = #tpu.pipeline_mode<synchronous>, transform_indices = @transform_2, window_bounds = array<i64: 1, 128>}, {pipeline_mode = #tpu.pipeline_mode<synchronous>, transform_indices = @transform_3, window_bounds = array<i64: 1, 128>}, {transform_indices = @transform_4, window_bounds = array<i64: 512, 128>}, {transform_indices = @transform_5, window_bounds = array<i64: 1, 2, 128>}]} {
    %c0 = arith.constant 0 : index
    %c0_0 = arith.constant 0 : index
    %0 = vector.load %arg1[%c0, %c0_0] : memref<512x128xf32, #tpu.memory_space<vmem>>, vector<512x128xf32>
    %1 = arith.truncf %0 : vector<512x128xf32> to vector<512x128xbf16>
    %c0_1 = arith.constant 0 : index
    %c0_2 = arith.constant 0 : index
    %2 = vector.load %arg2[%c0_1, %c0_2] : memref<128x128xbf16, #tpu.memory_space<vmem>>, vector<128x128xbf16>
    %cst = arith.constant dense<0.000000e+00> : vector<512x128xf32>
    %3 = tpu.matmul %1, %2, %cst {dimension_numbers = #tpu.dot_dimension_numbers<[1], [0], [0], [1], [0, 0, 1, 1], [], []>} : vector<512x128xbf16>, vector<128x128xbf16>, vector<512x128xf32> -> vector<512x128xf32>
    %4 = arith.truncf %3 : vector<512x128xf32> to vector<512x128xbf16>
    %c0_3 = arith.constant 0 : index
    %c0_4 = arith.constant 0 : index
    %5 = vector.load %arg5[%c0_3, %c0_4] : memref<512x128xbf16, #tpu.memory_space<vmem>>, vector<512x128xbf16>
    tpu.vector_store %arg5[%c0_3, %c0_4], %4 {strides = array<i32>} : memref<512x128xbf16, #tpu.memory_space<vmem>>, vector<512x128xbf16>,
    %cst_5 = arith.constant dense<0.000000e+00> : vector<128xf32>
    %6 = vector.multi_reduction <add>, %3, %cst_5 [0] : vector<512x128xf32> to vector<128xf32>
    %7 = vector.shape_cast %6 : vector<128xf32> to vector<1x128xf32>
    %8 = arith.mulf %3, %3 : vector<512x128xf32>
    %cst_6 = arith.constant dense<0.000000e+00> : vector<128xf32>
    %9 = vector.multi_reduction <add>, %8, %cst_6 [0] : vector<512x128xf32> to vector<128xf32>
    %10 = vector.shape_cast %9 : vector<128xf32> to vector<1x128xf32>
    %11 = tpu.concatenate %7, %10 in 0 : vector<1x128xf32>, vector<1x128xf32> -> vector<2x128xf32>
    %12 = vector.shape_cast %11 : vector<2x128xf32> to vector<1x2x128xf32>
    %c0_7 = arith.constant 0 : index
    %c0_8 = arith.constant 0 : index
    %c0_9 = arith.constant 0 : index
    %13 = vector.load %arg6[%c0_7, %c0_8, %c0_9] : memref<1x2x128xf32, #tpu.memory_space<vmem>>, vector<1x2x128xf32>
    tpu.vector_store %arg6[%c0_7, %c0_8, %c0_9], %12 {strides = array<i32>} : memref<1x2x128xf32, #tpu.memory_space<vmem>>, vector<1x2x128xf32>,
    return
  }
  func.func @transform_0(%arg0: i32) -> (i32, i32) {
    %c0_i32 = arith.constant 0 : i32
    %c0_i32_0 = arith.constant 0 : i32
    return %arg0, %c0_i32 : i32, i32
  }
  func.func @transform_1(%arg0: i32) -> (i32, i32) {
    %c0_i32 = arith.constant 0 : i32
    %c0_i32_0 = arith.constant 0 : i32
    %c0_i32_1 = arith.constant 0 : i32
    return %c0_i32, %c0_i32_0 : i32, i32
  }
  func.func @transform_2(%arg0: i32) -> (i32, i32) {
    %c0_i32 = arith.constant 0 : i32
    %c0_i32_0 = arith.constant 0 : i32
    %c0_i32_1 = arith.constant 0 : i32
    return %c0_i32, %c0_i32_0 : i32, i32
  }
  func.func @transform_3(%arg0: i32) -> (i32, i32) {
    %c0_i32 = arith.constant 0 : i32
    %c0_i32_0 = arith.constant 0 : i32
    %c0_i32_1 = arith.constant 0 : i32
    return %c0_i32, %c0_i32_0 : i32, i32
  }
  func.func @transform_4(%arg0: i32) -> (i32, i32) {
    %c0_i32 = arith.constant 0 : i32
    %c0_i32_0 = arith.constant 0 : i32
    return %arg0, %c0_i32 : i32, i32
  }
  func.func @transform_5(%arg0: i32) -> (i32, i32, i32) {
    %c0_i32 = arith.constant 0 : i32
    %c0_i32_0 = arith.constant 0 : i32
    %c0_i32_1 = arith.constant 0 : i32
    return %arg0, %c0_i32, %c0_i32_0 : i32, i32, i32
  }
}

module attributes {stable_mosaic.version = 11 : i64} {
  func.func @_conv3x3_kernel(%arg0: i32, %arg1: memref<256x128xbf16, #tpu.memory_space<vmem>>, %arg2: memref<3x384x128xbf16, #tpu.memory_space<vmem>>, %arg3: memref<1x128xf32, #tpu.memory_space<vmem>>, %arg4: memref<1x128xf32, #tpu.memory_space<vmem>>, %arg5: memref<256x128xbf16, #tpu.memory_space<vmem>>, %arg6: memref<1x2x128xf32, #tpu.memory_space<vmem>>) attributes {dimension_semantics = [#tpu.dimension_semantics<parallel>], iteration_bounds = array<i64: 2>, scalar_prefetch = 0 : i64, scratch_operands = 0 : i64, tpu.core_type = #tpu.core_type<tc>, window_params = [{transform_indices = @transform_0, window_bounds = array<i64: 256, 128>}, {pipeline_mode = #tpu.pipeline_mode<synchronous>, transform_indices = @transform_1, window_bounds = array<i64: 3, 384, 128>}, {pipeline_mode = #tpu.pipeline_mode<synchronous>, transform_indices = @transform_2, window_bounds = array<i64: 1, 128>}, {pipeline_mode = #tpu.pipeline_mode<synchronous>, transform_indices = @transform_3, window_bounds = array<i64: 1, 128>}, {transform_indices = @transform_4, window_bounds = array<i64: 256, 128>}, {transform_indices = @transform_5, window_bounds = array<i64: 1, 2, 128>}]} {
    %c0 = arith.constant 0 : index
    %c0_0 = arith.constant 0 : index
    %0 = vector.load %arg3[%c0, %c0_0] : memref<1x128xf32, #tpu.memory_space<vmem>>, vector<1x128xf32>
    %c0_1 = arith.constant 0 : index
    %c0_2 = arith.constant 0 : index
    %1 = vector.load %arg1[%c0_1, %c0_2] : memref<256x128xbf16, #tpu.memory_space<vmem>>, vector<256x128xbf16>
    %2 = arith.extf %1 : vector<256x128xbf16> to vector<256x128xf32>
    %3 = vector.broadcast %0 : vector<1x128xf32> to vector<256x128xf32>
    %4 = arith.mulf %3, %2 : vector<256x128xf32>
    %c0_3 = arith.constant 0 : index
    %c0_4 = arith.constant 0 : index
    %5 = vector.load %arg4[%c0_3, %c0_4] : memref<1x128xf32, #tpu.memory_space<vmem>>, vector<1x128xf32>
    %6 = vector.broadcast %5 : vector<1x128xf32> to vector<256x128xf32>
    %7 = arith.addf %4, %6 : vector<256x128xf32>
    %cst = arith.constant 0.000000e+00 : f32
    %8 = vector.broadcast %cst : f32 to vector<256x128xf32>
    %9 = arith.maximumf %7, %8 : vector<256x128xf32>
    %10 = arith.truncf %9 : vector<256x128xf32> to vector<256x128xbf16>
    %11 = vector.shape_cast %10 : vector<256x128xbf16> to vector<16x16x128xbf16>
    %cst_5 = arith.constant 0.000000e+00 : bf16
    %12 = vector.broadcast %cst_5 : bf16 to vector<1x16x128xbf16>
    %cst_6 = arith.constant 0.000000e+00 : bf16
    %13 = vector.broadcast %cst_6 : bf16 to vector<18x1x128xbf16>
    %14 = tpu.concatenate %12, %11, %12 in 0 : vector<1x16x128xbf16>, vector<16x16x128xbf16>, vector<1x16x128xbf16> -> vector<18x16x128xbf16>
    %15 = tpu.concatenate %13, %14, %13 in 1 : vector<18x1x128xbf16>, vector<18x16x128xbf16>, vector<18x1x128xbf16> -> vector<18x18x128xbf16>
    %cst_7 = arith.constant 0.000000e+00 : f32
    %16 = vector.broadcast %cst_7 : f32 to vector<256x128xf32>
    %17 = vector.extract_strided_slice %15 {offsets = [0, 0, 0], sizes = [16, 18, 128], strides = [1, 1, 1]} : vector<18x18x128xbf16> to vector<16x18x128xbf16>
    %18 = vector.extract_strided_slice %17 {offsets = [0, 0, 0], sizes = [16, 16, 128], strides = [1, 1, 1]} : vector<16x18x128xbf16> to vector<16x16x128xbf16>
    %19 = vector.extract_strided_slice %17 {offsets = [0, 1, 0], sizes = [16, 16, 128], strides = [1, 1, 1]} : vector<16x18x128xbf16> to vector<16x16x128xbf16>
    %20 = vector.extract_strided_slice %17 {offsets = [0, 2, 0], sizes = [16, 16, 128], strides = [1, 1, 1]} : vector<16x18x128xbf16> to vector<16x16x128xbf16>
    %21 = tpu.concatenate %18, %19, %20 in 2 : vector<16x16x128xbf16>, vector<16x16x128xbf16>, vector<16x16x128xbf16> -> vector<16x16x384xbf16>
    %22 = vector.shape_cast %21 : vector<16x16x384xbf16> to vector<256x384xbf16>
    %c0_8 = arith.constant 0 : index
    %c0_9 = arith.constant 0 : index
    %c0_10 = arith.constant 0 : index
    %23 = vector.load %arg2[%c0_8, %c0_9, %c0_10] : memref<3x384x128xbf16, #tpu.memory_space<vmem>>, vector<1x384x128xbf16>
    %24 = vector.shape_cast %23 : vector<1x384x128xbf16> to vector<384x128xbf16>
    %cst_11 = arith.constant dense<0.000000e+00> : vector<256x128xf32>
    %25 = tpu.matmul %22, %24, %cst_11 {dimension_numbers = #tpu.dot_dimension_numbers<[1], [0], [0], [1], [0, 0, 1, 1], [], []>} : vector<256x384xbf16>, vector<384x128xbf16>, vector<256x128xf32> -> vector<256x128xf32>
    %26 = arith.addf %16, %25 : vector<256x128xf32>
    %27 = vector.extract_strided_slice %15 {offsets = [1, 0, 0], sizes = [16, 18, 128], strides = [1, 1, 1]} : vector<18x18x128xbf16> to vector<16x18x128xbf16>
    %28 = vector.extract_strided_slice %27 {offsets = [0, 0, 0], sizes = [16, 16, 128], strides = [1, 1, 1]} : vector<16x18x128xbf16> to vector<16x16x128xbf16>
    %29 = vector.extract_strided_slice %27 {offsets = [0, 1, 0], sizes = [16, 16, 128], strides = [1, 1, 1]} : vector<16x18x128xbf16> to vector<16x16x128xbf16>
    %30 = vector.extract_strided_slice %27 {offsets = [0, 2, 0], sizes = [16, 16, 128], strides = [1, 1, 1]} : vector<16x18x128xbf16> to vector<16x16x128xbf16>
    %31 = tpu.concatenate %28, %29, %30 in 2 : vector<16x16x128xbf16>, vector<16x16x128xbf16>, vector<16x16x128xbf16> -> vector<16x16x384xbf16>
    %32 = vector.shape_cast %31 : vector<16x16x384xbf16> to vector<256x384xbf16>
    %c1 = arith.constant 1 : index
    %c0_12 = arith.constant 0 : index
    %c0_13 = arith.constant 0 : index
    %33 = vector.load %arg2[%c1, %c0_12, %c0_13] : memref<3x384x128xbf16, #tpu.memory_space<vmem>>, vector<1x384x128xbf16>
    %34 = vector.shape_cast %33 : vector<1x384x128xbf16> to vector<384x128xbf16>
    %cst_14 = arith.constant dense<0.000000e+00> : vector<256x128xf32>
    %35 = tpu.matmul %32, %34, %cst_14 {dimension_numbers = #tpu.dot_dimension_numbers<[1], [0], [0], [1], [0, 0, 1, 1], [], []>} : vector<256x384xbf16>, vector<384x128xbf16>, vector<256x128xf32> -> vector<256x128xf32>
    %36 = arith.addf %26, %35 : vector<256x128xf32>
    %37 = vector.extract_strided_slice %15 {offsets = [2, 0, 0], sizes = [16, 18, 128], strides = [1, 1, 1]} : vector<18x18x128xbf16> to vector<16x18x128xbf16>
    %38 = vector.extract_strided_slice %37 {offsets = [0, 0, 0], sizes = [16, 16, 128], strides = [1, 1, 1]} : vector<16x18x128xbf16> to vector<16x16x128xbf16>
    %39 = vector.extract_strided_slice %37 {offsets = [0, 1, 0], sizes = [16, 16, 128], strides = [1, 1, 1]} : vector<16x18x128xbf16> to vector<16x16x128xbf16>
    %40 = vector.extract_strided_slice %37 {offsets = [0, 2, 0], sizes = [16, 16, 128], strides = [1, 1, 1]} : vector<16x18x128xbf16> to vector<16x16x128xbf16>
    %41 = tpu.concatenate %38, %39, %40 in 2 : vector<16x16x128xbf16>, vector<16x16x128xbf16>, vector<16x16x128xbf16> -> vector<16x16x384xbf16>
    %42 = vector.shape_cast %41 : vector<16x16x384xbf16> to vector<256x384xbf16>
    %c2 = arith.constant 2 : index
    %c0_15 = arith.constant 0 : index
    %c0_16 = arith.constant 0 : index
    %43 = vector.load %arg2[%c2, %c0_15, %c0_16] : memref<3x384x128xbf16, #tpu.memory_space<vmem>>, vector<1x384x128xbf16>
    %44 = vector.shape_cast %43 : vector<1x384x128xbf16> to vector<384x128xbf16>
    %cst_17 = arith.constant dense<0.000000e+00> : vector<256x128xf32>
    %45 = tpu.matmul %42, %44, %cst_17 {dimension_numbers = #tpu.dot_dimension_numbers<[1], [0], [0], [1], [0, 0, 1, 1], [], []>} : vector<256x384xbf16>, vector<384x128xbf16>, vector<256x128xf32> -> vector<256x128xf32>
    %46 = arith.addf %36, %45 : vector<256x128xf32>
    %47 = arith.truncf %46 : vector<256x128xf32> to vector<256x128xbf16>
    %c0_18 = arith.constant 0 : index
    %c0_19 = arith.constant 0 : index
    %48 = vector.load %arg5[%c0_18, %c0_19] : memref<256x128xbf16, #tpu.memory_space<vmem>>, vector<256x128xbf16>
    tpu.vector_store %arg5[%c0_18, %c0_19], %47 {strides = array<i32>} : memref<256x128xbf16, #tpu.memory_space<vmem>>, vector<256x128xbf16>,
    %cst_20 = arith.constant dense<0.000000e+00> : vector<128xf32>
    %49 = vector.multi_reduction <add>, %46, %cst_20 [0] : vector<256x128xf32> to vector<128xf32>
    %50 = vector.shape_cast %49 : vector<128xf32> to vector<1x128xf32>
    %51 = arith.mulf %46, %46 : vector<256x128xf32>
    %cst_21 = arith.constant dense<0.000000e+00> : vector<128xf32>
    %52 = vector.multi_reduction <add>, %51, %cst_21 [0] : vector<256x128xf32> to vector<128xf32>
    %53 = vector.shape_cast %52 : vector<128xf32> to vector<1x128xf32>
    %54 = tpu.concatenate %50, %53 in 0 : vector<1x128xf32>, vector<1x128xf32> -> vector<2x128xf32>
    %55 = vector.shape_cast %54 : vector<2x128xf32> to vector<1x2x128xf32>
    %c0_22 = arith.constant 0 : index
    %c0_23 = arith.constant 0 : index
    %c0_24 = arith.constant 0 : index
    %56 = vector.load %arg6[%c0_22, %c0_23, %c0_24] : memref<1x2x128xf32, #tpu.memory_space<vmem>>, vector<1x2x128xf32>
    tpu.vector_store %arg6[%c0_22, %c0_23, %c0_24], %55 {strides = array<i32>} : memref<1x2x128xf32, #tpu.memory_space<vmem>>, vector<1x2x128xf32>,
    return
  }
  func.func @transform_0(%arg0: i32) -> (i32, i32) {
    %c0_i32 = arith.constant 0 : i32
    %c0_i32_0 = arith.constant 0 : i32
    return %arg0, %c0_i32 : i32, i32
  }
  func.func @transform_1(%arg0: i32) -> (i32, i32, i32) {
    %c0_i32 = arith.constant 0 : i32
    %c0_i32_0 = arith.constant 0 : i32
    %c0_i32_1 = arith.constant 0 : i32
    %c0_i32_2 = arith.constant 0 : i32
    return %c0_i32, %c0_i32_0, %c0_i32_1 : i32, i32, i32
  }
  func.func @transform_2(%arg0: i32) -> (i32, i32) {
    %c0_i32 = arith.constant 0 : i32
    %c0_i32_0 = arith.constant 0 : i32
    %c0_i32_1 = arith.constant 0 : i32
    return %c0_i32, %c0_i32_0 : i32, i32
  }
  func.func @transform_3(%arg0: i32) -> (i32, i32) {
    %c0_i32 = arith.constant 0 : i32
    %c0_i32_0 = arith.constant 0 : i32
    %c0_i32_1 = arith.constant 0 : i32
    return %c0_i32, %c0_i32_0 : i32, i32
  }
  func.func @transform_4(%arg0: i32) -> (i32, i32) {
    %c0_i32 = arith.constant 0 : i32
    %c0_i32_0 = arith.constant 0 : i32
    return %arg0, %c0_i32 : i32, i32
  }
  func.func @transform_5(%arg0: i32) -> (i32, i32, i32) {
    %c0_i32 = arith.constant 0 : i32
    %c0_i32_0 = arith.constant 0 : i32
    %c0_i32_1 = arith.constant 0 : i32
    return %arg0, %c0_i32, %c0_i32_0 : i32, i32, i32
  }
}

module attributes {stable_mosaic.version = 11 : i64} {
  func.func @_matmul_stats_kernel(%arg0: i32, %arg1: memref<512x128xbf16, #tpu.memory_space<vmem>>, %arg2: memref<128x128xbf16, #tpu.memory_space<vmem>>, %arg3: memref<1x128xf32, #tpu.memory_space<vmem>>, %arg4: memref<1x128xf32, #tpu.memory_space<vmem>>, %arg5: memref<512x128xbf16, #tpu.memory_space<vmem>>, %arg6: memref<1x2x128xf32, #tpu.memory_space<vmem>>) attributes {dimension_semantics = [#tpu.dimension_semantics<parallel>], iteration_bounds = array<i64: 1>, scalar_prefetch = 0 : i64, scratch_operands = 0 : i64, tpu.core_type = #tpu.core_type<tc>, window_params = [{transform_indices = @transform_0, window_bounds = array<i64: 512, 128>}, {pipeline_mode = #tpu.pipeline_mode<synchronous>, transform_indices = @transform_1, window_bounds = array<i64: 128, 128>}, {pipeline_mode = #tpu.pipeline_mode<synchronous>, transform_indices = @transform_2, window_bounds = array<i64: 1, 128>}, {pipeline_mode = #tpu.pipeline_mode<synchronous>, transform_indices = @transform_3, window_bounds = array<i64: 1, 128>}, {transform_indices = @transform_4, window_bounds = array<i64: 512, 128>}, {transform_indices = @transform_5, window_bounds = array<i64: 1, 2, 128>}]} {
    %c0 = arith.constant 0 : index
    %c0_0 = arith.constant 0 : index
    %0 = vector.load %arg1[%c0, %c0_0] : memref<512x128xbf16, #tpu.memory_space<vmem>>, vector<512x128xbf16>
    %c0_1 = arith.constant 0 : index
    %c0_2 = arith.constant 0 : index
    %1 = vector.load %arg3[%c0_1, %c0_2] : memref<1x128xf32, #tpu.memory_space<vmem>>, vector<1x128xf32>
    %2 = arith.extf %0 : vector<512x128xbf16> to vector<512x128xf32>
    %3 = vector.broadcast %1 : vector<1x128xf32> to vector<512x128xf32>
    %4 = arith.mulf %3, %2 : vector<512x128xf32>
    %c0_3 = arith.constant 0 : index
    %c0_4 = arith.constant 0 : index
    %5 = vector.load %arg4[%c0_3, %c0_4] : memref<1x128xf32, #tpu.memory_space<vmem>>, vector<1x128xf32>
    %6 = vector.broadcast %5 : vector<1x128xf32> to vector<512x128xf32>
    %7 = arith.addf %4, %6 : vector<512x128xf32>
    %cst = arith.constant 0.000000e+00 : f32
    %8 = vector.broadcast %cst : f32 to vector<512x128xf32>
    %9 = arith.maximumf %7, %8 : vector<512x128xf32>
    %10 = arith.truncf %9 : vector<512x128xf32> to vector<512x128xbf16>
    %c0_5 = arith.constant 0 : index
    %c0_6 = arith.constant 0 : index
    %11 = vector.load %arg2[%c0_5, %c0_6] : memref<128x128xbf16, #tpu.memory_space<vmem>>, vector<128x128xbf16>
    %cst_7 = arith.constant dense<0.000000e+00> : vector<512x128xf32>
    %12 = tpu.matmul %10, %11, %cst_7 {dimension_numbers = #tpu.dot_dimension_numbers<[1], [0], [0], [1], [0, 0, 1, 1], [], []>} : vector<512x128xbf16>, vector<128x128xbf16>, vector<512x128xf32> -> vector<512x128xf32>
    %13 = arith.truncf %12 : vector<512x128xf32> to vector<512x128xbf16>
    %c0_8 = arith.constant 0 : index
    %c0_9 = arith.constant 0 : index
    %14 = vector.load %arg5[%c0_8, %c0_9] : memref<512x128xbf16, #tpu.memory_space<vmem>>, vector<512x128xbf16>
    tpu.vector_store %arg5[%c0_8, %c0_9], %13 {strides = array<i32>} : memref<512x128xbf16, #tpu.memory_space<vmem>>, vector<512x128xbf16>,
    %cst_10 = arith.constant dense<0.000000e+00> : vector<128xf32>
    %15 = vector.multi_reduction <add>, %12, %cst_10 [0] : vector<512x128xf32> to vector<128xf32>
    %16 = vector.shape_cast %15 : vector<128xf32> to vector<1x128xf32>
    %17 = arith.mulf %12, %12 : vector<512x128xf32>
    %cst_11 = arith.constant dense<0.000000e+00> : vector<128xf32>
    %18 = vector.multi_reduction <add>, %17, %cst_11 [0] : vector<512x128xf32> to vector<128xf32>
    %19 = vector.shape_cast %18 : vector<128xf32> to vector<1x128xf32>
    %20 = tpu.concatenate %16, %19 in 0 : vector<1x128xf32>, vector<1x128xf32> -> vector<2x128xf32>
    %21 = vector.shape_cast %20 : vector<2x128xf32> to vector<1x2x128xf32>
    %c0_12 = arith.constant 0 : index
    %c0_13 = arith.constant 0 : index
    %c0_14 = arith.constant 0 : index
    %22 = vector.load %arg6[%c0_12, %c0_13, %c0_14] : memref<1x2x128xf32, #tpu.memory_space<vmem>>, vector<1x2x128xf32>
    tpu.vector_store %arg6[%c0_12, %c0_13, %c0_14], %21 {strides = array<i32>} : memref<1x2x128xf32, #tpu.memory_space<vmem>>, vector<1x2x128xf32>,
    return
  }
  func.func @transform_0(%arg0: i32) -> (i32, i32) {
    %c0_i32 = arith.constant 0 : i32
    %c0_i32_0 = arith.constant 0 : i32
    return %arg0, %c0_i32 : i32, i32
  }
  func.func @transform_1(%arg0: i32) -> (i32, i32) {
    %c0_i32 = arith.constant 0 : i32
    %c0_i32_0 = arith.constant 0 : i32
    %c0_i32_1 = arith.constant 0 : i32
    return %c0_i32, %c0_i32_0 : i32, i32
  }
  func.func @transform_2(%arg0: i32) -> (i32, i32) {
    %c0_i32 = arith.constant 0 : i32
    %c0_i32_0 = arith.constant 0 : i32
    %c0_i32_1 = arith.constant 0 : i32
    return %c0_i32, %c0_i32_0 : i32, i32
  }
  func.func @transform_3(%arg0: i32) -> (i32, i32) {
    %c0_i32 = arith.constant 0 : i32
    %c0_i32_0 = arith.constant 0 : i32
    %c0_i32_1 = arith.constant 0 : i32
    return %c0_i32, %c0_i32_0 : i32, i32
  }
  func.func @transform_4(%arg0: i32) -> (i32, i32) {
    %c0_i32 = arith.constant 0 : i32
    %c0_i32_0 = arith.constant 0 : i32
    return %arg0, %c0_i32 : i32, i32
  }
  func.func @transform_5(%arg0: i32) -> (i32, i32, i32) {
    %c0_i32 = arith.constant 0 : i32
    %c0_i32_0 = arith.constant 0 : i32
    %c0_i32_1 = arith.constant 0 : i32
    return %arg0, %c0_i32, %c0_i32_0 : i32, i32, i32
  }
}

module attributes {stable_mosaic.version = 11 : i64} {
  func.func @_finalize_kernel(%arg0: i32, %arg1: memref<512x128xbf16, #tpu.memory_space<vmem>>, %arg2: memref<512x128xf32, #tpu.memory_space<vmem>>, %arg3: memref<1x128xf32, #tpu.memory_space<vmem>>, %arg4: memref<1x128xf32, #tpu.memory_space<vmem>>, %arg5: memref<512x128xf32, #tpu.memory_space<vmem>>) attributes {dimension_semantics = [#tpu.dimension_semantics<parallel>], iteration_bounds = array<i64: 1>, scalar_prefetch = 0 : i64, scratch_operands = 0 : i64, tpu.core_type = #tpu.core_type<tc>, window_params = [{transform_indices = @transform_0, window_bounds = array<i64: 512, 128>}, {transform_indices = @transform_1, window_bounds = array<i64: 512, 128>}, {pipeline_mode = #tpu.pipeline_mode<synchronous>, transform_indices = @transform_2, window_bounds = array<i64: 1, 128>}, {pipeline_mode = #tpu.pipeline_mode<synchronous>, transform_indices = @transform_3, window_bounds = array<i64: 1, 128>}, {transform_indices = @transform_4, window_bounds = array<i64: 512, 128>}]} {
    %c0 = arith.constant 0 : index
    %c0_0 = arith.constant 0 : index
    %0 = vector.load %arg3[%c0, %c0_0] : memref<1x128xf32, #tpu.memory_space<vmem>>, vector<1x128xf32>
    %c0_1 = arith.constant 0 : index
    %c0_2 = arith.constant 0 : index
    %1 = vector.load %arg1[%c0_1, %c0_2] : memref<512x128xbf16, #tpu.memory_space<vmem>>, vector<512x128xbf16>
    %2 = arith.extf %1 : vector<512x128xbf16> to vector<512x128xf32>
    %3 = vector.broadcast %0 : vector<1x128xf32> to vector<512x128xf32>
    %4 = arith.mulf %3, %2 : vector<512x128xf32>
    %c0_3 = arith.constant 0 : index
    %c0_4 = arith.constant 0 : index
    %5 = vector.load %arg4[%c0_3, %c0_4] : memref<1x128xf32, #tpu.memory_space<vmem>>, vector<1x128xf32>
    %6 = vector.broadcast %5 : vector<1x128xf32> to vector<512x128xf32>
    %7 = arith.addf %4, %6 : vector<512x128xf32>
    %c0_5 = arith.constant 0 : index
    %c0_6 = arith.constant 0 : index
    %8 = vector.load %arg2[%c0_5, %c0_6] : memref<512x128xf32, #tpu.memory_space<vmem>>, vector<512x128xf32>
    %9 = arith.addf %7, %8 : vector<512x128xf32>
    %cst = arith.constant 0.000000e+00 : f32
    %10 = vector.broadcast %cst : f32 to vector<512x128xf32>
    %11 = arith.maximumf %9, %10 : vector<512x128xf32>
    %c0_7 = arith.constant 0 : index
    %c0_8 = arith.constant 0 : index
    %12 = vector.load %arg5[%c0_7, %c0_8] : memref<512x128xf32, #tpu.memory_space<vmem>>, vector<512x128xf32>
    tpu.vector_store %arg5[%c0_7, %c0_8], %11 {strides = array<i32>} : memref<512x128xf32, #tpu.memory_space<vmem>>, vector<512x128xf32>,
    return
  }
  func.func @transform_0(%arg0: i32) -> (i32, i32) {
    %c0_i32 = arith.constant 0 : i32
    %c0_i32_0 = arith.constant 0 : i32
    return %arg0, %c0_i32 : i32, i32
  }
  func.func @transform_1(%arg0: i32) -> (i32, i32) {
    %c0_i32 = arith.constant 0 : i32
    %c0_i32_0 = arith.constant 0 : i32
    return %arg0, %c0_i32 : i32, i32
  }
  func.func @transform_2(%arg0: i32) -> (i32, i32) {
    %c0_i32 = arith.constant 0 : i32
    %c0_i32_0 = arith.constant 0 : i32
    %c0_i32_1 = arith.constant 0 : i32
    return %c0_i32, %c0_i32_0 : i32, i32
  }
  func.func @transform_3(%arg0: i32) -> (i32, i32) {
    %c0_i32 = arith.constant 0 : i32
    %c0_i32_0 = arith.constant 0 : i32
    %c0_i32_1 = arith.constant 0 : i32
    return %c0_i32, %c0_i32_0 : i32, i32
  }
  func.func @transform_4(%arg0: i32) -> (i32, i32) {
    %c0_i32 = arith.constant 0 : i32
    %c0_i32_0 = arith.constant 0 : i32
    return %arg0, %c0_i32 : i32, i32
  }
}

</mosaic_0001>

<llo_original>
// kernel: bottleneck_forward.4
$region0: #{bottleneck_forward.4}
  #allocation0 [shape = 'u32[]', space=smem, size = 0x4, offset = 0x4, fixed_abs, tag = 'smem constant byte address 0x4 - core index']
  #allocation1 [shape = 'u32[144,128]{1,0:T(1,128)}', space=vmem, size = 0x12000, scoped, tag = 'internal scratch']
  %s0 = inlined_call_operand.vmem [shape: f32[512,128], index: 0, kind: input, shape index: {}]
  %s1 = inlined_call_operand.vmem [shape: bf16[128,128], index: 1, kind: input, shape index: {}]
  %s2 = inlined_call_operand.vmem [shape: f32[1,128], index: 2, kind: input, shape index: {}]
  %s3 = inlined_call_operand.vmem [shape: f32[1,128], index: 3, kind: input, shape index: {}]
  %s4 = inlined_call_operand.vmem [shape: bf16[512,128], index: 4, kind: output, shape index: {0}]
  %s5 = inlined_call_operand.vmem [shape: f32[1,2,128], index: 5, kind: output, shape index: {1}]
  %6 = xla_tuple %s4, %s5
  %s7 = sld [smem:[#allocation0]]
  $region34: #{bottleneck_forward.4} parent=0
    _
  %s9 = ssub.s32 1, %s7
  %s10 = scalar_select 0, %s9, %s7
  // Predicated region
  $region2: #{bottleneck_forward.4} parent=0 // pred_check
    _
  $region3: #{bottleneck_forward.4} parent=0 // pred_check_branch
    %12 = sbr.rel (0) target = $region5
  $region4: #{bottleneck_forward.4} parent=0 // pred_region
    _
  $region5: #{bottleneck_forward.4} parent=0 // pred_fallthru
    _
  // Predicated region
  $region6: #{bottleneck_forward.4} parent=0 // pred_check
    _
  $region7: #{bottleneck_forward.4} parent=0 // pred_check_branch
    %14 = sbr.rel (0) target = $region9
  $region8: #{bottleneck_forward.4} parent=0 // pred_region
    _
  $region9: #{bottleneck_forward.4} parent=0 // pred_fallthru
    _
  // Predicated region
  $region10: #{bottleneck_forward.4} parent=0 // pred_check
    _
  $region11: #{bottleneck_forward.4} parent=0 // pred_check_branch
    %16 = sbr.rel (0) target = $region13
  $region12: #{bottleneck_forward.4} parent=0 // pred_region
    _
  $region13: #{bottleneck_forward.4} parent=0 // pred_fallthru
    _
  // Predicated region
  $region14: #{bottleneck_forward.4} parent=0 // pred_check
    _
  $region15: #{bottleneck_forward.4} parent=0 // pred_check_branch
    %18 = sbr.rel (0) target = $region17
  $region16: #{bottleneck_forward.4} parent=0 // pred_region
    _
  $region17: #{bottleneck_forward.4} parent=0 // pred_fallthru
    _
  %v20 = vld [vmem:[%s0] sm:$0xff]
  %v21 = vld [vmem:[%s0 + $0x8] sm:$0xff]
  %v22 = vld [vmem:[%s0 + $0x10] sm:$0xff]
  %v23 = vld [vmem:[%s0 + $0x18] sm:$0xff]
  %v24 = vld [vmem:[%s0 + $0x20] sm:$0xff]
  %v25 = vld [vmem:[%s0 + $0x28] sm:$0xff]
  %v26 = vld [vmem:[%s0 + $0x30] sm:$0xff]
  %v27 = vld [vmem:[%s0 + $0x38] sm:$0xff]
  %v28 = vld [vmem:[%s0 + $0x40] sm:$0xff]
  %v29 = vld [vmem:[%s0 + $0x48] sm:$0xff]
  %v30 = vld [vmem:[%s0 + $0x50] sm:$0xff]
  %v31 = vld [vmem:[%s0 + $0x58] sm:$0xff]
  %v32 = vld [vmem:[%s0 + $0x60] sm:$0xff]
  %v33 = vld [vmem:[%s0 + $0x68] sm:$0xff]
  %v34 = vld [vmem:[%s0 + $0x70] sm:$0xff]
  %v35 = vld [vmem:[%s0 + $0x78] sm:$0xff]
  %v36 = vld [vmem:[%s0 + $0x80] sm:$0xff]
  %v37 = vld [vmem:[%s0 + $0x88] sm:$0xff]
  %v38 = vld [vmem:[%s0 + $0x90] sm:$0xff]
  %v39 = vld [vmem:[%s0 + $0x98] sm:$0xff]
  %v40 = vld [vmem:[%s0 + $0xa0] sm:$0xff]
  %v41 = vld [vmem:[%s0 + $0xa8] sm:$0xff]
  %v42 = vld [vmem:[%s0 + $0xb0] sm:$0xff]
  %v43 = vld [vmem:[%s0 + $0xb8] sm:$0xff]
  %v44 = vld [vmem:[%s0 + $0xc0] sm:$0xff]
  %v45 = vld [vmem:[%s0 + $0xc8] sm:$0xff]
  %v46 = vld [vmem:[%s0 + $0xd0] sm:$0xff]
  %v47 = vld [vmem:[%s0 + $0xd8] sm:$0xff]
  %v48 = vld [vmem:[%s0 + $0xe0] sm:$0xff]
  %v49 = vld [vmem:[%s0 + $0xe8] sm:$0xff]
  %v50 = vld [vmem:[%s0 + $0xf0] sm:$0xff]
  %v51 = vld [vmem:[%s0 + $0xf8] sm:$0xff]
  %v52 = vld [vmem:[%s0 + $0x100] sm:$0xff]
  %v53 = vld [vmem:[%s0 + $0x108] sm:$0xff]
  %v54 = vld [vmem:[%s0 + $0x110] sm:$0xff]
  %v55 = vld [vmem:[%s0 + $0x118] sm:$0xff]
  %v56 = vld [vmem:[%s0 + $0x120] sm:$0xff]
  %v57 = vld [vmem:[%s0 + $0x128] sm:$0xff]
  %v58 = vld [vmem:[%s0 + $0x130] sm:$0xff]
  %v59 = vld [vmem:[%s0 + $0x138] sm:$0xff]
  %v60 = vld [vmem:[%s0 + $0x140] sm:$0xff]
  %v61 = vld [vmem:[%s0 + $0x148] sm:$0xff]
  %v62 = vld [vmem:[%s0 + $0x150] sm:$0xff]
  %v63 = vld [vmem:[%s0 + $0x158] sm:$0xff]
  %v64 = vld [vmem:[%s0 + $0x160] sm:$0xff]
  %v65 = vld [vmem:[%s0 + $0x168] sm:$0xff]
  %v66 = vld [vmem:[%s0 + $0x170] sm:$0xff]
  %v67 = vld [vmem:[%s0 + $0x178] sm:$0xff]
  %v68 = vld [vmem:[%s0 + $0x180] sm:$0xff]
  %v69 = vld [vmem:[%s0 + $0x188] sm:$0xff]
  %v70 = vld [vmem:[%s0 + $0x190] sm:$0xff]
  %v71 = vld [vmem:[%s0 + $0x198] sm:$0xff]
  %v72 = vld [vmem:[%s0 + $0x1a0] sm:$0xff]
  %v73 = vld [vmem:[%s0 + $0x1a8] sm:$0xff]
  %v74 = vld [vmem:[%s0 + $0x1b0] sm:$0xff]
  %v75 = vld [vmem:[%s0 + $0x1b8] sm:$0xff]
  %v76 = vld [vmem:[%s0 + $0x1c0] sm:$0xff]
  %v77 = vld [vmem:[%s0 + $0x1c8] sm:$0xff]
  %v78 = vld [vmem:[%s0 + $0x1d0] sm:$0xff]
  %v79 = vld [vmem:[%s0 + $0x1d8] sm:$0xff]
  %v80 = vld [vmem:[%s0 + $0x1e0] sm:$0xff]
  %v81 = vld [vmem:[%s0 + $0x1e8] sm:$0xff]
  %v82 = vld [vmem:[%s0 + $0x1f0] sm:$0xff]
  %v83 = vld [vmem:[%s0 + $0x1f8] sm:$0xff]
  %v84 = vpack.c.bf16 %v21, %v20
  %v85 = vpack.c.bf16 %v23, %v22
  %v86 = vpack.c.bf16 %v25, %v24
  %v87 = vpack.c.bf16 %v27, %v26
  %v88 = vpack.c.bf16 %v29, %v28
  %v89 = vpack.c.bf16 %v31, %v30
  %v90 = vpack.c.bf16 %v33, %v32
  %v91 = vpack.c.bf16 %v35, %v34
  %v92 = vpack.c.bf16 %v37, %v36
  %v93 = vpack.c.bf16 %v39, %v38
  %v94 = vpack.c.bf16 %v41, %v40
  %v95 = vpack.c.bf16 %v43, %v42
  %v96 = vpack.c.bf16 %v45, %v44
  %v97 = vpack.c.bf16 %v47, %v46
  %v98 = vpack.c.bf16 %v49, %v48
  %v99 = vpack.c.bf16 %v51, %v50
  %v100 = vpack.c.bf16 %v53, %v52
  %v101 = vpack.c.bf16 %v55, %v54
  %v102 = vpack.c.bf16 %v57, %v56
  %v103 = vpack.c.bf16 %v59, %v58
  %v104 = vpack.c.bf16 %v61, %v60
  %v105 = vpack.c.bf16 %v63, %v62
  %v106 = vpack.c.bf16 %v65, %v64
  %v107 = vpack.c.bf16 %v67, %v66
  %v108 = vpack.c.bf16 %v69, %v68
  %v109 = vpack.c.bf16 %v71, %v70
  %v110 = vpack.c.bf16 %v73, %v72
  %v111 = vpack.c.bf16 %v75, %v74
  %v112 = vpack.c.bf16 %v77, %v76
  %v113 = vpack.c.bf16 %v79, %v78
  %v114 = vpack.c.bf16 %v81, %v80
  %v115 = vpack.c.bf16 %v83, %v82
  %v116 = vld [vmem:[%s1] sm:$0xf]
  %v117 = vld [vmem:[%s1 + $0x4] sm:$0xf]
  %v118 = vld [vmem:[%s1 + $0x8] sm:$0xf]
  %v119 = vld [vmem:[%s1 + $0xc] sm:$0xf]
  %v120 = vld [vmem:[%s1 + $0x10] sm:$0xf]
  %v121 = vld [vmem:[%s1 + $0x14] sm:$0xf]
  %v122 = vld [vmem:[%s1 + $0x18] sm:$0xf]
  %v123 = vld [vmem:[%s1 + $0x1c] sm:$0xf]
  %v124 = vld [vmem:[%s1 + $0x20] sm:$0xf]
  %v125 = vld [vmem:[%s1 + $0x24] sm:$0xf]
  %v126 = vld [vmem:[%s1 + $0x28] sm:$0xf]
  %v127 = vld [vmem:[%s1 + $0x2c] sm:$0xf]
  %v128 = vld [vmem:[%s1 + $0x30] sm:$0xf]
  %v129 = vld [vmem:[%s1 + $0x34] sm:$0xf]
  %v130 = vld [vmem:[%s1 + $0x38] sm:$0xf]
  %v131 = vld [vmem:[%s1 + $0x3c] sm:$0xf]
  %v148 = vunpack.c.l.b16 %v116
  %v149 = vunpack.c.l.b16 %v117
  %v150 = vunpack.c.l.b16 %v118
  %v151 = vunpack.c.l.b16 %v119
  %v152 = vunpack.c.l.b16 %v120
  %v153 = vunpack.c.l.b16 %v121
  %v154 = vunpack.c.l.b16 %v122
  %v155 = vunpack.c.l.b16 %v123
  %v156 = vunpack.c.l.b16 %v124
  %v157 = vunpack.c.l.b16 %v125
  %v158 = vunpack.c.l.b16 %v126
  %v159 = vunpack.c.l.b16 %v127
  %v160 = vunpack.c.l.b16 %v128
  %v161 = vunpack.c.l.b16 %v129
  %v162 = vunpack.c.l.b16 %v130
  %v163 = vunpack.c.l.b16 %v131
  %v164 = vpack.c.b16 %v149, %v148
  %v165 = vpack.c.b16 %v151, %v150
  %v166 = vpack.c.b16 %v153, %v152
  %v167 = vpack.c.b16 %v155, %v154
  %v168 = vpack.c.b16 %v157, %v156
  %v169 = vpack.c.b16 %v159, %v158
  %v170 = vpack.c.b16 %v161, %v160
  %v171 = vpack.c.b16 %v163, %v162
  %180 = vmatprep.subr.bf16.mxu0 0
  %181 = vmatpush1.bf16.msra.mxu0 %v171
  %182 = vmatprep.subr.bf16.mxu0 0
  %183 = vmatpush1.bf16.msra.mxu0 %v170
  %184 = vmatprep.subr.bf16.mxu0 0
  %185 = vmatpush1.bf16.msra.mxu0 %v169
  %186 = vmatprep.subr.bf16.mxu0 0
  %187 = vmatpush1.bf16.msra.mxu0 %v168
  %188 = vmatprep.subr.bf16.mxu0 0
  %189 = vmatpush1.bf16.msra.mxu0 %v167
  %190 = vmatprep.subr.bf16.mxu0 0
  %191 = vmatpush1.bf16.msra.mxu0 %v166
  %192 = vmatprep.subr.bf16.mxu0 0
  %193 = vmatpush1.bf16.msra.mxu0 %v165
  %194 = vmatprep.subr.bf16.mxu0 0
  %195 = vmatpush1.bf16.msra.mxu0 %v164
  %196 = vmatprep.subr.bf16.mxu0 0
  %197 = vmatpush2.bf16.msra.mxu0 0
  %198 = vmatprep.subr.bf16.mxu0 0
  %199 = vmatpush2.bf16.msra.mxu0 0
  %200 = vmatprep.subr.bf16.mxu0 0
  %201 = vmatpush2.bf16.msra.mxu0 0
  %202 = vmatprep.subr.bf16.mxu0 0
  %203 = vmatpush2.bf16.msra.mxu0 0
  %204 = vmatprep.subr.bf16.mxu0 0
  %205 = vmatpush2.bf16.msra.mxu0 0
  %206 = vmatprep.subr.bf16.mxu0 0
  %207 = vmatpush2.bf16.msra.mxu0 0
  %208 = vmatprep.subr.bf16.mxu0 0
  %209 = vmatpush2.bf16.msra.mxu0 0
  %210 = vmatprep.subr.bf16.mxu0 0
  %211 = vmatpush2.bf16.msra.mxu0 0
  %212 = vmatprep.mubr.bf16.mxu0 0
  %213 = vmatmul.mubr.bf16.gmra.mxu0 %v84
  %v214 = vpop.f32.mrf.mxu0
  %v215 = vadd.f32 0.0, %v214
  %v216 = vpop.f32.mrf.mxu0
  %v217 = vpop.f32.mrf.mxu0
  %v218 = vadd.f32 0.0, %v217
  %v219 = vpop.f32.mrf.mxu0
  %220 = vmatprep.mubr.bf16.mxu0 0
  %221 = vmatmul.mubr.bf16.gmra.mxu0 %v85
  %v222 = vpop.f32.mrf.mxu0
  %v223 = vadd.f32 0.0, %v222
  %v224 = vpop.f32.mrf.mxu0
  %v225 = vpop.f32.mrf.mxu0
  %v226 = vadd.f32 0.0, %v225
  %v227 = vpop.f32.mrf.mxu0
  %228 = vmatprep.mubr.bf16.mxu0 0
  %229 = vmatmul.mubr.bf16.gmra.mxu0 %v86
  %v230 = vpop.f32.mrf.mxu0
  %v231 = vadd.f32 0.0, %v230
  %v232 = vpop.f32.mrf.mxu0
  %v233 = vpop.f32.mrf.mxu0
  %v234 = vadd.f32 0.0, %v233
  %v235 = vpop.f32.mrf.mxu0
  %236 = vmatprep.mubr.bf16.mxu0 0
  %237 = vmatmul.mubr.bf16.gmra.mxu0 %v87
  %v238 = vpop.f32.mrf.mxu0
  %v239 = vadd.f32 0.0, %v238
  %v240 = vpop.f32.mrf.mxu0
  %v241 = vpop.f32.mrf.mxu0
  %v242 = vadd.f32 0.0, %v241
  %v243 = vpop.f32.mrf.mxu0
  %244 = vmatprep.mubr.bf16.mxu0 0
  %245 = vmatmul.mubr.bf16.gmra.mxu0 %v88
  %v246 = vpop.f32.mrf.mxu0
  %v247 = vadd.f32 0.0, %v246
  %v248 = vpop.f32.mrf.mxu0
  %v249 = vpop.f32.mrf.mxu0
  %v250 = vadd.f32 0.0, %v249
  %v251 = vpop.f32.mrf.mxu0
  %252 = vmatprep.mubr.bf16.mxu0 0
  %253 = vmatmul.mubr.bf16.gmra.mxu0 %v89
  %v254 = vpop.f32.mrf.mxu0
  %v255 = vadd.f32 0.0, %v254
  %v256 = vpop.f32.mrf.mxu0
  %v257 = vpop.f32.mrf.mxu0
  %v258 = vadd.f32 0.0, %v257
  %v259 = vpop.f32.mrf.mxu0
  %260 = vmatprep.mubr.bf16.mxu0 0
  %261 = vmatmul.mubr.bf16.gmra.mxu0 %v90
  %v262 = vpop.f32.mrf.mxu0
  %v263 = vadd.f32 0.0, %v262
  %v264 = vpop.f32.mrf.mxu0
  %v265 = vpop.f32.mrf.mxu0
  %v266 = vadd.f32 0.0, %v265
  %v267 = vpop.f32.mrf.mxu0
  %268 = vmatprep.mubr.bf16.mxu0 0
  %269 = vmatmul.mubr.bf16.gmra.mxu0 %v91
  %v270 = vpop.f32.mrf.mxu0
  %v271 = vadd.f32 0.0, %v270
  %v272 = vpop.f32.mrf.mxu0
  %v273 = vpop.f32.mrf.mxu0
  %v274 = vadd.f32 0.0, %v273
  %v275 = vpop.f32.mrf.mxu0
  %276 = vmatprep.mubr.bf16.mxu0 0
  %277 = vmatmul.mubr.bf16.gmra.mxu0 %v92
  %v278 = vpop.f32.mrf.mxu0
  %v279 = vadd.f32 0.0, %v278
  %v280 = vpop.f32.mrf.mxu0
  %v281 = vpop.f32.mrf.mxu0
  %v282 = vadd.f32 0.0, %v281
  %v283 = vpop.f32.mrf.mxu0
  %284 = vmatprep.mubr.bf16.mxu0 0
  %285 = vmatmul.mubr.bf16.gmra.mxu0 %v93
  %v286 = vpop.f32.mrf.mxu0
  %v287 = vadd.f32 0.0, %v286
  %v288 = vpop.f32.mrf.mxu0
  %v289 = vpop.f32.mrf.mxu0
  %v290 = vadd.f32 0.0, %v289
  %v291 = vpop.f32.mrf.mxu0
  %292 = vmatprep.mubr.bf16.mxu0 0
  %293 = vmatmul.mubr.bf16.gmra.mxu0 %v94
  %v294 = vpop.f32.mrf.mxu0
  %v295 = vadd.f32 0.0, %v294
  %v296 = vpop.f32.mrf.mxu0
  %v297 = vpop.f32.mrf.mxu0
  %v298 = vadd.f32 0.0, %v297
  %v299 = vpop.f32.mrf.mxu0
  %300 = vmatprep.mubr.bf16.mxu0 0
  %301 = vmatmul.mubr.bf16.gmra.mxu0 %v95
  %v302 = vpop.f32.mrf.mxu0
  %v303 = vadd.f32 0.0, %v302
  %v304 = vpop.f32.mrf.mxu0
  %v305 = vpop.f32.mrf.mxu0
  %v306 = vadd.f32 0.0, %v305
  %v307 = vpop.f32.mrf.mxu0
  %308 = vmatprep.mubr.bf16.mxu0 0
  %309 = vmatmul.mubr.bf16.gmra.mxu0 %v96
  %v310 = vpop.f32.mrf.mxu0
  %v311 = vadd.f32 0.0, %v310
  %v312 = vpop.f32.mrf.mxu0
  %v313 = vpop.f32.mrf.mxu0
  %v314 = vadd.f32 0.0, %v313
  %v315 = vpop.f32.mrf.mxu0
  %316 = vmatprep.mubr.bf16.mxu0 0
  %317 = vmatmul.mubr.bf16.gmra.mxu0 %v97
  %v318 = vpop.f32.mrf.mxu0
  %v319 = vadd.f32 0.0, %v318
  %v320 = vpop.f32.mrf.mxu0
  %v321 = vpop.f32.mrf.mxu0
  %v322 = vadd.f32 0.0, %v321
  %v323 = vpop.f32.mrf.mxu0
  %324 = vmatprep.mubr.bf16.mxu0 0
  %325 = vmatmul.mubr.bf16.gmra.mxu0 %v98
  %v326 = vpop.f32.mrf.mxu0
  %v327 = vadd.f32 0.0, %v326
  %v328 = vpop.f32.mrf.mxu0
  %v329 = vpop.f32.mrf.mxu0
  %v330 = vadd.f32 0.0, %v329
  %v331 = vpop.f32.mrf.mxu0
  %332 = vmatprep.mubr.bf16.mxu0 0
  %333 = vmatmul.mubr.bf16.gmra.mxu0 %v99
  %v334 = vpop.f32.mrf.mxu0
  %v335 = vadd.f32 0.0, %v334
  %v336 = vpop.f32.mrf.mxu0
  %v337 = vpop.f32.mrf.mxu0
  %v338 = vadd.f32 0.0, %v337
  %v339 = vpop.f32.mrf.mxu0
  %340 = vmatprep.mubr.bf16.mxu0 0
  %341 = vmatmul.mubr.bf16.gmra.mxu0 %v100
  %v342 = vpop.f32.mrf.mxu0
  %v343 = vadd.f32 0.0, %v342
  %v344 = vpop.f32.mrf.mxu0
  %v345 = vpop.f32.mrf.mxu0
  %v346 = vadd.f32 0.0, %v345
  %v347 = vpop.f32.mrf.mxu0
  %348 = vmatprep.mubr.bf16.mxu0 0
  %349 = vmatmul.mubr.bf16.gmra.mxu0 %v101
  %v350 = vpop.f32.mrf.mxu0
  %v351 = vadd.f32 0.0, %v350
  %v352 = vpop.f32.mrf.mxu0
  %v353 = vpop.f32.mrf.mxu0
  %v354 = vadd.f32 0.0, %v353
  %v355 = vpop.f32.mrf.mxu0
  %356 = vmatprep.mubr.bf16.mxu0 0
  %357 = vmatmul.mubr.bf16.gmra.mxu0 %v102
  %v358 = vpop.f32.mrf.mxu0
  %v359 = vadd.f32 0.0, %v358
  %v360 = vpop.f32.mrf.mxu0
  %v361 = vpop.f32.mrf.mxu0
  %v362 = vadd.f32 0.0, %v361
  %v363 = vpop.f32.mrf.mxu0
  %364 = vmatprep.mubr.bf16.mxu0 0
  %365 = vmatmul.mubr.bf16.gmra.mxu0 %v103
  %v366 = vpop.f32.mrf.mxu0
  %v367 = vadd.f32 0.0, %v366
  %v368 = vpop.f32.mrf.mxu0
  %v369 = vpop.f32.mrf.mxu0
  %v370 = vadd.f32 0.0, %v369
  %v371 = vpop.f32.mrf.mxu0
  %372 = vmatprep.mubr.bf16.mxu0 0
  %373 = vmatmul.mubr.bf16.gmra.mxu0 %v104
  %v374 = vpop.f32.mrf.mxu0
  %v375 = vadd.f32 0.0, %v374
  %v376 = vpop.f32.mrf.mxu0
  %v377 = vpop.f32.mrf.mxu0
  %v378 = vadd.f32 0.0, %v377
  %v379 = vpop.f32.mrf.mxu0
  %380 = vmatprep.mubr.bf16.mxu0 0
  %381 = vmatmul.mubr.bf16.gmra.mxu0 %v105
  %v382 = vpop.f32.mrf.mxu0
  %v383 = vadd.f32 0.0, %v382
  %v384 = vpop.f32.mrf.mxu0
  %v385 = vpop.f32.mrf.mxu0
  %v386 = vadd.f32 0.0, %v385
  %v387 = vpop.f32.mrf.mxu0
  %388 = vmatprep.mubr.bf16.mxu0 0
  %389 = vmatmul.mubr.bf16.gmra.mxu0 %v106
  %v390 = vpop.f32.mrf.mxu0
  %v391 = vadd.f32 0.0, %v390
  %v392 = vpop.f32.mrf.mxu0
  %v393 = vpop.f32.mrf.mxu0
  %v394 = vadd.f32 0.0, %v393
  %v395 = vpop.f32.mrf.mxu0
  %396 = vmatprep.mubr.bf16.mxu0 0
  %397 = vmatmul.mubr.bf16.gmra.mxu0 %v107
  %v398 = vpop.f32.mrf.mxu0
  %v399 = vadd.f32 0.0, %v398
  %v400 = vpop.f32.mrf.mxu0
  %v401 = vpop.f32.mrf.mxu0
  %v402 = vadd.f32 0.0, %v401
  %v403 = vpop.f32.mrf.mxu0
  %404 = vmatprep.mubr.bf16.mxu0 0
  %405 = vmatmul.mubr.bf16.gmra.mxu0 %v108
  %v406 = vpop.f32.mrf.mxu0
  %v407 = vadd.f32 0.0, %v406
  %v408 = vpop.f32.mrf.mxu0
  %v409 = vpop.f32.mrf.mxu0
  %v410 = vadd.f32 0.0, %v409
  %v411 = vpop.f32.mrf.mxu0
  %412 = vmatprep.mubr.bf16.mxu0 0
  %413 = vmatmul.mubr.bf16.gmra.mxu0 %v109
  %v414 = vpop.f32.mrf.mxu0
  %v415 = vadd.f32 0.0, %v414
  %v416 = vpop.f32.mrf.mxu0
  %v417 = vpop.f32.mrf.mxu0
  %v418 = vadd.f32 0.0, %v417
  %v419 = vpop.f32.mrf.mxu0
  %420 = vmatprep.mubr.bf16.mxu0 0
  %421 = vmatmul.mubr.bf16.gmra.mxu0 %v110
  %v422 = vpop.f32.mrf.mxu0
  %v423 = vadd.f32 0.0, %v422
  %v424 = vpop.f32.mrf.mxu0
  %v425 = vpop.f32.mrf.mxu0
  %v426 = vadd.f32 0.0, %v425
  %v427 = vpop.f32.mrf.mxu0
  %428 = vmatprep.mubr.bf16.mxu0 0
  %429 = vmatmul.mubr.bf16.gmra.mxu0 %v111
  %v430 = vpop.f32.mrf.mxu0
  %v431 = vadd.f32 0.0, %v430
  %v432 = vpop.f32.mrf.mxu0
  %v433 = vpop.f32.mrf.mxu0
  %v434 = vadd.f32 0.0, %v433
  %v435 = vpop.f32.mrf.mxu0
  %436 = vmatprep.mubr.bf16.mxu0 0
  %437 = vmatmul.mubr.bf16.gmra.mxu0 %v112
  %v438 = vpop.f32.mrf.mxu0
  %v439 = vadd.f32 0.0, %v438
  %v440 = vpop.f32.mrf.mxu0
  %v441 = vpop.f32.mrf.mxu0
  %v442 = vadd.f32 0.0, %v441
  %v443 = vpop.f32.mrf.mxu0
  %444 = vmatprep.mubr.bf16.mxu0 0
  %445 = vmatmul.mubr.bf16.gmra.mxu0 %v113
  %v446 = vpop.f32.mrf.mxu0
  %v447 = vadd.f32 0.0, %v446
  %v448 = vpop.f32.mrf.mxu0
  %v449 = vpop.f32.mrf.mxu0
  %v450 = vadd.f32 0.0, %v449
  %v451 = vpop.f32.mrf.mxu0
  %452 = vmatprep.mubr.bf16.mxu0 0
  %453 = vmatmul.mubr.bf16.gmra.mxu0 %v114
  %v454 = vpop.f32.mrf.mxu0
  %v455 = vadd.f32 0.0, %v454
  %v456 = vpop.f32.mrf.mxu0
  %v457 = vpop.f32.mrf.mxu0
  %v458 = vadd.f32 0.0, %v457
  %v459 = vpop.f32.mrf.mxu0
  %460 = vmatprep.mubr.bf16.mxu0 0
  %461 = vmatmul.mubr.bf16.gmra.mxu0 %v115
  %v462 = vpop.f32.mrf.mxu0
  %v463 = vadd.f32 0.0, %v462
  %v464 = vpop.f32.mrf.mxu0
  %v465 = vpop.f32.mrf.mxu0
  %v466 = vadd.f32 0.0, %v465
  %v467 = vpop.f32.mrf.mxu0
  %468 = vdwg.mxu0
  %v469 = vpack.c.bf16 %v218, %v215
  %v470 = vpack.c.bf16 %v226, %v223
  %v471 = vpack.c.bf16 %v234, %v231
  %v472 = vpack.c.bf16 %v242, %v239
  %v473 = vpack.c.bf16 %v250, %v247
  %v474 = vpack.c.bf16 %v258, %v255
  %v475 = vpack.c.bf16 %v266, %v263
  %v476 = vpack.c.bf16 %v274, %v271
  %v477 = vpack.c.bf16 %v282, %v279
  %v478 = vpack.c.bf16 %v290, %v287
  %v479 = vpack.c.bf16 %v298, %v295
  %v480 = vpack.c.bf16 %v306, %v303
  %v481 = vpack.c.bf16 %v314, %v311
  %v482 = vpack.c.bf16 %v322, %v319
  %v483 = vpack.c.bf16 %v330, %v327
  %v484 = vpack.c.bf16 %v338, %v335
  %v485 = vpack.c.bf16 %v346, %v343
  %v486 = vpack.c.bf16 %v354, %v351
  %v487 = vpack.c.bf16 %v362, %v359
  %v488 = vpack.c.bf16 %v370, %v367
  %v489 = vpack.c.bf16 %v378, %v375
  %v490 = vpack.c.bf16 %v386, %v383
  %v491 = vpack.c.bf16 %v394, %v391
  %v492 = vpack.c.bf16 %v402, %v399
  %v493 = vpack.c.bf16 %v410, %v407
  %v494 = vpack.c.bf16 %v418, %v415
  %v495 = vpack.c.bf16 %v426, %v423
  %v496 = vpack.c.bf16 %v434, %v431
  %v497 = vpack.c.bf16 %v442, %v439
  %v498 = vpack.c.bf16 %v450, %v447
  %v499 = vpack.c.bf16 %v458, %v455
  %v500 = vpack.c.bf16 %v466, %v463
  %v533 = vunpack.c.l.b16 %v469
  %v534 = vunpack.c.h.b16 %v469
  %v535 = vunpack.c.l.b16 %v470
  %v536 = vunpack.c.h.b16 %v470
  %v537 = vunpack.c.l.b16 %v471
  %v538 = vunpack.c.h.b16 %v471
  %v539 = vunpack.c.l.b16 %v472
  %v540 = vunpack.c.h.b16 %v472
  %v541 = vunpack.c.l.b16 %v473
  %v542 = vunpack.c.h.b16 %v473
  %v543 = vunpack.c.l.b16 %v474
  %v544 = vunpack.c.h.b16 %v474
  %v545 = vunpack.c.l.b16 %v475
  %v546 = vunpack.c.h.b16 %v475
  %v547 = vunpack.c.l.b16 %v476
  %v548 = vunpack.c.h.b16 %v476
  %v549 = vunpack.c.l.b16 %v477
  %v550 = vunpack.c.h.b16 %v477
  %v551 = vunpack.c.l.b16 %v478
  %v552 = vunpack.c.h.b16 %v478
  %v553 = vunpack.c.l.b16 %v479
  %v554 = vunpack.c.h.b16 %v479
  %v555 = vunpack.c.l.b16 %v480
  %v556 = vunpack.c.h.b16 %v480
  %v557 = vunpack.c.l.b16 %v481
  %v558 = vunpack.c.h.b16 %v481
  %v559 = vunpack.c.l.b16 %v482
  %v560 = vunpack.c.h.b16 %v482
  %v561 = vunpack.c.l.b16 %v483
  %v562 = vunpack.c.h.b16 %v483
  %v563 = vunpack.c.l.b16 %v484
  %v564 = vunpack.c.h.b16 %v484
  %v565 = vunpack.c.l.b16 %v485
  %v566 = vunpack.c.h.b16 %v485
  %v567 = vunpack.c.l.b16 %v486
  %v568 = vunpack.c.h.b16 %v486
  %v569 = vunpack.c.l.b16 %v487
  %v570 = vunpack.c.h.b16 %v487
  %v571 = vunpack.c.l.b16 %v488
  %v572 = vunpack.c.h.b16 %v488
  %v573 = vunpack.c.l.b16 %v489
  %v574 = vunpack.c.h.b16 %v489
  %v575 = vunpack.c.l.b16 %v490
  %v576 = vunpack.c.h.b16 %v490
  %v577 = vunpack.c.l.b16 %v491
  %v578 = vunpack.c.h.b16 %v491
  %v579 = vunpack.c.l.b16 %v492
  %v580 = vunpack.c.h.b16 %v492
  %v581 = vunpack.c.l.b16 %v493
  %v582 = vunpack.c.h.b16 %v493
  %v583 = vunpack.c.l.b16 %v494
  %v584 = vunpack.c.h.b16 %v494
  %v585 = vunpack.c.l.b16 %v495
  %v586 = vunpack.c.h.b16 %v495
  %v587 = vunpack.c.l.b16 %v496
  %v588 = vunpack.c.h.b16 %v496
  %v589 = vunpack.c.l.b16 %v497
  %v590 = vunpack.c.h.b16 %v497
  %v591 = vunpack.c.l.b16 %v498
  %v592 = vunpack.c.h.b16 %v498
  %v593 = vunpack.c.l.b16 %v499
  %v594 = vunpack.c.h.b16 %v499
  %v595 = vunpack.c.l.b16 %v500
  %v596 = vunpack.c.h.b16 %v500
  %v597 = vpack.c.b16 %v533, %v533
  %v598 = vpack.c.b16 %v534, %v534
  %v599 = vpack.c.b16 %v535, %v535
  %v600 = vpack.c.b16 %v536, %v536
  %v601 = vpack.c.b16 %v537, %v537
  %v602 = vpack.c.b16 %v538, %v538
  %v603 = vpack.c.b16 %v539, %v539
  %v604 = vpack.c.b16 %v540, %v540
  %v605 = vpack.c.b16 %v541, %v541
  %v606 = vpack.c.b16 %v542, %v542
  %v607 = vpack.c.b16 %v543, %v543
  %v608 = vpack.c.b16 %v544, %v544
  %v609 = vpack.c.b16 %v545, %v545
  %v610 = vpack.c.b16 %v546, %v546
  %v611 = vpack.c.b16 %v547, %v547
  %v612 = vpack.c.b16 %v548, %v548
  %v613 = vpack.c.b16 %v549, %v549
  %v614 = vpack.c.b16 %v550, %v550
  %v615 = vpack.c.b16 %v551, %v551
  %v616 = vpack.c.b16 %v552, %v552
  %v617 = vpack.c.b16 %v553, %v553
  %v618 = vpack.c.b16 %v554, %v554
  %v619 = vpack.c.b16 %v555, %v555
  %v620 = vpack.c.b16 %v556, %v556
  %v621 = vpack.c.b16 %v557, %v557
  %v622 = vpack.c.b16 %v558, %v558
  %v623 = vpack.c.b16 %v559, %v559
  %v624 = vpack.c.b16 %v560, %v560
  %v625 = vpack.c.b16 %v561, %v561
  %v626 = vpack.c.b16 %v562, %v562
  %v627 = vpack.c.b16 %v563, %v563
  %v628 = vpack.c.b16 %v564, %v564
  %v629 = vpack.c.b16 %v565, %v565
  %v630 = vpack.c.b16 %v566, %v566
  %v631 = vpack.c.b16 %v567, %v567
  %v632 = vpack.c.b16 %v568, %v568
  %v633 = vpack.c.b16 %v569, %v569
  %v634 = vpack.c.b16 %v570, %v570
  %v635 = vpack.c.b16 %v571, %v571
  %v636 = vpack.c.b16 %v572, %v572
  %v637 = vpack.c.b16 %v573, %v573
  %v638 = vpack.c.b16 %v574, %v574
  %v639 = vpack.c.b16 %v575, %v575
  %v640 = vpack.c.b16 %v576, %v576
  %v641 = vpack.c.b16 %v577, %v577
  %v642 = vpack.c.b16 %v578, %v578
  %v643 = vpack.c.b16 %v579, %v579
  %v644 = vpack.c.b16 %v580, %v580
  %v645 = vpack.c.b16 %v581, %v581
  %v646 = vpack.c.b16 %v582, %v582
  %v647 = vpack.c.b16 %v583, %v583
  %v648 = vpack.c.b16 %v584, %v584
  %v649 = vpack.c.b16 %v585, %v585
  %v650 = vpack.c.b16 %v586, %v586
  %v651 = vpack.c.b16 %v587, %v587
  %v652 = vpack.c.b16 %v588, %v588
  %v653 = vpack.c.b16 %v589, %v589
  %v654 = vpack.c.b16 %v590, %v590
  %v655 = vpack.c.b16 %v591, %v591
  %v656 = vpack.c.b16 %v592, %v592
  %v657 = vpack.c.b16 %v593, %v593
  %v658 = vpack.c.b16 %v594, %v594
  %v659 = vpack.c.b16 %v595, %v595
  %v660 = vpack.c.b16 %v596, %v596
  %725 = vst [vmem:[%s4] sm:$0xf] %v597
  %726 = vst [vmem:[%s4 + $0x4] sm:$0xf] %v598
  %727 = vst [vmem:[%s4 + $0x8] sm:$0xf] %v599
  %728 = vst [vmem:[%s4 + $0xc] sm:$0xf] %v600
  %729 = vst [vmem:[%s4 + $0x10] sm:$0xf] %v601
  %730 = vst [vmem:[%s4 + $0x14] sm:$0xf] %v602
  %731 = vst [vmem:[%s4 + $0x18] sm:$0xf] %v603
  %732 = vst [vmem:[%s4 + $0x1c] sm:$0xf] %v604
  %733 = vst [vmem:[%s4 + $0x20] sm:$0xf] %v605
  %734 = vst [vmem:[%s4 + $0x24] sm:$0xf] %v606
  %735 = vst [vmem:[%s4 + $0x28] sm:$0xf] %v607
  %736 = vst [vmem:[%s4 + $0x2c] sm:$0xf] %v608
  %737 = vst [vmem:[%s4 + $0x30] sm:$0xf] %v609
  %738 = vst [vmem:[%s4 + $0x34] sm:$0xf] %v610
  %739 = vst [vmem:[%s4 + $0x38] sm:$0xf] %v611
  %740 = vst [vmem:[%s4 + $0x3c] sm:$0xf] %v612
  %741 = vst [vmem:[%s4 + $0x40] sm:$0xf] %v613
  %742 = vst [vmem:[%s4 + $0x44] sm:$0xf] %v614
  %743 = vst [vmem:[%s4 + $0x48] sm:$0xf] %v615
  %744 = vst [vmem:[%s4 + $0x4c] sm:$0xf] %v616
  %745 = vst [vmem:[%s4 + $0x50] sm:$0xf] %v617
  %746 = vst [vmem:[%s4 + $0x54] sm:$0xf] %v618
  %747 = vst [vmem:[%s4 + $0x58] sm:$0xf] %v619
  %748 = vst [vmem:[%s4 + $0x5c] sm:$0xf] %v620
  %749 = vst [vmem:[%s4 + $0x60] sm:$0xf] %v621
  %750 = vst [vmem:[%s4 + $0x64] sm:$0xf] %v622
  %751 = vst [vmem:[%s4 + $0x68] sm:$0xf] %v623
  %752 = vst [vmem:[%s4 + $0x6c] sm:$0xf] %v624
  %753 = vst [vmem:[%s4 + $0x70] sm:$0xf] %v625
  %754 = vst [vmem:[%s4 + $0x74] sm:$0xf] %v626
  %755 = vst [vmem:[%s4 + $0x78] sm:$0xf] %v627
  %756 = vst [vmem:[%s4 + $0x7c] sm:$0xf] %v628
  %757 = vst [vmem:[%s4 + $0x80] sm:$0xf] %v629
  %758 = vst [vmem:[%s4 + $0x84] sm:$0xf] %v630
  %759 = vst [vmem:[%s4 + $0x88] sm:$0xf] %v631
  %760 = vst [vmem:[%s4 + $0x8c] sm:$0xf] %v632
  %761 = vst [vmem:[%s4 + $0x90] sm:$0xf] %v633
  %762 = vst [vmem:[%s4 + $0x94] sm:$0xf] %v634
  %763 = vst [vmem:[%s4 + $0x98] sm:$0xf] %v635
  %764 = vst [vmem:[%s4 + $0x9c] sm:$0xf] %v636
  %765 = vst [vmem:[%s4 + $0xa0] sm:$0xf] %v637
  %766 = vst [vmem:[%s4 + $0xa4] sm:$0xf] %v638
  %767 = vst [vmem:[%s4 + $0xa8] sm:$0xf] %v639
  %768 = vst [vmem:[%s4 + $0xac] sm:$0xf] %v640
  %769 = vst [vmem:[%s4 + $0xb0] sm:$0xf] %v641
  %770 = vst [vmem:[%s4 + $0xb4] sm:$0xf] %v642
  %771 = vst [vmem:[%s4 + $0xb8] sm:$0xf] %v643
  %772 = vst [vmem:[%s4 + $0xbc] sm:$0xf] %v644
  %773 = vst [vmem:[%s4 + $0xc0] sm:$0xf] %v645
  %774 = vst [vmem:[%s4 + $0xc4] sm:$0xf] %v646
  %775 = vst [vmem:[%s4 + $0xc8] sm:$0xf] %v647
  %776 = vst [vmem:[%s4 + $0xcc] sm:$0xf] %v648
  %777 = vst [vmem:[%s4 + $0xd0] sm:$0xf] %v649
  %778 = vst [vmem:[%s4 + $0xd4] sm:$0xf] %v650
  %779 = vst [vmem:[%s4 + $0xd8] sm:$0xf] %v651
  %780 = vst [vmem:[%s4 + $0xdc] sm:$0xf] %v652
  %781 = vst [vmem:[%s4 + $0xe0] sm:$0xf] %v653
  %782 = vst [vmem:[%s4 + $0xe4] sm:$0xf] %v654
  %783 = vst [vmem:[%s4 + $0xe8] sm:$0xf] %v655
  %784 = vst [vmem:[%s4 + $0xec] sm:$0xf] %v656
  %785 = vst [vmem:[%s4 + $0xf0] sm:$0xf] %v657
  %786 = vst [vmem:[%s4 + $0xf4] sm:$0xf] %v658
  %787 = vst [vmem:[%s4 + $0xf8] sm:$0xf] %v659
  %788 = vst [vmem:[%s4 + $0xfc] sm:$0xf] %v660
  %v789 = vadd.f32 %v215, %v218
  %v790 = vadd.f32 %v789, %v223
  %v791 = vadd.f32 %v790, %v226
  %v792 = vadd.f32 %v791, %v231
  %v793 = vadd.f32 %v792, %v234
  %v794 = vadd.f32 %v793, %v239
  %v795 = vadd.f32 %v794, %v242
  %v796 = vadd.f32 %v795, %v247
  %v797 = vadd.f32 %v796, %v250
  %v798 = vadd.f32 %v797, %v255
  %v799 = vadd.f32 %v798, %v258
  %v800 = vadd.f32 %v799, %v263
  %v801 = vadd.f32 %v800, %v266
  %v802 = vadd.f32 %v801, %v271
  %v803 = vadd.f32 %v802, %v274
  %v804 = vadd.f32 %v803, %v279
  %v805 = vadd.f32 %v804, %v282
  %v806 = vadd.f32 %v805, %v287
  %v807 = vadd.f32 %v806, %v290
  %v808 = vadd.f32 %v807, %v295
  %v809 = vadd.f32 %v808, %v298
  %v810 = vadd.f32 %v809, %v303
  %v811 = vadd.f32 %v810, %v306
  %v812 = vadd.f32 %v811, %v311
  %v813 = vadd.f32 %v812, %v314
  %v814 = vadd.f32 %v813, %v319
  %v815 = vadd.f32 %v814, %v322
  %v816 = vadd.f32 %v815, %v327
  %v817 = vadd.f32 %v816, %v330
  %v818 = vadd.f32 %v817, %v335
  %v819 = vadd.f32 %v818, %v338
  %v820 = vadd.f32 %v819, %v343
  %v821 = vadd.f32 %v820, %v346
  %v822 = vadd.f32 %v821, %v351
  %v823 = vadd.f32 %v822, %v354
  %v824 = vadd.f32 %v823, %v359
  %v825 = vadd.f32 %v824, %v362
  %v826 = vadd.f32 %v825, %v367
  %v827 = vadd.f32 %v826, %v370
  %v828 = vadd.f32 %v827, %v375
  %v829 = vadd.f32 %v828, %v378
  %v830 = vadd.f32 %v829, %v383
  %v831 = vadd.f32 %v830, %v386
  %v832 = vadd.f32 %v831, %v391
  %v833 = vadd.f32 %v832, %v394
  %v834 = vadd.f32 %v833, %v399
  %v835 = vadd.f32 %v834, %v402
  %v836 = vadd.f32 %v835, %v407
  %v837 = vadd.f32 %v836, %v410
  %v838 = vadd.f32 %v837, %v415
  %v839 = vadd.f32 %v838, %v418
  %v840 = vadd.f32 %v839, %v423
  %v841 = vadd.f32 %v840, %v426
  %v842 = vadd.f32 %v841, %v431
  %v843 = vadd.f32 %v842, %v434
  %v844 = vadd.f32 %v843, %v439
  %v845 = vadd.f32 %v844, %v442
  %v846 = vadd.f32 %v845, %v447
  %v847 = vadd.f32 %v846, %v450
  %v848 = vadd.f32 %v847, %v455
  %v849 = vadd.f32 %v848, %v458
  %v850 = vadd.f32 %v849, %v463
  %v851 = vadd.f32 %v850, %v466
  %v852 = vrot.slane %v851, 4
  %v853 = vadd.f32 %v851, %v852
  %v854 = vrot.slane %v853, 2
  %v855 = vadd.f32 %v853, %v854
  %v856 = vrot.slane %v855, 1
  %v857 = vadd.f32 %v855, %v856
  %v858 = vmul.f32 %v215, %v215
  %v859 = vmul.f32 %v218, %v218
  %v860 = vmul.f32 %v223, %v223
  %v861 = vmul.f32 %v226, %v226
  %v862 = vmul.f32 %v231, %v231
  %v863 = vmul.f32 %v234, %v234
  %v864 = vmul.f32 %v239, %v239
  %v865 = vmul.f32 %v242, %v242
  %v866 = vmul.f32 %v247, %v247
  %v867 = vmul.f32 %v250, %v250
  %v868 = vmul.f32 %v255, %v255
  %v869 = vmul.f32 %v258, %v258
  %v870 = vmul.f32 %v263, %v263
  %v871 = vmul.f32 %v266, %v266
  %v872 = vmul.f32 %v271, %v271
  %v873 = vmul.f32 %v274, %v274
  %v874 = vmul.f32 %v279, %v279
  %v875 = vmul.f32 %v282, %v282
  %v876 = vmul.f32 %v287, %v287
  %v877 = vmul.f32 %v290, %v290
  %v878 = vmul.f32 %v295, %v295
  %v879 = vmul.f32 %v298, %v298
  %v880 = vmul.f32 %v303, %v303
  %v881 = vmul.f32 %v306, %v306
  %v882 = vmul.f32 %v311, %v311
  %v883 = vmul.f32 %v314, %v314
  %v884 = vmul.f32 %v319, %v319
  %v885 = vmul.f32 %v322, %v322
  %v886 = vmul.f32 %v327, %v327
  %v887 = vmul.f32 %v330, %v330
  %v888 = vmul.f32 %v335, %v335
  %v889 = vmul.f32 %v338, %v338
  %v890 = vmul.f32 %v343, %v343
  %v891 = vmul.f32 %v346, %v346
  %v892 = vmul.f32 %v351, %v351
  %v893 = vmul.f32 %v354, %v354
  %v894 = vmul.f32 %v359, %v359
  %v895 = vmul.f32 %v362, %v362
  %v896 = vmul.f32 %v367, %v367
  %v897 = vmul.f32 %v370, %v370
  %v898 = vmul.f32 %v375, %v375
  %v899 = vmul.f32 %v378, %v378
  %v900 = vmul.f32 %v383, %v383
  %v901 = vmul.f32 %v386, %v386
  %v902 = vmul.f32 %v391, %v391
  %v903 = vmul.f32 %v394, %v394
  %v904 = vmul.f32 %v399, %v399
  %v905 = vmul.f32 %v402, %v402
  %v906 = vmul.f32 %v407, %v407
  %v907 = vmul.f32 %v410, %v410
  %v908 = vmul.f32 %v415, %v415
  %v909 = vmul.f32 %v418, %v418
  %v910 = vmul.f32 %v423, %v423
  %v911 = vmul.f32 %v426, %v426
  %v912 = vmul.f32 %v431, %v431
  %v913 = vmul.f32 %v434, %v434
  %v914 = vmul.f32 %v439, %v439
  %v915 = vmul.f32 %v442, %v442
  %v916 = vmul.f32 %v447, %v447
  %v917 = vmul.f32 %v450, %v450
  %v918 = vmul.f32 %v455, %v455
  %v919 = vmul.f32 %v458, %v458
  %v920 = vmul.f32 %v463, %v463
  %v921 = vmul.f32 %v466, %v466
  %v922 = vadd.f32 %v858, %v859
  %v923 = vadd.f32 %v922, %v860
  %v924 = vadd.f32 %v923, %v861
  %v925 = vadd.f32 %v924, %v862
  %v926 = vadd.f32 %v925, %v863
  %v927 = vadd.f32 %v926, %v864
  %v928 = vadd.f32 %v927, %v865
  %v929 = vadd.f32 %v928, %v866
  %v930 = vadd.f32 %v929, %v867
  %v931 = vadd.f32 %v930, %v868
  %v932 = vadd.f32 %v931, %v869
  %v933 = vadd.f32 %v932, %v870
  %v934 = vadd.f32 %v933, %v871
  %v935 = vadd.f32 %v934, %v872
  %v936 = vadd.f32 %v935, %v873
  %v937 = vadd.f32 %v936, %v874
  %v938 = vadd.f32 %v937, %v875
  %v939 = vadd.f32 %v938, %v876
  %v940 = vadd.f32 %v939, %v877
  %v941 = vadd.f32 %v940, %v878
  %v942 = vadd.f32 %v941, %v879
  %v943 = vadd.f32 %v942, %v880
  %v944 = vadd.f32 %v943, %v881
  %v945 = vadd.f32 %v944, %v882
  %v946 = vadd.f32 %v945, %v883
  %v947 = vadd.f32 %v946, %v884
  %v948 = vadd.f32 %v947, %v885
  %v949 = vadd.f32 %v948, %v886
  %v950 = vadd.f32 %v949, %v887
  %v951 = vadd.f32 %v950, %v888
  %v952 = vadd.f32 %v951, %v889
  %v953 = vadd.f32 %v952, %v890
  %v954 = vadd.f32 %v953, %v891
  %v955 = vadd.f32 %v954, %v892
  %v956 = vadd.f32 %v955, %v893
  %v957 = vadd.f32 %v956, %v894
  %v958 = vadd.f32 %v957, %v895
  %v959 = vadd.f32 %v958, %v896
  %v960 = vadd.f32 %v959, %v897
  %v961 = vadd.f32 %v960, %v898
  %v962 = vadd.f32 %v961, %v899
  %v963 = vadd.f32 %v962, %v900
  %v964 = vadd.f32 %v963, %v901
  %v965 = vadd.f32 %v964, %v902
  %v966 = vadd.f32 %v965, %v903
  %v967 = vadd.f32 %v966, %v904
  %v968 = vadd.f32 %v967, %v905
  %v969 = vadd.f32 %v968, %v906
  %v970 = vadd.f32 %v969, %v907
  %v971 = vadd.f32 %v970, %v908
  %v972 = vadd.f32 %v971, %v909
  %v973 = vadd.f32 %v972, %v910
  %v974 = vadd.f32 %v973, %v911
  %v975 = vadd.f32 %v974, %v912
  %v976 = vadd.f32 %v975, %v913
  %v977 = vadd.f32 %v976, %v914
  %v978 = vadd.f32 %v977, %v915
  %v979 = vadd.f32 %v978, %v916
  %v980 = vadd.f32 %v979, %v917
  %v981 = vadd.f32 %v980, %v918
  %v982 = vadd.f32 %v981, %v919
  %v983 = vadd.f32 %v982, %v920
  %v984 = vadd.f32 %v983, %v921
  %v985 = vrot.slane %v984, 4
  %v986 = vadd.f32 %v984, %v985
  %v987 = vrot.slane %v986, 2
  %v988 = vadd.f32 %v986, %v987
  %v989 = vrot.slane %v988, 1
  %v990 = vadd.f32 %v988, %v989
  %vm991 = vcmask 1040384
  %v992 = vsel %vm991, %v857, %v990
  %993 = vst [vmem:[%s5] sm:$0x3] %v992
  // Predicated region
  $region18: #{bottleneck_forward.4} parent=0 // pred_check
    _
  $region19: #{bottleneck_forward.4} parent=0 // pred_check_branch
    %995 = sbr.rel (0) target = $region21
  $region20: #{bottleneck_forward.4} parent=0 // pred_region
    _
  $region21: #{bottleneck_forward.4} parent=0 // pred_fallthru
    _
  // Predicated region
  $region22: #{bottleneck_forward.4} parent=0 // pred_check
    _
  $region23: #{bottleneck_forward.4} parent=0 // pred_check_branch
    %997 = sbr.rel (0) target = $region25
  $region24: #{bottleneck_forward.4} parent=0 // pred_region
    _
  $region25: #{bottleneck_forward.4} parent=0 // pred_fallthru
    _
  // Predicated region
  $region26: #{bottleneck_forward.4} parent=0 // pred_check
    _
  $region27: #{bottleneck_forward.4} parent=0 // pred_check_branch
    %999 = sbr.rel (0) target = $region29
  $region28: #{bottleneck_forward.4} parent=0 // pred_region
    _
  $region29: #{bottleneck_forward.4} parent=0 // pred_fallthru
    _
  // Predicated region
  $region30: #{bottleneck_forward.4} parent=0 // pred_check
    _
  $region31: #{bottleneck_forward.4} parent=0 // pred_check_branch
    %1001 = sbr.rel (0) target = $region33
  $region32: #{bottleneck_forward.4} parent=0 // pred_region
    _
  $region33: #{bottleneck_forward.4} parent=0 // pred_fallthru
    _

// kernel: bottleneck_forward.7
$region0: #{bottleneck_forward.7}
  #allocation0 [shape = 'u32[]', space=smem, size = 0x4, offset = 0x4, fixed_abs, tag = 'smem constant byte address 0x4 - core index']
  #allocation1 [shape = 'u32[144,128]{1,0:T(1,128)}', space=vmem, size = 0x12000, scoped, tag = 'internal scratch']
  %s0 = inlined_call_operand.vmem [shape: bf16[512,128], index: 0, kind: input, shape index: {}]
  %s1 = inlined_call_operand.vmem [shape: f32[512,128], index: 1, kind: input, shape index: {}]
  %s2 = inlined_call_operand.vmem [shape: f32[1,128], index: 2, kind: input, shape index: {}]
  %s3 = inlined_call_operand.vmem [shape: f32[1,128], index: 3, kind: input, shape index: {}]
  %s4 = inlined_call_operand.vmem [shape: f32[512,128], index: 4, kind: output, shape index: {}]
  %s5 = sld [smem:[#allocation0]]
  $region26: #{bottleneck_forward.7} parent=0
    _
  %s7 = ssub.s32 1, %s5
  %s8 = scalar_select 0, %s7, %s5
  // Predicated region
  $region2: #{bottleneck_forward.7} parent=0 // pred_check
    _
  $region3: #{bottleneck_forward.7} parent=0 // pred_check_branch
    %10 = sbr.rel (0) target = $region5
  $region4: #{bottleneck_forward.7} parent=0 // pred_region
    _
  $region5: #{bottleneck_forward.7} parent=0 // pred_fallthru
    _
  // Predicated region
  $region6: #{bottleneck_forward.7} parent=0 // pred_check
    _
  $region7: #{bottleneck_forward.7} parent=0 // pred_check_branch
    %12 = sbr.rel (0) target = $region9
  $region8: #{bottleneck_forward.7} parent=0 // pred_region
    _
  $region9: #{bottleneck_forward.7} parent=0 // pred_fallthru
    _
  // Predicated region
  $region10: #{bottleneck_forward.7} parent=0 // pred_check
    _
  $region11: #{bottleneck_forward.7} parent=0 // pred_check_branch
    %14 = sbr.rel (0) target = $region13
  $region12: #{bottleneck_forward.7} parent=0 // pred_region
    _
  $region13: #{bottleneck_forward.7} parent=0 // pred_fallthru
    _
  // Predicated region
  $region14: #{bottleneck_forward.7} parent=0 // pred_check
    _
  $region15: #{bottleneck_forward.7} parent=0 // pred_check_branch
    %16 = sbr.rel (0) target = $region17
  $region16: #{bottleneck_forward.7} parent=0 // pred_region
    _
  $region17: #{bottleneck_forward.7} parent=0 // pred_fallthru
    _
  %v17 = vld [vmem:[%s2] sm:$0x1]
  %v18 = vld [vmem:[%s0] sm:$0xf]
  %v19 = vld [vmem:[%s0 + $0x4] sm:$0xf]
  %v20 = vld [vmem:[%s0 + $0x8] sm:$0xf]
  %v21 = vld [vmem:[%s0 + $0xc] sm:$0xf]
  %v22 = vld [vmem:[%s0 + $0x10] sm:$0xf]
  %v23 = vld [vmem:[%s0 + $0x14] sm:$0xf]
  %v24 = vld [vmem:[%s0 + $0x18] sm:$0xf]
  %v25 = vld [vmem:[%s0 + $0x1c] sm:$0xf]
  %v26 = vld [vmem:[%s0 + $0x20] sm:$0xf]
  %v27 = vld [vmem:[%s0 + $0x24] sm:$0xf]
  %v28 = vld [vmem:[%s0 + $0x28] sm:$0xf]
  %v29 = vld [vmem:[%s0 + $0x2c] sm:$0xf]
  %v30 = vld [vmem:[%s0 + $0x30] sm:$0xf]
  %v31 = vld [vmem:[%s0 + $0x34] sm:$0xf]
  %v32 = vld [vmem:[%s0 + $0x38] sm:$0xf]
  %v33 = vld [vmem:[%s0 + $0x3c] sm:$0xf]
  %v34 = vld [vmem:[%s0 + $0x40] sm:$0xf]
  %v35 = vld [vmem:[%s0 + $0x44] sm:$0xf]
  %v36 = vld [vmem:[%s0 + $0x48] sm:$0xf]
  %v37 = vld [vmem:[%s0 + $0x4c] sm:$0xf]
  %v38 = vld [vmem:[%s0 + $0x50] sm:$0xf]
  %v39 = vld [vmem:[%s0 + $0x54] sm:$0xf]
  %v40 = vld [vmem:[%s0 + $0x58] sm:$0xf]
  %v41 = vld [vmem:[%s0 + $0x5c] sm:$0xf]
  %v42 = vld [vmem:[%s0 + $0x60] sm:$0xf]
  %v43 = vld [vmem:[%s0 + $0x64] sm:$0xf]
  %v44 = vld [vmem:[%s0 + $0x68] sm:$0xf]
  %v45 = vld [vmem:[%s0 + $0x6c] sm:$0xf]
  %v46 = vld [vmem:[%s0 + $0x70] sm:$0xf]
  %v47 = vld [vmem:[%s0 + $0x74] sm:$0xf]
  %v48 = vld [vmem:[%s0 + $0x78] sm:$0xf]
  %v49 = vld [vmem:[%s0 + $0x7c] sm:$0xf]
  %v50 = vld [vmem:[%s0 + $0x80] sm:$0xf]
  %v51 = vld [vmem:[%s0 + $0x84] sm:$0xf]
  %v52 = vld [vmem:[%s0 + $0x88] sm:$0xf]
  %v53 = vld [vmem:[%s0 + $0x8c] sm:$0xf]
  %v54 = vld [vmem:[%s0 + $0x90] sm:$0xf]
  %v55 = vld [vmem:[%s0 + $0x94] sm:$0xf]
  %v56 = vld [vmem:[%s0 + $0x98] sm:$0xf]
  %v57 = vld [vmem:[%s0 + $0x9c] sm:$0xf]
  %v58 = vld [vmem:[%s0 + $0xa0] sm:$0xf]
  %v59 = vld [vmem:[%s0 + $0xa4] sm:$0xf]
  %v60 = vld [vmem:[%s0 + $0xa8] sm:$0xf]
  %v61 = vld [vmem:[%s0 + $0xac] sm:$0xf]
  %v62 = vld [vmem:[%s0 + $0xb0] sm:$0xf]
  %v63 = vld [vmem:[%s0 + $0xb4] sm:$0xf]
  %v64 = vld [vmem:[%s0 + $0xb8] sm:$0xf]
  %v65 = vld [vmem:[%s0 + $0xbc] sm:$0xf]
  %v66 = vld [vmem:[%s0 + $0xc0] sm:$0xf]
  %v67 = vld [vmem:[%s0 + $0xc4] sm:$0xf]
  %v68 = vld [vmem:[%s0 + $0xc8] sm:$0xf]
  %v69 = vld [vmem:[%s0 + $0xcc] sm:$0xf]
  %v70 = vld [vmem:[%s0 + $0xd0] sm:$0xf]
  %v71 = vld [vmem:[%s0 + $0xd4] sm:$0xf]
  %v72 = vld [vmem:[%s0 + $0xd8] sm:$0xf]
  %v73 = vld [vmem:[%s0 + $0xdc] sm:$0xf]
  %v74 = vld [vmem:[%s0 + $0xe0] sm:$0xf]
  %v75 = vld [vmem:[%s0 + $0xe4] sm:$0xf]
  %v76 = vld [vmem:[%s0 + $0xe8] sm:$0xf]
  %v77 = vld [vmem:[%s0 + $0xec] sm:$0xf]
  %v78 = vld [vmem:[%s0 + $0xf0] sm:$0xf]
  %v79 = vld [vmem:[%s0 + $0xf4] sm:$0xf]
  %v80 = vld [vmem:[%s0 + $0xf8] sm:$0xf]
  %v81 = vld [vmem:[%s0 + $0xfc] sm:$0xf]
  %v82 = vunpack.c.l.bf16 %v18
  %v83 = vunpack.c.l.bf16 %v19
  %v84 = vunpack.c.l.bf16 %v20
  %v85 = vunpack.c.l.bf16 %v21
  %v86 = vunpack.c.l.bf16 %v22
  %v87 = vunpack.c.l.bf16 %v23
  %v88 = vunpack.c.l.bf16 %v24
  %v89 = vunpack.c.l.bf16 %v25
  %v90 = vunpack.c.l.bf16 %v26
  %v91 = vunpack.c.l.bf16 %v27
  %v92 = vunpack.c.l.bf16 %v28
  %v93 = vunpack.c.l.bf16 %v29
  %v94 = vunpack.c.l.bf16 %v30
  %v95 = vunpack.c.l.bf16 %v31
  %v96 = vunpack.c.l.bf16 %v32
  %v97 = vunpack.c.l.bf16 %v33
  %v98 = vunpack.c.l.bf16 %v34
  %v99 = vunpack.c.l.bf16 %v35
  %v100 = vunpack.c.l.bf16 %v36
  %v101 = vunpack.c.l.bf16 %v37
  %v102 = vunpack.c.l.bf16 %v38
  %v103 = vunpack.c.l.bf16 %v39
  %v104 = vunpack.c.l.bf16 %v40
  %v105 = vunpack.c.l.bf16 %v41
  %v106 = vunpack.c.l.bf16 %v42
  %v107 = vunpack.c.l.bf16 %v43
  %v108 = vunpack.c.l.bf16 %v44
  %v109 = vunpack.c.l.bf16 %v45
  %v110 = vunpack.c.l.bf16 %v46
  %v111 = vunpack.c.l.bf16 %v47
  %v112 = vunpack.c.l.bf16 %v48
  %v113 = vunpack.c.l.bf16 %v49
  %v114 = vunpack.c.l.bf16 %v50
  %v115 = vunpack.c.l.bf16 %v51
  %v116 = vunpack.c.l.bf16 %v52
  %v117 = vunpack.c.l.bf16 %v53
  %v118 = vunpack.c.l.bf16 %v54
  %v119 = vunpack.c.l.bf16 %v55
  %v120 = vunpack.c.l.bf16 %v56
  %v121 = vunpack.c.l.bf16 %v57
  %v122 = vunpack.c.l.bf16 %v58
  %v123 = vunpack.c.l.bf16 %v59
  %v124 = vunpack.c.l.bf16 %v60
  %v125 = vunpack.c.l.bf16 %v61
  %v126 = vunpack.c.l.bf16 %v62
  %v127 = vunpack.c.l.bf16 %v63
  %v128 = vunpack.c.l.bf16 %v64
  %v129 = vunpack.c.l.bf16 %v65
  %v130 = vunpack.c.l.bf16 %v66
  %v131 = vunpack.c.l.bf16 %v67
  %v132 = vunpack.c.l.bf16 %v68
  %v133 = vunpack.c.l.bf16 %v69
  %v134 = vunpack.c.l.bf16 %v70
  %v135 = vunpack.c.l.bf16 %v71
  %v136 = vunpack.c.l.bf16 %v72
  %v137 = vunpack.c.l.bf16 %v73
  %v138 = vunpack.c.l.bf16 %v74
  %v139 = vunpack.c.l.bf16 %v75
  %v140 = vunpack.c.l.bf16 %v76
  %v141 = vunpack.c.l.bf16 %v77
  %v142 = vunpack.c.l.bf16 %v78
  %v143 = vunpack.c.l.bf16 %v79
  %v144 = vunpack.c.l.bf16 %v80
  %v145 = vunpack.c.l.bf16 %v81
  %v147 = vlaneseq
  %v148 = vshrl.u32 %v147, 7
  %v149 = vsub.s32 0, %v148
  %v150 = vrot.slane %v17, %v149
  %v152 = vmul.f32 %v150, %v82
  %v153 = vmul.f32 %v150, %v83
  %v154 = vmul.f32 %v150, %v84
  %v155 = vmul.f32 %v150, %v85
  %v156 = vmul.f32 %v150, %v86
  %v157 = vmul.f32 %v150, %v87
  %v158 = vmul.f32 %v150, %v88
  %v159 = vmul.f32 %v150, %v89
  %v160 = vmul.f32 %v150, %v90
  %v161 = vmul.f32 %v150, %v91
  %v162 = vmul.f32 %v150, %v92
  %v163 = vmul.f32 %v150, %v93
  %v164 = vmul.f32 %v150, %v94
  %v165 = vmul.f32 %v150, %v95
  %v166 = vmul.f32 %v150, %v96
  %v167 = vmul.f32 %v150, %v97
  %v168 = vmul.f32 %v150, %v98
  %v169 = vmul.f32 %v150, %v99
  %v170 = vmul.f32 %v150, %v100
  %v171 = vmul.f32 %v150, %v101
  %v172 = vmul.f32 %v150, %v102
  %v173 = vmul.f32 %v150, %v103
  %v174 = vmul.f32 %v150, %v104
  %v175 = vmul.f32 %v150, %v105
  %v176 = vmul.f32 %v150, %v106
  %v177 = vmul.f32 %v150, %v107
  %v178 = vmul.f32 %v150, %v108
  %v179 = vmul.f32 %v150, %v109
  %v180 = vmul.f32 %v150, %v110
  %v181 = vmul.f32 %v150, %v111
  %v182 = vmul.f32 %v150, %v112
  %v183 = vmul.f32 %v150, %v113
  %v184 = vmul.f32 %v150, %v114
  %v185 = vmul.f32 %v150, %v115
  %v186 = vmul.f32 %v150, %v116
  %v187 = vmul.f32 %v150, %v117
  %v188 = vmul.f32 %v150, %v118
  %v189 = vmul.f32 %v150, %v119
  %v190 = vmul.f32 %v150, %v120
  %v191 = vmul.f32 %v150, %v121
  %v192 = vmul.f32 %v150, %v122
  %v193 = vmul.f32 %v150, %v123
  %v194 = vmul.f32 %v150, %v124
  %v195 = vmul.f32 %v150, %v125
  %v196 = vmul.f32 %v150, %v126
  %v197 = vmul.f32 %v150, %v127
  %v198 = vmul.f32 %v150, %v128
  %v199 = vmul.f32 %v150, %v129
  %v200 = vmul.f32 %v150, %v130
  %v201 = vmul.f32 %v150, %v131
  %v202 = vmul.f32 %v150, %v132
  %v203 = vmul.f32 %v150, %v133
  %v204 = vmul.f32 %v150, %v134
  %v205 = vmul.f32 %v150, %v135
  %v206 = vmul.f32 %v150, %v136
  %v207 = vmul.f32 %v150, %v137
  %v208 = vmul.f32 %v150, %v138
  %v209 = vmul.f32 %v150, %v139
  %v210 = vmul.f32 %v150, %v140
  %v211 = vmul.f32 %v150, %v141
  %v212 = vmul.f32 %v150, %v142
  %v213 = vmul.f32 %v150, %v143
  %v214 = vmul.f32 %v150, %v144
  %v215 = vmul.f32 %v150, %v145
  %v216 = vld [vmem:[%s3] sm:$0x1]
  %v218 = vlaneseq
  %v219 = vshrl.u32 %v218, 7
  %v220 = vsub.s32 0, %v219
  %v221 = vrot.slane %v216, %v220
  %v223 = vadd.f32 %v152, %v221
  %v224 = vadd.f32 %v153, %v221
  %v225 = vadd.f32 %v154, %v221
  %v226 = vadd.f32 %v155, %v221
  %v227 = vadd.f32 %v156, %v221
  %v228 = vadd.f32 %v157, %v221
  %v229 = vadd.f32 %v158, %v221
  %v230 = vadd.f32 %v159, %v221
  %v231 = vadd.f32 %v160, %v221
  %v232 = vadd.f32 %v161, %v221
  %v233 = vadd.f32 %v162, %v221
  %v234 = vadd.f32 %v163, %v221
  %v235 = vadd.f32 %v164, %v221
  %v236 = vadd.f32 %v165, %v221
  %v237 = vadd.f32 %v166, %v221
  %v238 = vadd.f32 %v167, %v221
  %v239 = vadd.f32 %v168, %v221
  %v240 = vadd.f32 %v169, %v221
  %v241 = vadd.f32 %v170, %v221
  %v242 = vadd.f32 %v171, %v221
  %v243 = vadd.f32 %v172, %v221
  %v244 = vadd.f32 %v173, %v221
  %v245 = vadd.f32 %v174, %v221
  %v246 = vadd.f32 %v175, %v221
  %v247 = vadd.f32 %v176, %v221
  %v248 = vadd.f32 %v177, %v221
  %v249 = vadd.f32 %v178, %v221
  %v250 = vadd.f32 %v179, %v221
  %v251 = vadd.f32 %v180, %v221
  %v252 = vadd.f32 %v181, %v221
  %v253 = vadd.f32 %v182, %v221
  %v254 = vadd.f32 %v183, %v221
  %v255 = vadd.f32 %v184, %v221
  %v256 = vadd.f32 %v185, %v221
  %v257 = vadd.f32 %v186, %v221
  %v258 = vadd.f32 %v187, %v221
  %v259 = vadd.f32 %v188, %v221
  %v260 = vadd.f32 %v189, %v221
  %v261 = vadd.f32 %v190, %v221
  %v262 = vadd.f32 %v191, %v221
  %v263 = vadd.f32 %v192, %v221
  %v264 = vadd.f32 %v193, %v221
  %v265 = vadd.f32 %v194, %v221
  %v266 = vadd.f32 %v195, %v221
  %v267 = vadd.f32 %v196, %v221
  %v268 = vadd.f32 %v197, %v221
  %v269 = vadd.f32 %v198, %v221
  %v270 = vadd.f32 %v199, %v221
  %v271 = vadd.f32 %v200, %v221
  %v272 = vadd.f32 %v201, %v221
  %v273 = vadd.f32 %v202, %v221
  %v274 = vadd.f32 %v203, %v221
  %v275 = vadd.f32 %v204, %v221
  %v276 = vadd.f32 %v205, %v221
  %v277 = vadd.f32 %v206, %v221
  %v278 = vadd.f32 %v207, %v221
  %v279 = vadd.f32 %v208, %v221
  %v280 = vadd.f32 %v209, %v221
  %v281 = vadd.f32 %v210, %v221
  %v282 = vadd.f32 %v211, %v221
  %v283 = vadd.f32 %v212, %v221
  %v284 = vadd.f32 %v213, %v221
  %v285 = vadd.f32 %v214, %v221
  %v286 = vadd.f32 %v215, %v221
  %v287 = vld [vmem:[%s1] sm:$0xff]
  %v288 = vld [vmem:[%s1 + $0x8] sm:$0xff]
  %v289 = vld [vmem:[%s1 + $0x10] sm:$0xff]
  %v290 = vld [vmem:[%s1 + $0x18] sm:$0xff]
  %v291 = vld [vmem:[%s1 + $0x20] sm:$0xff]
  %v292 = vld [vmem:[%s1 + $0x28] sm:$0xff]
  %v293 = vld [vmem:[%s1 + $0x30] sm:$0xff]
  %v294 = vld [vmem:[%s1 + $0x38] sm:$0xff]
  %v295 = vld [vmem:[%s1 + $0x40] sm:$0xff]
  %v296 = vld [vmem:[%s1 + $0x48] sm:$0xff]
  %v297 = vld [vmem:[%s1 + $0x50] sm:$0xff]
  %v298 = vld [vmem:[%s1 + $0x58] sm:$0xff]
  %v299 = vld [vmem:[%s1 + $0x60] sm:$0xff]
  %v300 = vld [vmem:[%s1 + $0x68] sm:$0xff]
  %v301 = vld [vmem:[%s1 + $0x70] sm:$0xff]
  %v302 = vld [vmem:[%s1 + $0x78] sm:$0xff]
  %v303 = vld [vmem:[%s1 + $0x80] sm:$0xff]
  %v304 = vld [vmem:[%s1 + $0x88] sm:$0xff]
  %v305 = vld [vmem:[%s1 + $0x90] sm:$0xff]
  %v306 = vld [vmem:[%s1 + $0x98] sm:$0xff]
  %v307 = vld [vmem:[%s1 + $0xa0] sm:$0xff]
  %v308 = vld [vmem:[%s1 + $0xa8] sm:$0xff]
  %v309 = vld [vmem:[%s1 + $0xb0] sm:$0xff]
  %v310 = vld [vmem:[%s1 + $0xb8] sm:$0xff]
  %v311 = vld [vmem:[%s1 + $0xc0] sm:$0xff]
  %v312 = vld [vmem:[%s1 + $0xc8] sm:$0xff]
  %v313 = vld [vmem:[%s1 + $0xd0] sm:$0xff]
  %v314 = vld [vmem:[%s1 + $0xd8] sm:$0xff]
  %v315 = vld [vmem:[%s1 + $0xe0] sm:$0xff]
  %v316 = vld [vmem:[%s1 + $0xe8] sm:$0xff]
  %v317 = vld [vmem:[%s1 + $0xf0] sm:$0xff]
  %v318 = vld [vmem:[%s1 + $0xf8] sm:$0xff]
  %v319 = vld [vmem:[%s1 + $0x100] sm:$0xff]
  %v320 = vld [vmem:[%s1 + $0x108] sm:$0xff]
  %v321 = vld [vmem:[%s1 + $0x110] sm:$0xff]
  %v322 = vld [vmem:[%s1 + $0x118] sm:$0xff]
  %v323 = vld [vmem:[%s1 + $0x120] sm:$0xff]
  %v324 = vld [vmem:[%s1 + $0x128] sm:$0xff]
  %v325 = vld [vmem:[%s1 + $0x130] sm:$0xff]
  %v326 = vld [vmem:[%s1 + $0x138] sm:$0xff]
  %v327 = vld [vmem:[%s1 + $0x140] sm:$0xff]
  %v328 = vld [vmem:[%s1 + $0x148] sm:$0xff]
  %v329 = vld [vmem:[%s1 + $0x150] sm:$0xff]
  %v330 = vld [vmem:[%s1 + $0x158] sm:$0xff]
  %v331 = vld [vmem:[%s1 + $0x160] sm:$0xff]
  %v332 = vld [vmem:[%s1 + $0x168] sm:$0xff]
  %v333 = vld [vmem:[%s1 + $0x170] sm:$0xff]
  %v334 = vld [vmem:[%s1 + $0x178] sm:$0xff]
  %v335 = vld [vmem:[%s1 + $0x180] sm:$0xff]
  %v336 = vld [vmem:[%s1 + $0x188] sm:$0xff]
  %v337 = vld [vmem:[%s1 + $0x190] sm:$0xff]
  %v338 = vld [vmem:[%s1 + $0x198] sm:$0xff]
  %v339 = vld [vmem:[%s1 + $0x1a0] sm:$0xff]
  %v340 = vld [vmem:[%s1 + $0x1a8] sm:$0xff]
  %v341 = vld [vmem:[%s1 + $0x1b0] sm:$0xff]
  %v342 = vld [vmem:[%s1 + $0x1b8] sm:$0xff]
  %v343 = vld [vmem:[%s1 + $0x1c0] sm:$0xff]
  %v344 = vld [vmem:[%s1 + $0x1c8] sm:$0xff]
  %v345 = vld [vmem:[%s1 + $0x1d0] sm:$0xff]
  %v346 = vld [vmem:[%s1 + $0x1d8] sm:$0xff]
  %v347 = vld [vmem:[%s1 + $0x1e0] sm:$0xff]
  %v348 = vld [vmem:[%s1 + $0x1e8] sm:$0xff]
  %v349 = vld [vmem:[%s1 + $0x1f0] sm:$0xff]
  %v350 = vld [vmem:[%s1 + $0x1f8] sm:$0xff]
  %v351 = vadd.f32 %v223, %v287
  %v352 = vadd.f32 %v224, %v288
  %v353 = vadd.f32 %v225, %v289
  %v354 = vadd.f32 %v226, %v290
  %v355 = vadd.f32 %v227, %v291
  %v356 = vadd.f32 %v228, %v292
  %v357 = vadd.f32 %v229, %v293
  %v358 = vadd.f32 %v230, %v294
  %v359 = vadd.f32 %v231, %v295
  %v360 = vadd.f32 %v232, %v296
  %v361 = vadd.f32 %v233, %v297
  %v362 = vadd.f32 %v234, %v298
  %v363 = vadd.f32 %v235, %v299
  %v364 = vadd.f32 %v236, %v300
  %v365 = vadd.f32 %v237, %v301
  %v366 = vadd.f32 %v238, %v302
  %v367 = vadd.f32 %v239, %v303
  %v368 = vadd.f32 %v240, %v304
  %v369 = vadd.f32 %v241, %v305
  %v370 = vadd.f32 %v242, %v306
  %v371 = vadd.f32 %v243, %v307
  %v372 = vadd.f32 %v244, %v308
  %v373 = vadd.f32 %v245, %v309
  %v374 = vadd.f32 %v246, %v310
  %v375 = vadd.f32 %v247, %v311
  %v376 = vadd.f32 %v248, %v312
  %v377 = vadd.f32 %v249, %v313
  %v378 = vadd.f32 %v250, %v314
  %v379 = vadd.f32 %v251, %v315
  %v380 = vadd.f32 %v252, %v316
  %v381 = vadd.f32 %v253, %v317
  %v382 = vadd.f32 %v254, %v318
  %v383 = vadd.f32 %v255, %v319
  %v384 = vadd.f32 %v256, %v320
  %v385 = vadd.f32 %v257, %v321
  %v386 = vadd.f32 %v258, %v322
  %v387 = vadd.f32 %v259, %v323
  %v388 = vadd.f32 %v260, %v324
  %v389 = vadd.f32 %v261, %v325
  %v390 = vadd.f32 %v262, %v326
  %v391 = vadd.f32 %v263, %v327
  %v392 = vadd.f32 %v264, %v328
  %v393 = vadd.f32 %v265, %v329
  %v394 = vadd.f32 %v266, %v330
  %v395 = vadd.f32 %v267, %v331
  %v396 = vadd.f32 %v268, %v332
  %v397 = vadd.f32 %v269, %v333
  %v398 = vadd.f32 %v270, %v334
  %v399 = vadd.f32 %v271, %v335
  %v400 = vadd.f32 %v272, %v336
  %v401 = vadd.f32 %v273, %v337
  %v402 = vadd.f32 %v274, %v338
  %v403 = vadd.f32 %v275, %v339
  %v404 = vadd.f32 %v276, %v340
  %v405 = vadd.f32 %v277, %v341
  %v406 = vadd.f32 %v278, %v342
  %v407 = vadd.f32 %v279, %v343
  %v408 = vadd.f32 %v280, %v344
  %v409 = vadd.f32 %v281, %v345
  %v410 = vadd.f32 %v282, %v346
  %v411 = vadd.f32 %v283, %v347
  %v412 = vadd.f32 %v284, %v348
  %v413 = vadd.f32 %v285, %v349
  %v414 = vadd.f32 %v286, %v350
  %v415 = vmax.f32 %v351, 0.0
  %v416 = vmax.f32 %v352, 0.0
  %v417 = vmax.f32 %v353, 0.0
  %v418 = vmax.f32 %v354, 0.0
  %v419 = vmax.f32 %v355, 0.0
  %v420 = vmax.f32 %v356, 0.0
  %v421 = vmax.f32 %v357, 0.0
  %v422 = vmax.f32 %v358, 0.0
  %v423 = vmax.f32 %v359, 0.0
  %v424 = vmax.f32 %v360, 0.0
  %v425 = vmax.f32 %v361, 0.0
  %v426 = vmax.f32 %v362, 0.0
  %v427 = vmax.f32 %v363, 0.0
  %v428 = vmax.f32 %v364, 0.0
  %v429 = vmax.f32 %v365, 0.0
  %v430 = vmax.f32 %v366, 0.0
  %v431 = vmax.f32 %v367, 0.0
  %v432 = vmax.f32 %v368, 0.0
  %v433 = vmax.f32 %v369, 0.0
  %v434 = vmax.f32 %v370, 0.0
  %v435 = vmax.f32 %v371, 0.0
  %v436 = vmax.f32 %v372, 0.0
  %v437 = vmax.f32 %v373, 0.0
  %v438 = vmax.f32 %v374, 0.0
  %v439 = vmax.f32 %v375, 0.0
  %v440 = vmax.f32 %v376, 0.0
  %v441 = vmax.f32 %v377, 0.0
  %v442 = vmax.f32 %v378, 0.0
  %v443 = vmax.f32 %v379, 0.0
  %v444 = vmax.f32 %v380, 0.0
  %v445 = vmax.f32 %v381, 0.0
  %v446 = vmax.f32 %v382, 0.0
  %v447 = vmax.f32 %v383, 0.0
  %v448 = vmax.f32 %v384, 0.0
  %v449 = vmax.f32 %v385, 0.0
  %v450 = vmax.f32 %v386, 0.0
  %v451 = vmax.f32 %v387, 0.0
  %v452 = vmax.f32 %v388, 0.0
  %v453 = vmax.f32 %v389, 0.0
  %v454 = vmax.f32 %v390, 0.0
  %v455 = vmax.f32 %v391, 0.0
  %v456 = vmax.f32 %v392, 0.0
  %v457 = vmax.f32 %v393, 0.0
  %v458 = vmax.f32 %v394, 0.0
  %v459 = vmax.f32 %v395, 0.0
  %v460 = vmax.f32 %v396, 0.0
  %v461 = vmax.f32 %v397, 0.0
  %v462 = vmax.f32 %v398, 0.0
  %v463 = vmax.f32 %v399, 0.0
  %v464 = vmax.f32 %v400, 0.0
  %v465 = vmax.f32 %v401, 0.0
  %v466 = vmax.f32 %v402, 0.0
  %v467 = vmax.f32 %v403, 0.0
  %v468 = vmax.f32 %v404, 0.0
  %v469 = vmax.f32 %v405, 0.0
  %v470 = vmax.f32 %v406, 0.0
  %v471 = vmax.f32 %v407, 0.0
  %v472 = vmax.f32 %v408, 0.0
  %v473 = vmax.f32 %v409, 0.0
  %v474 = vmax.f32 %v410, 0.0
  %v475 = vmax.f32 %v411, 0.0
  %v476 = vmax.f32 %v412, 0.0
  %v477 = vmax.f32 %v413, 0.0
  %v478 = vmax.f32 %v414, 0.0
  %479 = vst [vmem:[%s4] sm:$0xff] %v415
  %480 = vst [vmem:[%s4 + $0x8] sm:$0xff] %v416
  %481 = vst [vmem:[%s4 + $0x10] sm:$0xff] %v417
  %482 = vst [vmem:[%s4 + $0x18] sm:$0xff] %v418
  %483 = vst [vmem:[%s4 + $0x20] sm:$0xff] %v419
  %484 = vst [vmem:[%s4 + $0x28] sm:$0xff] %v420
  %485 = vst [vmem:[%s4 + $0x30] sm:$0xff] %v421
  %486 = vst [vmem:[%s4 + $0x38] sm:$0xff] %v422
  %487 = vst [vmem:[%s4 + $0x40] sm:$0xff] %v423
  %488 = vst [vmem:[%s4 + $0x48] sm:$0xff] %v424
  %489 = vst [vmem:[%s4 + $0x50] sm:$0xff] %v425
  %490 = vst [vmem:[%s4 + $0x58] sm:$0xff] %v426
  %491 = vst [vmem:[%s4 + $0x60] sm:$0xff] %v427
  %492 = vst [vmem:[%s4 + $0x68] sm:$0xff] %v428
  %493 = vst [vmem:[%s4 + $0x70] sm:$0xff] %v429
  %494 = vst [vmem:[%s4 + $0x78] sm:$0xff] %v430
  %495 = vst [vmem:[%s4 + $0x80] sm:$0xff] %v431
  %496 = vst [vmem:[%s4 + $0x88] sm:$0xff] %v432
  %497 = vst [vmem:[%s4 + $0x90] sm:$0xff] %v433
  %498 = vst [vmem:[%s4 + $0x98] sm:$0xff] %v434
  %499 = vst [vmem:[%s4 + $0xa0] sm:$0xff] %v435
  %500 = vst [vmem:[%s4 + $0xa8] sm:$0xff] %v436
  %501 = vst [vmem:[%s4 + $0xb0] sm:$0xff] %v437
  %502 = vst [vmem:[%s4 + $0xb8] sm:$0xff] %v438
  %503 = vst [vmem:[%s4 + $0xc0] sm:$0xff] %v439
  %504 = vst [vmem:[%s4 + $0xc8] sm:$0xff] %v440
  %505 = vst [vmem:[%s4 + $0xd0] sm:$0xff] %v441
  %506 = vst [vmem:[%s4 + $0xd8] sm:$0xff] %v442
  %507 = vst [vmem:[%s4 + $0xe0] sm:$0xff] %v443
  %508 = vst [vmem:[%s4 + $0xe8] sm:$0xff] %v444
  %509 = vst [vmem:[%s4 + $0xf0] sm:$0xff] %v445
  %510 = vst [vmem:[%s4 + $0xf8] sm:$0xff] %v446
  %511 = vst [vmem:[%s4 + $0x100] sm:$0xff] %v447
  %512 = vst [vmem:[%s4 + $0x108] sm:$0xff] %v448
  %513 = vst [vmem:[%s4 + $0x110] sm:$0xff] %v449
  %514 = vst [vmem:[%s4 + $0x118] sm:$0xff] %v450
  %515 = vst [vmem:[%s4 + $0x120] sm:$0xff] %v451
  %516 = vst [vmem:[%s4 + $0x128] sm:$0xff] %v452
  %517 = vst [vmem:[%s4 + $0x130] sm:$0xff] %v453
  %518 = vst [vmem:[%s4 + $0x138] sm:$0xff] %v454
  %519 = vst [vmem:[%s4 + $0x140] sm:$0xff] %v455
  %520 = vst [vmem:[%s4 + $0x148] sm:$0xff] %v456
  %521 = vst [vmem:[%s4 + $0x150] sm:$0xff] %v457
  %522 = vst [vmem:[%s4 + $0x158] sm:$0xff] %v458
  %523 = vst [vmem:[%s4 + $0x160] sm:$0xff] %v459
  %524 = vst [vmem:[%s4 + $0x168] sm:$0xff] %v460
  %525 = vst [vmem:[%s4 + $0x170] sm:$0xff] %v461
  %526 = vst [vmem:[%s4 + $0x178] sm:$0xff] %v462
  %527 = vst [vmem:[%s4 + $0x180] sm:$0xff] %v463
  %528 = vst [vmem:[%s4 + $0x188] sm:$0xff] %v464
  %529 = vst [vmem:[%s4 + $0x190] sm:$0xff] %v465
  %530 = vst [vmem:[%s4 + $0x198] sm:$0xff] %v466
  %531 = vst [vmem:[%s4 + $0x1a0] sm:$0xff] %v467
  %532 = vst [vmem:[%s4 + $0x1a8] sm:$0xff] %v468
  %533 = vst [vmem:[%s4 + $0x1b0] sm:$0xff] %v469
  %534 = vst [vmem:[%s4 + $0x1b8] sm:$0xff] %v470
  %535 = vst [vmem:[%s4 + $0x1c0] sm:$0xff] %v471
  %536 = vst [vmem:[%s4 + $0x1c8] sm:$0xff] %v472
  %537 = vst [vmem:[%s4 + $0x1d0] sm:$0xff] %v473
  %538 = vst [vmem:[%s4 + $0x1d8] sm:$0xff] %v474
  %539 = vst [vmem:[%s4 + $0x1e0] sm:$0xff] %v475
  %540 = vst [vmem:[%s4 + $0x1e8] sm:$0xff] %v476
  %541 = vst [vmem:[%s4 + $0x1f0] sm:$0xff] %v477
  %542 = vst [vmem:[%s4 + $0x1f8] sm:$0xff] %v478
  // Predicated region
  $region18: #{bottleneck_forward.7} parent=0 // pred_check
    _
  $region19: #{bottleneck_forward.7} parent=0 // pred_check_branch
    %544 = sbr.rel (0) target = $region21
  $region20: #{bottleneck_forward.7} parent=0 // pred_region
    _
  $region21: #{bottleneck_forward.7} parent=0 // pred_fallthru
    _
  // Predicated region
  $region22: #{bottleneck_forward.7} parent=0 // pred_check
    _
  $region23: #{bottleneck_forward.7} parent=0 // pred_check_branch
    %546 = sbr.rel (0) target = $region25
  $region24: #{bottleneck_forward.7} parent=0 // pred_region
    _
  $region25: #{bottleneck_forward.7} parent=0 // pred_fallthru
    _

// kernel: bottleneck_forward.6
$region0: #{bottleneck_forward.6}
  #allocation0 [shape = 'u32[]', space=smem, size = 0x4, offset = 0x4, fixed_abs, tag = 'smem constant byte address 0x4 - core index']
  #allocation1 [shape = 'u32[144,128]{1,0:T(1,128)}', space=vmem, size = 0x12000, scoped, tag = 'internal scratch']
  %s0 = inlined_call_operand.vmem [shape: bf16[512,128], index: 0, kind: input, shape index: {}]
  %s1 = inlined_call_operand.vmem [shape: bf16[128,128], index: 1, kind: input, shape index: {}]
  %s2 = inlined_call_operand.vmem [shape: f32[1,128], index: 2, kind: input, shape index: {}]
  %s3 = inlined_call_operand.vmem [shape: f32[1,128], index: 3, kind: input, shape index: {}]
  %s4 = inlined_call_operand.vmem [shape: bf16[512,128], index: 4, kind: output, shape index: {0}]
  %s5 = inlined_call_operand.vmem [shape: f32[1,2,128], index: 5, kind: output, shape index: {1}]
  %6 = xla_tuple %s4, %s5
  %s7 = sld [smem:[#allocation0]]
  $region34: #{bottleneck_forward.6} parent=0
    _
  %s9 = ssub.s32 1, %s7
  %s10 = scalar_select 0, %s9, %s7
  // Predicated region
  $region2: #{bottleneck_forward.6} parent=0 // pred_check
    _
  $region3: #{bottleneck_forward.6} parent=0 // pred_check_branch
    %12 = sbr.rel (0) target = $region5
  $region4: #{bottleneck_forward.6} parent=0 // pred_region
    _
  $region5: #{bottleneck_forward.6} parent=0 // pred_fallthru
    _
  // Predicated region
  $region6: #{bottleneck_forward.6} parent=0 // pred_check
    _
  $region7: #{bottleneck_forward.6} parent=0 // pred_check_branch
    %14 = sbr.rel (0) target = $region9
  $region8: #{bottleneck_forward.6} parent=0 // pred_region
    _
  $region9: #{bottleneck_forward.6} parent=0 // pred_fallthru
    _
  // Predicated region
  $region10: #{bottleneck_forward.6} parent=0 // pred_check
    _
  $region11: #{bottleneck_forward.6} parent=0 // pred_check_branch
    %16 = sbr.rel (0) target = $region13
  $region12: #{bottleneck_forward.6} parent=0 // pred_region
    _
  $region13: #{bottleneck_forward.6} parent=0 // pred_fallthru
    _
  // Predicated region
  $region14: #{bottleneck_forward.6} parent=0 // pred_check
    _
  $region15: #{bottleneck_forward.6} parent=0 // pred_check_branch
    %18 = sbr.rel (0) target = $region17
  $region16: #{bottleneck_forward.6} parent=0 // pred_region
    _
  $region17: #{bottleneck_forward.6} parent=0 // pred_fallthru
    _
  %v20 = vld [vmem:[%s0] sm:$0xf]
  %v21 = vld [vmem:[%s0 + $0x4] sm:$0xf]
  %v22 = vld [vmem:[%s0 + $0x8] sm:$0xf]
  %v23 = vld [vmem:[%s0 + $0xc] sm:$0xf]
  %v24 = vld [vmem:[%s0 + $0x10] sm:$0xf]
  %v25 = vld [vmem:[%s0 + $0x14] sm:$0xf]
  %v26 = vld [vmem:[%s0 + $0x18] sm:$0xf]
  %v27 = vld [vmem:[%s0 + $0x1c] sm:$0xf]
  %v28 = vld [vmem:[%s0 + $0x20] sm:$0xf]
  %v29 = vld [vmem:[%s0 + $0x24] sm:$0xf]
  %v30 = vld [vmem:[%s0 + $0x28] sm:$0xf]
  %v31 = vld [vmem:[%s0 + $0x2c] sm:$0xf]
  %v32 = vld [vmem:[%s0 + $0x30] sm:$0xf]
  %v33 = vld [vmem:[%s0 + $0x34] sm:$0xf]
  %v34 = vld [vmem:[%s0 + $0x38] sm:$0xf]
  %v35 = vld [vmem:[%s0 + $0x3c] sm:$0xf]
  %v36 = vld [vmem:[%s0 + $0x40] sm:$0xf]
  %v37 = vld [vmem:[%s0 + $0x44] sm:$0xf]
  %v38 = vld [vmem:[%s0 + $0x48] sm:$0xf]
  %v39 = vld [vmem:[%s0 + $0x4c] sm:$0xf]
  %v40 = vld [vmem:[%s0 + $0x50] sm:$0xf]
  %v41 = vld [vmem:[%s0 + $0x54] sm:$0xf]
  %v42 = vld [vmem:[%s0 + $0x58] sm:$0xf]
  %v43 = vld [vmem:[%s0 + $0x5c] sm:$0xf]
  %v44 = vld [vmem:[%s0 + $0x60] sm:$0xf]
  %v45 = vld [vmem:[%s0 + $0x64] sm:$0xf]
  %v46 = vld [vmem:[%s0 + $0x68] sm:$0xf]
  %v47 = vld [vmem:[%s0 + $0x6c] sm:$0xf]
  %v48 = vld [vmem:[%s0 + $0x70] sm:$0xf]
  %v49 = vld [vmem:[%s0 + $0x74] sm:$0xf]
  %v50 = vld [vmem:[%s0 + $0x78] sm:$0xf]
  %v51 = vld [vmem:[%s0 + $0x7c] sm:$0xf]
  %v52 = vld [vmem:[%s0 + $0x80] sm:$0xf]
  %v53 = vld [vmem:[%s0 + $0x84] sm:$0xf]
  %v54 = vld [vmem:[%s0 + $0x88] sm:$0xf]
  %v55 = vld [vmem:[%s0 + $0x8c] sm:$0xf]
  %v56 = vld [vmem:[%s0 + $0x90] sm:$0xf]
  %v57 = vld [vmem:[%s0 + $0x94] sm:$0xf]
  %v58 = vld [vmem:[%s0 + $0x98] sm:$0xf]
  %v59 = vld [vmem:[%s0 + $0x9c] sm:$0xf]
  %v60 = vld [vmem:[%s0 + $0xa0] sm:$0xf]
  %v61 = vld [vmem:[%s0 + $0xa4] sm:$0xf]
  %v62 = vld [vmem:[%s0 + $0xa8] sm:$0xf]
  %v63 = vld [vmem:[%s0 + $0xac] sm:$0xf]
  %v64 = vld [vmem:[%s0 + $0xb0] sm:$0xf]
  %v65 = vld [vmem:[%s0 + $0xb4] sm:$0xf]
  %v66 = vld [vmem:[%s0 + $0xb8] sm:$0xf]
  %v67 = vld [vmem:[%s0 + $0xbc] sm:$0xf]
  %v68 = vld [vmem:[%s0 + $0xc0] sm:$0xf]
  %v69 = vld [vmem:[%s0 + $0xc4] sm:$0xf]
  %v70 = vld [vmem:[%s0 + $0xc8] sm:$0xf]
  %v71 = vld [vmem:[%s0 + $0xcc] sm:$0xf]
  %v72 = vld [vmem:[%s0 + $0xd0] sm:$0xf]
  %v73 = vld [vmem:[%s0 + $0xd4] sm:$0xf]
  %v74 = vld [vmem:[%s0 + $0xd8] sm:$0xf]
  %v75 = vld [vmem:[%s0 + $0xdc] sm:$0xf]
  %v76 = vld [vmem:[%s0 + $0xe0] sm:$0xf]
  %v77 = vld [vmem:[%s0 + $0xe4] sm:$0xf]
  %v78 = vld [vmem:[%s0 + $0xe8] sm:$0xf]
  %v79 = vld [vmem:[%s0 + $0xec] sm:$0xf]
  %v80 = vld [vmem:[%s0 + $0xf0] sm:$0xf]
  %v81 = vld [vmem:[%s0 + $0xf4] sm:$0xf]
  %v82 = vld [vmem:[%s0 + $0xf8] sm:$0xf]
  %v83 = vld [vmem:[%s0 + $0xfc] sm:$0xf]
  %v84 = vld [vmem:[%s2] sm:$0x1]
  %v85 = vunpack.c.l.bf16 %v20
  %v86 = vunpack.c.l.bf16 %v21
  %v87 = vunpack.c.l.bf16 %v22
  %v88 = vunpack.c.l.bf16 %v23
  %v89 = vunpack.c.l.bf16 %v24
  %v90 = vunpack.c.l.bf16 %v25
  %v91 = vunpack.c.l.bf16 %v26
  %v92 = vunpack.c.l.bf16 %v27
  %v93 = vunpack.c.l.bf16 %v28
  %v94 = vunpack.c.l.bf16 %v29
  %v95 = vunpack.c.l.bf16 %v30
  %v96 = vunpack.c.l.bf16 %v31
  %v97 = vunpack.c.l.bf16 %v32
  %v98 = vunpack.c.l.bf16 %v33
  %v99 = vunpack.c.l.bf16 %v34
  %v100 = vunpack.c.l.bf16 %v35
  %v101 = vunpack.c.l.bf16 %v36
  %v102 = vunpack.c.l.bf16 %v37
  %v103 = vunpack.c.l.bf16 %v38
  %v104 = vunpack.c.l.bf16 %v39
  %v105 = vunpack.c.l.bf16 %v40
  %v106 = vunpack.c.l.bf16 %v41
  %v107 = vunpack.c.l.bf16 %v42
  %v108 = vunpack.c.l.bf16 %v43
  %v109 = vunpack.c.l.bf16 %v44
  %v110 = vunpack.c.l.bf16 %v45
  %v111 = vunpack.c.l.bf16 %v46
  %v112 = vunpack.c.l.bf16 %v47
  %v113 = vunpack.c.l.bf16 %v48
  %v114 = vunpack.c.l.bf16 %v49
  %v115 = vunpack.c.l.bf16 %v50
  %v116 = vunpack.c.l.bf16 %v51
  %v117 = vunpack.c.l.bf16 %v52
  %v118 = vunpack.c.l.bf16 %v53
  %v119 = vunpack.c.l.bf16 %v54
  %v120 = vunpack.c.l.bf16 %v55
  %v121 = vunpack.c.l.bf16 %v56
  %v122 = vunpack.c.l.bf16 %v57
  %v123 = vunpack.c.l.bf16 %v58
  %v124 = vunpack.c.l.bf16 %v59
  %v125 = vunpack.c.l.bf16 %v60
  %v126 = vunpack.c.l.bf16 %v61
  %v127 = vunpack.c.l.bf16 %v62
  %v128 = vunpack.c.l.bf16 %v63
  %v129 = vunpack.c.l.bf16 %v64
  %v130 = vunpack.c.l.bf16 %v65
  %v131 = vunpack.c.l.bf16 %v66
  %v132 = vunpack.c.l.bf16 %v67
  %v133 = vunpack.c.l.bf16 %v68
  %v134 = vunpack.c.l.bf16 %v69
  %v135 = vunpack.c.l.bf16 %v70
  %v136 = vunpack.c.l.bf16 %v71
  %v137 = vunpack.c.l.bf16 %v72
  %v138 = vunpack.c.l.bf16 %v73
  %v139 = vunpack.c.l.bf16 %v74
  %v140 = vunpack.c.l.bf16 %v75
  %v141 = vunpack.c.l.bf16 %v76
  %v142 = vunpack.c.l.bf16 %v77
  %v143 = vunpack.c.l.bf16 %v78
  %v144 = vunpack.c.l.bf16 %v79
  %v145 = vunpack.c.l.bf16 %v80
  %v146 = vunpack.c.l.bf16 %v81
  %v147 = vunpack.c.l.bf16 %v82
  %v148 = vunpack.c.l.bf16 %v83
  %v150 = vlaneseq
  %v151 = vshrl.u32 %v150, 7
  %v152 = vsub.s32 0, %v151
  %v153 = vrot.slane %v84, %v152
  %v155 = vmul.f32 %v153, %v85
  %v156 = vmul.f32 %v153, %v86
  %v157 = vmul.f32 %v153, %v87
  %v158 = vmul.f32 %v153, %v88
  %v159 = vmul.f32 %v153, %v89
  %v160 = vmul.f32 %v153, %v90
  %v161 = vmul.f32 %v153, %v91
  %v162 = vmul.f32 %v153, %v92
  %v163 = vmul.f32 %v153, %v93
  %v164 = vmul.f32 %v153, %v94
  %v165 = vmul.f32 %v153, %v95
  %v166 = vmul.f32 %v153, %v96
  %v167 = vmul.f32 %v153, %v97
  %v168 = vmul.f32 %v153, %v98
  %v169 = vmul.f32 %v153, %v99
  %v170 = vmul.f32 %v153, %v100
  %v171 = vmul.f32 %v153, %v101
  %v172 = vmul.f32 %v153, %v102
  %v173 = vmul.f32 %v153, %v103
  %v174 = vmul.f32 %v153, %v104
  %v175 = vmul.f32 %v153, %v105
  %v176 = vmul.f32 %v153, %v106
  %v177 = vmul.f32 %v153, %v107
  %v178 = vmul.f32 %v153, %v108
  %v179 = vmul.f32 %v153, %v109
  %v180 = vmul.f32 %v153, %v110
  %v181 = vmul.f32 %v153, %v111
  %v182 = vmul.f32 %v153, %v112
  %v183 = vmul.f32 %v153, %v113
  %v184 = vmul.f32 %v153, %v114
  %v185 = vmul.f32 %v153, %v115
  %v186 = vmul.f32 %v153, %v116
  %v187 = vmul.f32 %v153, %v117
  %v188 = vmul.f32 %v153, %v118
  %v189 = vmul.f32 %v153, %v119
  %v190 = vmul.f32 %v153, %v120
  %v191 = vmul.f32 %v153, %v121
  %v192 = vmul.f32 %v153, %v122
  %v193 = vmul.f32 %v153, %v123
  %v194 = vmul.f32 %v153, %v124
  %v195 = vmul.f32 %v153, %v125
  %v196 = vmul.f32 %v153, %v126
  %v197 = vmul.f32 %v153, %v127
  %v198 = vmul.f32 %v153, %v128
  %v199 = vmul.f32 %v153, %v129
  %v200 = vmul.f32 %v153, %v130
  %v201 = vmul.f32 %v153, %v131
  %v202 = vmul.f32 %v153, %v132
  %v203 = vmul.f32 %v153, %v133
  %v204 = vmul.f32 %v153, %v134
  %v205 = vmul.f32 %v153, %v135
  %v206 = vmul.f32 %v153, %v136
  %v207 = vmul.f32 %v153, %v137
  %v208 = vmul.f32 %v153, %v138
  %v209 = vmul.f32 %v153, %v139
  %v210 = vmul.f32 %v153, %v140
  %v211 = vmul.f32 %v153, %v141
  %v212 = vmul.f32 %v153, %v142
  %v213 = vmul.f32 %v153, %v143
  %v214 = vmul.f32 %v153, %v144
  %v215 = vmul.f32 %v153, %v145
  %v216 = vmul.f32 %v153, %v146
  %v217 = vmul.f32 %v153, %v147
  %v218 = vmul.f32 %v153, %v148
  %v219 = vld [vmem:[%s3] sm:$0x1]
  %v221 = vlaneseq
  %v222 = vshrl.u32 %v221, 7
  %v223 = vsub.s32 0, %v222
  %v224 = vrot.slane %v219, %v223
  %v226 = vadd.f32 %v155, %v224
  %v227 = vadd.f32 %v156, %v224
  %v228 = vadd.f32 %v157, %v224
  %v229 = vadd.f32 %v158, %v224
  %v230 = vadd.f32 %v159, %v224
  %v231 = vadd.f32 %v160, %v224
  %v232 = vadd.f32 %v161, %v224
  %v233 = vadd.f32 %v162, %v224
  %v234 = vadd.f32 %v163, %v224
  %v235 = vadd.f32 %v164, %v224
  %v236 = vadd.f32 %v165, %v224
  %v237 = vadd.f32 %v166, %v224
  %v238 = vadd.f32 %v167, %v224
  %v239 = vadd.f32 %v168, %v224
  %v240 = vadd.f32 %v169, %v224
  %v241 = vadd.f32 %v170, %v224
  %v242 = vadd.f32 %v171, %v224
  %v243 = vadd.f32 %v172, %v224
  %v244 = vadd.f32 %v173, %v224
  %v245 = vadd.f32 %v174, %v224
  %v246 = vadd.f32 %v175, %v224
  %v247 = vadd.f32 %v176, %v224
  %v248 = vadd.f32 %v177, %v224
  %v249 = vadd.f32 %v178, %v224
  %v250 = vadd.f32 %v179, %v224
  %v251 = vadd.f32 %v180, %v224
  %v252 = vadd.f32 %v181, %v224
  %v253 = vadd.f32 %v182, %v224
  %v254 = vadd.f32 %v183, %v224
  %v255 = vadd.f32 %v184, %v224
  %v256 = vadd.f32 %v185, %v224
  %v257 = vadd.f32 %v186, %v224
  %v258 = vadd.f32 %v187, %v224
  %v259 = vadd.f32 %v188, %v224
  %v260 = vadd.f32 %v189, %v224
  %v261 = vadd.f32 %v190, %v224
  %v262 = vadd.f32 %v191, %v224
  %v263 = vadd.f32 %v192, %v224
  %v264 = vadd.f32 %v193, %v224
  %v265 = vadd.f32 %v194, %v224
  %v266 = vadd.f32 %v195, %v224
  %v267 = vadd.f32 %v196, %v224
  %v268 = vadd.f32 %v197, %v224
  %v269 = vadd.f32 %v198, %v224
  %v270 = vadd.f32 %v199, %v224
  %v271 = vadd.f32 %v200, %v224
  %v272 = vadd.f32 %v201, %v224
  %v273 = vadd.f32 %v202, %v224
  %v274 = vadd.f32 %v203, %v224
  %v275 = vadd.f32 %v204, %v224
  %v276 = vadd.f32 %v205, %v224
  %v277 = vadd.f32 %v206, %v224
  %v278 = vadd.f32 %v207, %v224
  %v279 = vadd.f32 %v208, %v224
  %v280 = vadd.f32 %v209, %v224
  %v281 = vadd.f32 %v210, %v224
  %v282 = vadd.f32 %v211, %v224
  %v283 = vadd.f32 %v212, %v224
  %v284 = vadd.f32 %v213, %v224
  %v285 = vadd.f32 %v214, %v224
  %v286 = vadd.f32 %v215, %v224
  %v287 = vadd.f32 %v216, %v224
  %v288 = vadd.f32 %v217, %v224
  %v289 = vadd.f32 %v218, %v224
  %v290 = vmax.f32 %v226, 0.0
  %v291 = vmax.f32 %v227, 0.0
  %v292 = vmax.f32 %v228, 0.0
  %v293 = vmax.f32 %v229, 0.0
  %v294 = vmax.f32 %v230, 0.0
  %v295 = vmax.f32 %v231, 0.0
  %v296 = vmax.f32 %v232, 0.0
  %v297 = vmax.f32 %v233, 0.0
  %v298 = vmax.f32 %v234, 0.0
  %v299 = vmax.f32 %v235, 0.0
  %v300 = vmax.f32 %v236, 0.0
  %v301 = vmax.f32 %v237, 0.0
  %v302 = vmax.f32 %v238, 0.0
  %v303 = vmax.f32 %v239, 0.0
  %v304 = vmax.f32 %v240, 0.0
  %v305 = vmax.f32 %v241, 0.0
  %v306 = vmax.f32 %v242, 0.0
  %v307 = vmax.f32 %v243, 0.0
  %v308 = vmax.f32 %v244, 0.0
  %v309 = vmax.f32 %v245, 0.0
  %v310 = vmax.f32 %v246, 0.0
  %v311 = vmax.f32 %v247, 0.0
  %v312 = vmax.f32 %v248, 0.0
  %v313 = vmax.f32 %v249, 0.0
  %v314 = vmax.f32 %v250, 0.0
  %v315 = vmax.f32 %v251, 0.0
  %v316 = vmax.f32 %v252, 0.0
  %v317 = vmax.f32 %v253, 0.0
  %v318 = vmax.f32 %v254, 0.0
  %v319 = vmax.f32 %v255, 0.0
  %v320 = vmax.f32 %v256, 0.0
  %v321 = vmax.f32 %v257, 0.0
  %v322 = vmax.f32 %v258, 0.0
  %v323 = vmax.f32 %v259, 0.0
  %v324 = vmax.f32 %v260, 0.0
  %v325 = vmax.f32 %v261, 0.0
  %v326 = vmax.f32 %v262, 0.0
  %v327 = vmax.f32 %v263, 0.0
  %v328 = vmax.f32 %v264, 0.0
  %v329 = vmax.f32 %v265, 0.0
  %v330 = vmax.f32 %v266, 0.0
  %v331 = vmax.f32 %v267, 0.0
  %v332 = vmax.f32 %v268, 0.0
  %v333 = vmax.f32 %v269, 0.0
  %v334 = vmax.f32 %v270, 0.0
  %v335 = vmax.f32 %v271, 0.0
  %v336 = vmax.f32 %v272, 0.0
  %v337 = vmax.f32 %v273, 0.0
  %v338 = vmax.f32 %v274, 0.0
  %v339 = vmax.f32 %v275, 0.0
  %v340 = vmax.f32 %v276, 0.0
  %v341 = vmax.f32 %v277, 0.0
  %v342 = vmax.f32 %v278, 0.0
  %v343 = vmax.f32 %v279, 0.0
  %v344 = vmax.f32 %v280, 0.0
  %v345 = vmax.f32 %v281, 0.0
  %v346 = vmax.f32 %v282, 0.0
  %v347 = vmax.f32 %v283, 0.0
  %v348 = vmax.f32 %v284, 0.0
  %v349 = vmax.f32 %v285, 0.0
  %v350 = vmax.f32 %v286, 0.0
  %v351 = vmax.f32 %v287, 0.0
  %v352 = vmax.f32 %v288, 0.0
  %v353 = vmax.f32 %v289, 0.0
  %v354 = vpack.c.bf16 %v291, %v290
  %v355 = vpack.c.bf16 %v293, %v292
  %v356 = vpack.c.bf16 %v295, %v294
  %v357 = vpack.c.bf16 %v297, %v296
  %v358 = vpack.c.bf16 %v299, %v298
  %v359 = vpack.c.bf16 %v301, %v300
  %v360 = vpack.c.bf16 %v303, %v302
  %v361 = vpack.c.bf16 %v305, %v304
  %v362 = vpack.c.bf16 %v307, %v306
  %v363 = vpack.c.bf16 %v309, %v308
  %v364 = vpack.c.bf16 %v311, %v310
  %v365 = vpack.c.bf16 %v313, %v312
  %v366 = vpack.c.bf16 %v315, %v314
  %v367 = vpack.c.bf16 %v317, %v316
  %v368 = vpack.c.bf16 %v319, %v318
  %v369 = vpack.c.bf16 %v321, %v320
  %v370 = vpack.c.bf16 %v323, %v322
  %v371 = vpack.c.bf16 %v325, %v324
  %v372 = vpack.c.bf16 %v327, %v326
  %v373 = vpack.c.bf16 %v329, %v328
  %v374 = vpack.c.bf16 %v331, %v330
  %v375 = vpack.c.bf16 %v333, %v332
  %v376 = vpack.c.bf16 %v335, %v334
  %v377 = vpack.c.bf16 %v337, %v336
  %v378 = vpack.c.bf16 %v339, %v338
  %v379 = vpack.c.bf16 %v341, %v340
  %v380 = vpack.c.bf16 %v343, %v342
  %v381 = vpack.c.bf16 %v345, %v344
  %v382 = vpack.c.bf16 %v347, %v346
  %v383 = vpack.c.bf16 %v349, %v348
  %v384 = vpack.c.bf16 %v351, %v350
  %v385 = vpack.c.bf16 %v353, %v352
  %v386 = vld [vmem:[%s1] sm:$0xf]
  %v387 = vld [vmem:[%s1 + $0x4] sm:$0xf]
  %v388 = vld [vmem:[%s1 + $0x8] sm:$0xf]
  %v389 = vld [vmem:[%s1 + $0xc] sm:$0xf]
  %v390 = vld [vmem:[%s1 + $0x10] sm:$0xf]
  %v391 = vld [vmem:[%s1 + $0x14] sm:$0xf]
  %v392 = vld [vmem:[%s1 + $0x18] sm:$0xf]
  %v393 = vld [vmem:[%s1 + $0x1c] sm:$0xf]
  %v394 = vld [vmem:[%s1 + $0x20] sm:$0xf]
  %v395 = vld [vmem:[%s1 + $0x24] sm:$0xf]
  %v396 = vld [vmem:[%s1 + $0x28] sm:$0xf]
  %v397 = vld [vmem:[%s1 + $0x2c] sm:$0xf]
  %v398 = vld [vmem:[%s1 + $0x30] sm:$0xf]
  %v399 = vld [vmem:[%s1 + $0x34] sm:$0xf]
  %v400 = vld [vmem:[%s1 + $0x38] sm:$0xf]
  %v401 = vld [vmem:[%s1 + $0x3c] sm:$0xf]
  %v418 = vunpack.c.l.b16 %v386
  %v419 = vunpack.c.l.b16 %v387
  %v420 = vunpack.c.l.b16 %v388
  %v421 = vunpack.c.l.b16 %v389
  %v422 = vunpack.c.l.b16 %v390
  %v423 = vunpack.c.l.b16 %v391
  %v424 = vunpack.c.l.b16 %v392
  %v425 = vunpack.c.l.b16 %v393
  %v426 = vunpack.c.l.b16 %v394
  %v427 = vunpack.c.l.b16 %v395
  %v428 = vunpack.c.l.b16 %v396
  %v429 = vunpack.c.l.b16 %v397
  %v430 = vunpack.c.l.b16 %v398
  %v431 = vunpack.c.l.b16 %v399
  %v432 = vunpack.c.l.b16 %v400
  %v433 = vunpack.c.l.b16 %v401
  %v434 = vpack.c.b16 %v419, %v418
  %v435 = vpack.c.b16 %v421, %v420
  %v436 = vpack.c.b16 %v423, %v422
  %v437 = vpack.c.b16 %v425, %v424
  %v438 = vpack.c.b16 %v427, %v426
  %v439 = vpack.c.b16 %v429, %v428
  %v440 = vpack.c.b16 %v431, %v430
  %v441 = vpack.c.b16 %v433, %v432
  %450 = vmatprep.subr.bf16.mxu0 0
  %451 = vmatpush1.bf16.msra.mxu0 %v441
  %452 = vmatprep.subr.bf16.mxu0 0
  %453 = vmatpush1.bf16.msra.mxu0 %v440
  %454 = vmatprep.subr.bf16.mxu0 0
  %455 = vmatpush1.bf16.msra.mxu0 %v439
  %456 = vmatprep.subr.bf16.mxu0 0
  %457 = vmatpush1.bf16.msra.mxu0 %v438
  %458 = vmatprep.subr.bf16.mxu0 0
  %459 = vmatpush1.bf16.msra.mxu0 %v437
  %460 = vmatprep.subr.bf16.mxu0 0
  %461 = vmatpush1.bf16.msra.mxu0 %v436
  %462 = vmatprep.subr.bf16.mxu0 0
  %463 = vmatpush1.bf16.msra.mxu0 %v435
  %464 = vmatprep.subr.bf16.mxu0 0
  %465 = vmatpush1.bf16.msra.mxu0 %v434
  %466 = vmatprep.subr.bf16.mxu0 0
  %467 = vmatpush2.bf16.msra.mxu0 0
  %468 = vmatprep.subr.bf16.mxu0 0
  %469 = vmatpush2.bf16.msra.mxu0 0
  %470 = vmatprep.subr.bf16.mxu0 0
  %471 = vmatpush2.bf16.msra.mxu0 0
  %472 = vmatprep.subr.bf16.mxu0 0
  %473 = vmatpush2.bf16.msra.mxu0 0
  %474 = vmatprep.subr.bf16.mxu0 0
  %475 = vmatpush2.bf16.msra.mxu0 0
  %476 = vmatprep.subr.bf16.mxu0 0
  %477 = vmatpush2.bf16.msra.mxu0 0
  %478 = vmatprep.subr.bf16.mxu0 0
  %479 = vmatpush2.bf16.msra.mxu0 0
  %480 = vmatprep.subr.bf16.mxu0 0
  %481 = vmatpush2.bf16.msra.mxu0 0
  %482 = vmatprep.mubr.bf16.mxu0 0
  %483 = vmatmul.mubr.bf16.gmra.mxu0 %v354
  %v484 = vpop.f32.mrf.mxu0
  %v485 = vadd.f32 0.0, %v484
  %v486 = vpop.f32.mrf.mxu0
  %v487 = vpop.f32.mrf.mxu0
  %v488 = vadd.f32 0.0, %v487
  %v489 = vpop.f32.mrf.mxu0
  %490 = vmatprep.mubr.bf16.mxu0 0
  %491 = vmatmul.mubr.bf16.gmra.mxu0 %v355
  %v492 = vpop.f32.mrf.mxu0
  %v493 = vadd.f32 0.0, %v492
  %v494 = vpop.f32.mrf.mxu0
  %v495 = vpop.f32.mrf.mxu0
  %v496 = vadd.f32 0.0, %v495
  %v497 = vpop.f32.mrf.mxu0
  %498 = vmatprep.mubr.bf16.mxu0 0
  %499 = vmatmul.mubr.bf16.gmra.mxu0 %v356
  %v500 = vpop.f32.mrf.mxu0
  %v501 = vadd.f32 0.0, %v500
  %v502 = vpop.f32.mrf.mxu0
  %v503 = vpop.f32.mrf.mxu0
  %v504 = vadd.f32 0.0, %v503
  %v505 = vpop.f32.mrf.mxu0
  %506 = vmatprep.mubr.bf16.mxu0 0
  %507 = vmatmul.mubr.bf16.gmra.mxu0 %v357
  %v508 = vpop.f32.mrf.mxu0
  %v509 = vadd.f32 0.0, %v508
  %v510 = vpop.f32.mrf.mxu0
  %v511 = vpop.f32.mrf.mxu0
  %v512 = vadd.f32 0.0, %v511
  %v513 = vpop.f32.mrf.mxu0
  %514 = vmatprep.mubr.bf16.mxu0 0
  %515 = vmatmul.mubr.bf16.gmra.mxu0 %v358
  %v516 = vpop.f32.mrf.mxu0
  %v517 = vadd.f32 0.0, %v516
  %v518 = vpop.f32.mrf.mxu0
  %v519 = vpop.f32.mrf.mxu0
  %v520 = vadd.f32 0.0, %v519
  %v521 = vpop.f32.mrf.mxu0
  %522 = vmatprep.mubr.bf16.mxu0 0
  %523 = vmatmul.mubr.bf16.gmra.mxu0 %v359
  %v524 = vpop.f32.mrf.mxu0
  %v525 = vadd.f32 0.0, %v524
  %v526 = vpop.f32.mrf.mxu0
  %v527 = vpop.f32.mrf.mxu0
  %v528 = vadd.f32 0.0, %v527
  %v529 = vpop.f32.mrf.mxu0
  %530 = vmatprep.mubr.bf16.mxu0 0
  %531 = vmatmul.mubr.bf16.gmra.mxu0 %v360
  %v532 = vpop.f32.mrf.mxu0
  %v533 = vadd.f32 0.0, %v532
  %v534 = vpop.f32.mrf.mxu0
  %v535 = vpop.f32.mrf.mxu0
  %v536 = vadd.f32 0.0, %v535
  %v537 = vpop.f32.mrf.mxu0
  %538 = vmatprep.mubr.bf16.mxu0 0
  %539 = vmatmul.mubr.bf16.gmra.mxu0 %v361
  %v540 = vpop.f32.mrf.mxu0
  %v541 = vadd.f32 0.0, %v540
  %v542 = vpop.f32.mrf.mxu0
  %v543 = vpop.f32.mrf.mxu0
  %v544 = vadd.f32 0.0, %v543
  %v545 = vpop.f32.mrf.mxu0
  %546 = vmatprep.mubr.bf16.mxu0 0
  %547 = vmatmul.mubr.bf16.gmra.mxu0 %v362
  %v548 = vpop.f32.mrf.mxu0
  %v549 = vadd.f32 0.0, %v548
  %v550 = vpop.f32.mrf.mxu0
  %v551 = vpop.f32.mrf.mxu0
  %v552 = vadd.f32 0.0, %v551
  %v553 = vpop.f32.mrf.mxu0
  %554 = vmatprep.mubr.bf16.mxu0 0
  %555 = vmatmul.mubr.bf16.gmra.mxu0 %v363
  %v556 = vpop.f32.mrf.mxu0
  %v557 = vadd.f32 0.0, %v556
  %v558 = vpop.f32.mrf.mxu0
  %v559 = vpop.f32.mrf.mxu0
  %v560 = vadd.f32 0.0, %v559
  %v561 = vpop.f32.mrf.mxu0
  %562 = vmatprep.mubr.bf16.mxu0 0
  %563 = vmatmul.mubr.bf16.gmra.mxu0 %v364
  %v564 = vpop.f32.mrf.mxu0
  %v565 = vadd.f32 0.0, %v564
  %v566 = vpop.f32.mrf.mxu0
  %v567 = vpop.f32.mrf.mxu0
  %v568 = vadd.f32 0.0, %v567
  %v569 = vpop.f32.mrf.mxu0
  %570 = vmatprep.mubr.bf16.mxu0 0
  %571 = vmatmul.mubr.bf16.gmra.mxu0 %v365
  %v572 = vpop.f32.mrf.mxu0
  %v573 = vadd.f32 0.0, %v572
  %v574 = vpop.f32.mrf.mxu0
  %v575 = vpop.f32.mrf.mxu0
  %v576 = vadd.f32 0.0, %v575
  %v577 = vpop.f32.mrf.mxu0
  %578 = vmatprep.mubr.bf16.mxu0 0
  %579 = vmatmul.mubr.bf16.gmra.mxu0 %v366
  %v580 = vpop.f32.mrf.mxu0
  %v581 = vadd.f32 0.0, %v580
  %v582 = vpop.f32.mrf.mxu0
  %v583 = vpop.f32.mrf.mxu0
  %v584 = vadd.f32 0.0, %v583
  %v585 = vpop.f32.mrf.mxu0
  %586 = vmatprep.mubr.bf16.mxu0 0
  %587 = vmatmul.mubr.bf16.gmra.mxu0 %v367
  %v588 = vpop.f32.mrf.mxu0
  %v589 = vadd.f32 0.0, %v588
  %v590 = vpop.f32.mrf.mxu0
  %v591 = vpop.f32.mrf.mxu0
  %v592 = vadd.f32 0.0, %v591
  %v593 = vpop.f32.mrf.mxu0
  %594 = vmatprep.mubr.bf16.mxu0 0
  %595 = vmatmul.mubr.bf16.gmra.mxu0 %v368
  %v596 = vpop.f32.mrf.mxu0
  %v597 = vadd.f32 0.0, %v596
  %v598 = vpop.f32.mrf.mxu0
  %v599 = vpop.f32.mrf.mxu0
  %v600 = vadd.f32 0.0, %v599
  %v601 = vpop.f32.mrf.mxu0
  %602 = vmatprep.mubr.bf16.mxu0 0
  %603 = vmatmul.mubr.bf16.gmra.mxu0 %v369
  %v604 = vpop.f32.mrf.mxu0
  %v605 = vadd.f32 0.0, %v604
  %v606 = vpop.f32.mrf.mxu0
  %v607 = vpop.f32.mrf.mxu0
  %v608 = vadd.f32 0.0, %v607
  %v609 = vpop.f32.mrf.mxu0
  %610 = vmatprep.mubr.bf16.mxu0 0
  %611 = vmatmul.mubr.bf16.gmra.mxu0 %v370
  %v612 = vpop.f32.mrf.mxu0
  %v613 = vadd.f32 0.0, %v612
  %v614 = vpop.f32.mrf.mxu0
  %v615 = vpop.f32.mrf.mxu0
  %v616 = vadd.f32 0.0, %v615
  %v617 = vpop.f32.mrf.mxu0
  %618 = vmatprep.mubr.bf16.mxu0 0
  %619 = vmatmul.mubr.bf16.gmra.mxu0 %v371
  %v620 = vpop.f32.mrf.mxu0
  %v621 = vadd.f32 0.0, %v620
  %v622 = vpop.f32.mrf.mxu0
  %v623 = vpop.f32.mrf.mxu0
  %v624 = vadd.f32 0.0, %v623
  %v625 = vpop.f32.mrf.mxu0
  %626 = vmatprep.mubr.bf16.mxu0 0
  %627 = vmatmul.mubr.bf16.gmra.mxu0 %v372
  %v628 = vpop.f32.mrf.mxu0
  %v629 = vadd.f32 0.0, %v628
  %v630 = vpop.f32.mrf.mxu0
  %v631 = vpop.f32.mrf.mxu0
  %v632 = vadd.f32 0.0, %v631
  %v633 = vpop.f32.mrf.mxu0
  %634 = vmatprep.mubr.bf16.mxu0 0
  %635 = vmatmul.mubr.bf16.gmra.mxu0 %v373
  %v636 = vpop.f32.mrf.mxu0
  %v637 = vadd.f32 0.0, %v636
  %v638 = vpop.f32.mrf.mxu0
  %v639 = vpop.f32.mrf.mxu0
  %v640 = vadd.f32 0.0, %v639
  %v641 = vpop.f32.mrf.mxu0
  %642 = vmatprep.mubr.bf16.mxu0 0
  %643 = vmatmul.mubr.bf16.gmra.mxu0 %v374
  %v644 = vpop.f32.mrf.mxu0
  %v645 = vadd.f32 0.0, %v644
  %v646 = vpop.f32.mrf.mxu0
  %v647 = vpop.f32.mrf.mxu0
  %v648 = vadd.f32 0.0, %v647
  %v649 = vpop.f32.mrf.mxu0
  %650 = vmatprep.mubr.bf16.mxu0 0
  %651 = vmatmul.mubr.bf16.gmra.mxu0 %v375
  %v652 = vpop.f32.mrf.mxu0
  %v653 = vadd.f32 0.0, %v652
  %v654 = vpop.f32.mrf.mxu0
  %v655 = vpop.f32.mrf.mxu0
  %v656 = vadd.f32 0.0, %v655
  %v657 = vpop.f32.mrf.mxu0
  %658 = vmatprep.mubr.bf16.mxu0 0
  %659 = vmatmul.mubr.bf16.gmra.mxu0 %v376
  %v660 = vpop.f32.mrf.mxu0
  %v661 = vadd.f32 0.0, %v660
  %v662 = vpop.f32.mrf.mxu0
  %v663 = vpop.f32.mrf.mxu0
  %v664 = vadd.f32 0.0, %v663
  %v665 = vpop.f32.mrf.mxu0
  %666 = vmatprep.mubr.bf16.mxu0 0
  %667 = vmatmul.mubr.bf16.gmra.mxu0 %v377
  %v668 = vpop.f32.mrf.mxu0
  %v669 = vadd.f32 0.0, %v668
  %v670 = vpop.f32.mrf.mxu0
  %v671 = vpop.f32.mrf.mxu0
  %v672 = vadd.f32 0.0, %v671
  %v673 = vpop.f32.mrf.mxu0
  %674 = vmatprep.mubr.bf16.mxu0 0
  %675 = vmatmul.mubr.bf16.gmra.mxu0 %v378
  %v676 = vpop.f32.mrf.mxu0
  %v677 = vadd.f32 0.0, %v676
  %v678 = vpop.f32.mrf.mxu0
  %v679 = vpop.f32.mrf.mxu0
  %v680 = vadd.f32 0.0, %v679
  %v681 = vpop.f32.mrf.mxu0
  %682 = vmatprep.mubr.bf16.mxu0 0
  %683 = vmatmul.mubr.bf16.gmra.mxu0 %v379
  %v684 = vpop.f32.mrf.mxu0
  %v685 = vadd.f32 0.0, %v684
  %v686 = vpop.f32.mrf.mxu0
  %v687 = vpop.f32.mrf.mxu0
  %v688 = vadd.f32 0.0, %v687
  %v689 = vpop.f32.mrf.mxu0
  %690 = vmatprep.mubr.bf16.mxu0 0
  %691 = vmatmul.mubr.bf16.gmra.mxu0 %v380
  %v692 = vpop.f32.mrf.mxu0
  %v693 = vadd.f32 0.0, %v692
  %v694 = vpop.f32.mrf.mxu0
  %v695 = vpop.f32.mrf.mxu0
  %v696 = vadd.f32 0.0, %v695
  %v697 = vpop.f32.mrf.mxu0
  %698 = vmatprep.mubr.bf16.mxu0 0
  %699 = vmatmul.mubr.bf16.gmra.mxu0 %v381
  %v700 = vpop.f32.mrf.mxu0
  %v701 = vadd.f32 0.0, %v700
  %v702 = vpop.f32.mrf.mxu0
  %v703 = vpop.f32.mrf.mxu0
  %v704 = vadd.f32 0.0, %v703
  %v705 = vpop.f32.mrf.mxu0
  %706 = vmatprep.mubr.bf16.mxu0 0
  %707 = vmatmul.mubr.bf16.gmra.mxu0 %v382
  %v708 = vpop.f32.mrf.mxu0
  %v709 = vadd.f32 0.0, %v708
  %v710 = vpop.f32.mrf.mxu0
  %v711 = vpop.f32.mrf.mxu0
  %v712 = vadd.f32 0.0, %v711
  %v713 = vpop.f32.mrf.mxu0
  %714 = vmatprep.mubr.bf16.mxu0 0
  %715 = vmatmul.mubr.bf16.gmra.mxu0 %v383
  %v716 = vpop.f32.mrf.mxu0
  %v717 = vadd.f32 0.0, %v716
  %v718 = vpop.f32.mrf.mxu0
  %v719 = vpop.f32.mrf.mxu0
  %v720 = vadd.f32 0.0, %v719
  %v721 = vpop.f32.mrf.mxu0
  %722 = vmatprep.mubr.bf16.mxu0 0
  %723 = vmatmul.mubr.bf16.gmra.mxu0 %v384
  %v724 = vpop.f32.mrf.mxu0
  %v725 = vadd.f32 0.0, %v724
  %v726 = vpop.f32.mrf.mxu0
  %v727 = vpop.f32.mrf.mxu0
  %v728 = vadd.f32 0.0, %v727
  %v729 = vpop.f32.mrf.mxu0
  %730 = vmatprep.mubr.bf16.mxu0 0
  %731 = vmatmul.mubr.bf16.gmra.mxu0 %v385
  %v732 = vpop.f32.mrf.mxu0
  %v733 = vadd.f32 0.0, %v732
  %v734 = vpop.f32.mrf.mxu0
  %v735 = vpop.f32.mrf.mxu0
  %v736 = vadd.f32 0.0, %v735
  %v737 = vpop.f32.mrf.mxu0
  %738 = vdwg.mxu0
  %v739 = vpack.c.bf16 %v488, %v485
  %v740 = vpack.c.bf16 %v496, %v493
  %v741 = vpack.c.bf16 %v504, %v501
  %v742 = vpack.c.bf16 %v512, %v509
  %v743 = vpack.c.bf16 %v520, %v517
  %v744 = vpack.c.bf16 %v528, %v525
  %v745 = vpack.c.bf16 %v536, %v533
  %v746 = vpack.c.bf16 %v544, %v541
  %v747 = vpack.c.bf16 %v552, %v549
  %v748 = vpack.c.bf16 %v560, %v557
  %v749 = vpack.c.bf16 %v568, %v565
  %v750 = vpack.c.bf16 %v576, %v573
  %v751 = vpack.c.bf16 %v584, %v581
  %v752 = vpack.c.bf16 %v592, %v589
  %v753 = vpack.c.bf16 %v600, %v597
  %v754 = vpack.c.bf16 %v608, %v605
  %v755 = vpack.c.bf16 %v616, %v613
  %v756 = vpack.c.bf16 %v624, %v621
  %v757 = vpack.c.bf16 %v632, %v629
  %v758 = vpack.c.bf16 %v640, %v637
  %v759 = vpack.c.bf16 %v648, %v645
  %v760 = vpack.c.bf16 %v656, %v653
  %v761 = vpack.c.bf16 %v664, %v661
  %v762 = vpack.c.bf16 %v672, %v669
  %v763 = vpack.c.bf16 %v680, %v677
  %v764 = vpack.c.bf16 %v688, %v685
  %v765 = vpack.c.bf16 %v696, %v693
  %v766 = vpack.c.bf16 %v704, %v701
  %v767 = vpack.c.bf16 %v712, %v709
  %v768 = vpack.c.bf16 %v720, %v717
  %v769 = vpack.c.bf16 %v728, %v725
  %v770 = vpack.c.bf16 %v736, %v733
  %v803 = vunpack.c.l.b16 %v739
  %v804 = vunpack.c.h.b16 %v739
  %v805 = vunpack.c.l.b16 %v740
  %v806 = vunpack.c.h.b16 %v740
  %v807 = vunpack.c.l.b16 %v741
  %v808 = vunpack.c.h.b16 %v741
  %v809 = vunpack.c.l.b16 %v742
  %v810 = vunpack.c.h.b16 %v742
  %v811 = vunpack.c.l.b16 %v743
  %v812 = vunpack.c.h.b16 %v743
  %v813 = vunpack.c.l.b16 %v744
  %v814 = vunpack.c.h.b16 %v744
  %v815 = vunpack.c.l.b16 %v745
  %v816 = vunpack.c.h.b16 %v745
  %v817 = vunpack.c.l.b16 %v746
  %v818 = vunpack.c.h.b16 %v746
  %v819 = vunpack.c.l.b16 %v747
  %v820 = vunpack.c.h.b16 %v747
  %v821 = vunpack.c.l.b16 %v748
  %v822 = vunpack.c.h.b16 %v748
  %v823 = vunpack.c.l.b16 %v749
  %v824 = vunpack.c.h.b16 %v749
  %v825 = vunpack.c.l.b16 %v750
  %v826 = vunpack.c.h.b16 %v750
  %v827 = vunpack.c.l.b16 %v751
  %v828 = vunpack.c.h.b16 %v751
  %v829 = vunpack.c.l.b16 %v752
  %v830 = vunpack.c.h.b16 %v752
  %v831 = vunpack.c.l.b16 %v753
  %v832 = vunpack.c.h.b16 %v753
  %v833 = vunpack.c.l.b16 %v754
  %v834 = vunpack.c.h.b16 %v754
  %v835 = vunpack.c.l.b16 %v755
  %v836 = vunpack.c.h.b16 %v755
  %v837 = vunpack.c.l.b16 %v756
  %v838 = vunpack.c.h.b16 %v756
  %v839 = vunpack.c.l.b16 %v757
  %v840 = vunpack.c.h.b16 %v757
  %v841 = vunpack.c.l.b16 %v758
  %v842 = vunpack.c.h.b16 %v758
  %v843 = vunpack.c.l.b16 %v759
  %v844 = vunpack.c.h.b16 %v759
  %v845 = vunpack.c.l.b16 %v760
  %v846 = vunpack.c.h.b16 %v760
  %v847 = vunpack.c.l.b16 %v761
  %v848 = vunpack.c.h.b16 %v761
  %v849 = vunpack.c.l.b16 %v762
  %v850 = vunpack.c.h.b16 %v762
  %v851 = vunpack.c.l.b16 %v763
  %v852 = vunpack.c.h.b16 %v763
  %v853 = vunpack.c.l.b16 %v764
  %v854 = vunpack.c.h.b16 %v764
  %v855 = vunpack.c.l.b16 %v765
  %v856 = vunpack.c.h.b16 %v765
  %v857 = vunpack.c.l.b16 %v766
  %v858 = vunpack.c.h.b16 %v766
  %v859 = vunpack.c.l.b16 %v767
  %v860 = vunpack.c.h.b16 %v767
  %v861 = vunpack.c.l.b16 %v768
  %v862 = vunpack.c.h.b16 %v768
  %v863 = vunpack.c.l.b16 %v769
  %v864 = vunpack.c.h.b16 %v769
  %v865 = vunpack.c.l.b16 %v770
  %v866 = vunpack.c.h.b16 %v770
  %v867 = vpack.c.b16 %v803, %v803
  %v868 = vpack.c.b16 %v804, %v804
  %v869 = vpack.c.b16 %v805, %v805
  %v870 = vpack.c.b16 %v806, %v806
  %v871 = vpack.c.b16 %v807, %v807
  %v872 = vpack.c.b16 %v808, %v808
  %v873 = vpack.c.b16 %v809, %v809
  %v874 = vpack.c.b16 %v810, %v810
  %v875 = vpack.c.b16 %v811, %v811
  %v876 = vpack.c.b16 %v812, %v812
  %v877 = vpack.c.b16 %v813, %v813
  %v878 = vpack.c.b16 %v814, %v814
  %v879 = vpack.c.b16 %v815, %v815
  %v880 = vpack.c.b16 %v816, %v816
  %v881 = vpack.c.b16 %v817, %v817
  %v882 = vpack.c.b16 %v818, %v818
  %v883 = vpack.c.b16 %v819, %v819
  %v884 = vpack.c.b16 %v820, %v820
  %v885 = vpack.c.b16 %v821, %v821
  %v886 = vpack.c.b16 %v822, %v822
  %v887 = vpack.c.b16 %v823, %v823
  %v888 = vpack.c.b16 %v824, %v824
  %v889 = vpack.c.b16 %v825, %v825
  %v890 = vpack.c.b16 %v826, %v826
  %v891 = vpack.c.b16 %v827, %v827
  %v892 = vpack.c.b16 %v828, %v828
  %v893 = vpack.c.b16 %v829, %v829
  %v894 = vpack.c.b16 %v830, %v830
  %v895 = vpack.c.b16 %v831, %v831
  %v896 = vpack.c.b16 %v832, %v832
  %v897 = vpack.c.b16 %v833, %v833
  %v898 = vpack.c.b16 %v834, %v834
  %v899 = vpack.c.b16 %v835, %v835
  %v900 = vpack.c.b16 %v836, %v836
  %v901 = vpack.c.b16 %v837, %v837
  %v902 = vpack.c.b16 %v838, %v838
  %v903 = vpack.c.b16 %v839, %v839
  %v904 = vpack.c.b16 %v840, %v840
  %v905 = vpack.c.b16 %v841, %v841
  %v906 = vpack.c.b16 %v842, %v842
  %v907 = vpack.c.b16 %v843, %v843
  %v908 = vpack.c.b16 %v844, %v844
  %v909 = vpack.c.b16 %v845, %v845
  %v910 = vpack.c.b16 %v846, %v846
  %v911 = vpack.c.b16 %v847, %v847
  %v912 = vpack.c.b16 %v848, %v848
  %v913 = vpack.c.b16 %v849, %v849
  %v914 = vpack.c.b16 %v850, %v850
  %v915 = vpack.c.b16 %v851, %v851
  %v916 = vpack.c.b16 %v852, %v852
  %v917 = vpack.c.b16 %v853, %v853
  %v918 = vpack.c.b16 %v854, %v854
  %v919 = vpack.c.b16 %v855, %v855
  %v920 = vpack.c.b16 %v856, %v856
  %v921 = vpack.c.b16 %v857, %v857
  %v922 = vpack.c.b16 %v858, %v858
  %v923 = vpack.c.b16 %v859, %v859
  %v924 = vpack.c.b16 %v860, %v860
  %v925 = vpack.c.b16 %v861, %v861
  %v926 = vpack.c.b16 %v862, %v862
  %v927 = vpack.c.b16 %v863, %v863
  %v928 = vpack.c.b16 %v864, %v864
  %v929 = vpack.c.b16 %v865, %v865
  %v930 = vpack.c.b16 %v866, %v866
  %995 = vst [vmem:[%s4] sm:$0xf] %v867
  %996 = vst [vmem:[%s4 + $0x4] sm:$0xf] %v868
  %997 = vst [vmem:[%s4 + $0x8] sm:$0xf] %v869
  %998 = vst [vmem:[%s4 + $0xc] sm:$0xf] %v870
  %999 = vst [vmem:[%s4 + $0x10] sm:$0xf] %v871
  %1000 = vst [vmem:[%s4 + $0x14] sm:$0xf] %v872
  %1001 = vst [vmem:[%s4 + $0x18] sm:$0xf] %v873
  %1002 = vst [vmem:[%s4 + $0x1c] sm:$0xf] %v874
  %1003 = vst [vmem:[%s4 + $0x20] sm:$0xf] %v875
  %1004 = vst [vmem:[%s4 + $0x24] sm:$0xf] %v876
  %1005 = vst [vmem:[%s4 + $0x28] sm:$0xf] %v877
  %1006 = vst [vmem:[%s4 + $0x2c] sm:$0xf] %v878
  %1007 = vst [vmem:[%s4 + $0x30] sm:$0xf] %v879
  %1008 = vst [vmem:[%s4 + $0x34] sm:$0xf] %v880
  %1009 = vst [vmem:[%s4 + $0x38] sm:$0xf] %v881
  %1010 = vst [vmem:[%s4 + $0x3c] sm:$0xf] %v882
  %1011 = vst [vmem:[%s4 + $0x40] sm:$0xf] %v883
  %1012 = vst [vmem:[%s4 + $0x44] sm:$0xf] %v884
  %1013 = vst [vmem:[%s4 + $0x48] sm:$0xf] %v885
  %1014 = vst [vmem:[%s4 + $0x4c] sm:$0xf] %v886
  %1015 = vst [vmem:[%s4 + $0x50] sm:$0xf] %v887
  %1016 = vst [vmem:[%s4 + $0x54] sm:$0xf] %v888
  %1017 = vst [vmem:[%s4 + $0x58] sm:$0xf] %v889
  %1018 = vst [vmem:[%s4 + $0x5c] sm:$0xf] %v890
  %1019 = vst [vmem:[%s4 + $0x60] sm:$0xf] %v891
  %1020 = vst [vmem:[%s4 + $0x64] sm:$0xf] %v892
  %1021 = vst [vmem:[%s4 + $0x68] sm:$0xf] %v893
  %1022 = vst [vmem:[%s4 + $0x6c] sm:$0xf] %v894
  %1023 = vst [vmem:[%s4 + $0x70] sm:$0xf] %v895
  %1024 = vst [vmem:[%s4 + $0x74] sm:$0xf] %v896
  %1025 = vst [vmem:[%s4 + $0x78] sm:$0xf] %v897
  %1026 = vst [vmem:[%s4 + $0x7c] sm:$0xf] %v898
  %1027 = vst [vmem:[%s4 + $0x80] sm:$0xf] %v899
  %1028 = vst [vmem:[%s4 + $0x84] sm:$0xf] %v900
  %1029 = vst [vmem:[%s4 + $0x88] sm:$0xf] %v901
  %1030 = vst [vmem:[%s4 + $0x8c] sm:$0xf] %v902
  %1031 = vst [vmem:[%s4 + $0x90] sm:$0xf] %v903
  %1032 = vst [vmem:[%s4 + $0x94] sm:$0xf] %v904
  %1033 = vst [vmem:[%s4 + $0x98] sm:$0xf] %v905
  %1034 = vst [vmem:[%s4 + $0x9c] sm:$0xf] %v906
  %1035 = vst [vmem:[%s4 + $0xa0] sm:$0xf] %v907
  %1036 = vst [vmem:[%s4 + $0xa4] sm:$0xf] %v908
  %1037 = vst [vmem:[%s4 + $0xa8] sm:$0xf] %v909
  %1038 = vst [vmem:[%s4 + $0xac] sm:$0xf] %v910
  %1039 = vst [vmem:[%s4 + $0xb0] sm:$0xf] %v911
  %1040 = vst [vmem:[%s4 + $0xb4] sm:$0xf] %v912
  %1041 = vst [vmem:[%s4 + $0xb8] sm:$0xf] %v913
  %1042 = vst [vmem:[%s4 + $0xbc] sm:$0xf] %v914
  %1043 = vst [vmem:[%s4 + $0xc0] sm:$0xf] %v915
  %1044 = vst [vmem:[%s4 + $0xc4] sm:$0xf] %v916
  %1045 = vst [vmem:[%s4 + $0xc8] sm:$0xf] %v917
  %1046 = vst [vmem:[%s4 + $0xcc] sm:$0xf] %v918
  %1047 = vst [vmem:[%s4 + $0xd0] sm:$0xf] %v919
  %1048 = vst [vmem:[%s4 + $0xd4] sm:$0xf] %v920
  %1049 = vst [vmem:[%s4 + $0xd8] sm:$0xf] %v921
  %1050 = vst [vmem:[%s4 + $0xdc] sm:$0xf] %v922
  %1051 = vst [vmem:[%s4 + $0xe0] sm:$0xf] %v923
  %1052 = vst [vmem:[%s4 + $0xe4] sm:$0xf] %v924
  %1053 = vst [vmem:[%s4 + $0xe8] sm:$0xf] %v925
  %1054 = vst [vmem:[%s4 + $0xec] sm:$0xf] %v926
  %1055 = vst [vmem:[%s4 + $0xf0] sm:$0xf] %v927
  %1056 = vst [vmem:[%s4 + $0xf4] sm:$0xf] %v928
  %1057 = vst [vmem:[%s4 + $0xf8] sm:$0xf] %v929
  %1058 = vst [vmem:[%s4 + $0xfc] sm:$0xf] %v930
  %v1059 = vadd.f32 %v485, %v488
  %v1060 = vadd.f32 %v1059, %v493
  %v1061 = vadd.f32 %v1060, %v496
  %v1062 = vadd.f32 %v1061, %v501
  %v1063 = vadd.f32 %v1062, %v504
  %v1064 = vadd.f32 %v1063, %v509
  %v1065 = vadd.f32 %v1064, %v512
  %v1066 = vadd.f32 %v1065, %v517
  %v1067 = vadd.f32 %v1066, %v520
  %v1068 = vadd.f32 %v1067, %v525
  %v1069 = vadd.f32 %v1068, %v528
  %v1070 = vadd.f32 %v1069, %v533
  %v1071 = vadd.f32 %v1070, %v536
  %v1072 = vadd.f32 %v1071, %v541
  %v1073 = vadd.f32 %v1072, %v544
  %v1074 = vadd.f32 %v1073, %v549
  %v1075 = vadd.f32 %v1074, %v552
  %v1076 = vadd.f32 %v1075, %v557
  %v1077 = vadd.f32 %v1076, %v560
  %v1078 = vadd.f32 %v1077, %v565
  %v1079 = vadd.f32 %v1078, %v568
  %v1080 = vadd.f32 %v1079, %v573
  %v1081 = vadd.f32 %v1080, %v576
  %v1082 = vadd.f32 %v1081, %v581
  %v1083 = vadd.f32 %v1082, %v584
  %v1084 = vadd.f32 %v1083, %v589
  %v1085 = vadd.f32 %v1084, %v592
  %v1086 = vadd.f32 %v1085, %v597
  %v1087 = vadd.f32 %v1086, %v600
  %v1088 = vadd.f32 %v1087, %v605
  %v1089 = vadd.f32 %v1088, %v608
  %v1090 = vadd.f32 %v1089, %v613
  %v1091 = vadd.f32 %v1090, %v616
  %v1092 = vadd.f32 %v1091, %v621
  %v1093 = vadd.f32 %v1092, %v624
  %v1094 = vadd.f32 %v1093, %v629
  %v1095 = vadd.f32 %v1094, %v632
  %v1096 = vadd.f32 %v1095, %v637
  %v1097 = vadd.f32 %v1096, %v640
  %v1098 = vadd.f32 %v1097, %v645
  %v1099 = vadd.f32 %v1098, %v648
  %v1100 = vadd.f32 %v1099, %v653
  %v1101 = vadd.f32 %v1100, %v656
  %v1102 = vadd.f32 %v1101, %v661
  %v1103 = vadd.f32 %v1102, %v664
  %v1104 = vadd.f32 %v1103, %v669
  %v1105 = vadd.f32 %v1104, %v672
  %v1106 = vadd.f32 %v1105, %v677
  %v1107 = vadd.f32 %v1106, %v680
  %v1108 = vadd.f32 %v1107, %v685
  %v1109 = vadd.f32 %v1108, %v688
  %v1110 = vadd.f32 %v1109, %v693
  %v1111 = vadd.f32 %v1110, %v696
  %v1112 = vadd.f32 %v1111, %v701
  %v1113 = vadd.f32 %v1112, %v704
  %v1114 = vadd.f32 %v1113, %v709
  %v1115 = vadd.f32 %v1114, %v712
  %v1116 = vadd.f32 %v1115, %v717
  %v1117 = vadd.f32 %v1116, %v720
  %v1118 = vadd.f32 %v1117, %v725
  %v1119 = vadd.f32 %v1118, %v728
  %v1120 = vadd.f32 %v1119, %v733
  %v1121 = vadd.f32 %v1120, %v736
  %v1122 = vrot.slane %v1121, 4
  %v1123 = vadd.f32 %v1121, %v1122
  %v1124 = vrot.slane %v1123, 2
  %v1125 = vadd.f32 %v1123, %v1124
  %v1126 = vrot.slane %v1125, 1
  %v1127 = vadd.f32 %v1125, %v1126
  %v1128 = vmul.f32 %v485, %v485
  %v1129 = vmul.f32 %v488, %v488
  %v1130 = vmul.f32 %v493, %v493
  %v1131 = vmul.f32 %v496, %v496
  %v1132 = vmul.f32 %v501, %v501
  %v1133 = vmul.f32 %v504, %v504
  %v1134 = vmul.f32 %v509, %v509
  %v1135 = vmul.f32 %v512, %v512
  %v1136 = vmul.f32 %v517, %v517
  %v1137 = vmul.f32 %v520, %v520
  %v1138 = vmul.f32 %v525, %v525
  %v1139 = vmul.f32 %v528, %v528
  %v1140 = vmul.f32 %v533, %v533
  %v1141 = vmul.f32 %v536, %v536
  %v1142 = vmul.f32 %v541, %v541
  %v1143 = vmul.f32 %v544, %v544
  %v1144 = vmul.f32 %v549, %v549
  %v1145 = vmul.f32 %v552, %v552
  %v1146 = vmul.f32 %v557, %v557
  %v1147 = vmul.f32 %v560, %v560
  %v1148 = vmul.f32 %v565, %v565
  %v1149 = vmul.f32 %v568, %v568
  %v1150 = vmul.f32 %v573, %v573
  %v1151 = vmul.f32 %v576, %v576
  %v1152 = vmul.f32 %v581, %v581
  %v1153 = vmul.f32 %v584, %v584
  %v1154 = vmul.f32 %v589, %v589
  %v1155 = vmul.f32 %v592, %v592
  %v1156 = vmul.f32 %v597, %v597
  %v1157 = vmul.f32 %v600, %v600
  %v1158 = vmul.f32 %v605, %v605
  %v1159 = vmul.f32 %v608, %v608
  %v1160 = vmul.f32 %v613, %v613
  %v1161 = vmul.f32 %v616, %v616
  %v1162 = vmul.f32 %v621, %v621
  %v1163 = vmul.f32 %v624, %v624
  %v1164 = vmul.f32 %v629, %v629
  %v1165 = vmul.f32 %v632, %v632
  %v1166 = vmul.f32 %v637, %v637
  %v1167 = vmul.f32 %v640, %v640
  %v1168 = vmul.f32 %v645, %v645
  %v1169 = vmul.f32 %v648, %v648
  %v1170 = vmul.f32 %v653, %v653
  %v1171 = vmul.f32 %v656, %v656
  %v1172 = vmul.f32 %v661, %v661
  %v1173 = vmul.f32 %v664, %v664
  %v1174 = vmul.f32 %v669, %v669
  %v1175 = vmul.f32 %v672, %v672
  %v1176 = vmul.f32 %v677, %v677
  %v1177 = vmul.f32 %v680, %v680
  %v1178 = vmul.f32 %v685, %v685
  %v1179 = vmul.f32 %v688, %v688
  %v1180 = vmul.f32 %v693, %v693
  %v1181 = vmul.f32 %v696, %v696
  %v1182 = vmul.f32 %v701, %v701
  %v1183 = vmul.f32 %v704, %v704
  %v1184 = vmul.f32 %v709, %v709
  %v1185 = vmul.f32 %v712, %v712
  %v1186 = vmul.f32 %v717, %v717
  %v1187 = vmul.f32 %v720, %v720
  %v1188 = vmul.f32 %v725, %v725
  %v1189 = vmul.f32 %v728, %v728
  %v1190 = vmul.f32 %v733, %v733
  %v1191 = vmul.f32 %v736, %v736
  %v1192 = vadd.f32 %v1128, %v1129
  %v1193 = vadd.f32 %v1192, %v1130
  %v1194 = vadd.f32 %v1193, %v1131
  %v1195 = vadd.f32 %v1194, %v1132
  %v1196 = vadd.f32 %v1195, %v1133
  %v1197 = vadd.f32 %v1196, %v1134
  %v1198 = vadd.f32 %v1197, %v1135
  %v1199 = vadd.f32 %v1198, %v1136
  %v1200 = vadd.f32 %v1199, %v1137
  %v1201 = vadd.f32 %v1200, %v1138
  %v1202 = vadd.f32 %v1201, %v1139
  %v1203 = vadd.f32 %v1202, %v1140
  %v1204 = vadd.f32 %v1203, %v1141
  %v1205 = vadd.f32 %v1204, %v1142
  %v1206 = vadd.f32 %v1205, %v1143
  %v1207 = vadd.f32 %v1206, %v1144
  %v1208 = vadd.f32 %v1207, %v1145
  %v1209 = vadd.f32 %v1208, %v1146
  %v1210 = vadd.f32 %v1209, %v1147
  %v1211 = vadd.f32 %v1210, %v1148
  %v1212 = vadd.f32 %v1211, %v1149
  %v1213 = vadd.f32 %v1212, %v1150
  %v1214 = vadd.f32 %v1213, %v1151
  %v1215 = vadd.f32 %v1214, %v1152
  %v1216 = vadd.f32 %v1215, %v1153
  %v1217 = vadd.f32 %v1216, %v1154
  %v1218 = vadd.f32 %v1217, %v1155
  %v1219 = vadd.f32 %v1218, %v1156
  %v1220 = vadd.f32 %v1219, %v1157
  %v1221 = vadd.f32 %v1220, %v1158
  %v1222 = vadd.f32 %v1221, %v1159
  %v1223 = vadd.f32 %v1222, %v1160
  %v1224 = vadd.f32 %v1223, %v1161
  %v1225 = vadd.f32 %v1224, %v1162
  %v1226 = vadd.f32 %v1225, %v1163
  %v1227 = vadd.f32 %v1226, %v1164
  %v1228 = vadd.f32 %v1227, %v1165
  %v1229 = vadd.f32 %v1228, %v1166
  %v1230 = vadd.f32 %v1229, %v1167
  %v1231 = vadd.f32 %v1230, %v1168
  %v1232 = vadd.f32 %v1231, %v1169
  %v1233 = vadd.f32 %v1232, %v1170
  %v1234 = vadd.f32 %v1233, %v1171
  %v1235 = vadd.f32 %v1234, %v1172
  %v1236 = vadd.f32 %v1235, %v1173
  %v1237 = vadd.f32 %v1236, %v1174
  %v1238 = vadd.f32 %v1237, %v1175
  %v1239 = vadd.f32 %v1238, %v1176
  %v1240 = vadd.f32 %v1239, %v1177
  %v1241 = vadd.f32 %v1240, %v1178
  %v1242 = vadd.f32 %v1241, %v1179
  %v1243 = vadd.f32 %v1242, %v1180
  %v1244 = vadd.f32 %v1243, %v1181
  %v1245 = vadd.f32 %v1244, %v1182
  %v1246 = vadd.f32 %v1245, %v1183
  %v1247 = vadd.f32 %v1246, %v1184
  %v1248 = vadd.f32 %v1247, %v1185
  %v1249 = vadd.f32 %v1248, %v1186
  %v1250 = vadd.f32 %v1249, %v1187
  %v1251 = vadd.f32 %v1250, %v1188
  %v1252 = vadd.f32 %v1251, %v1189
  %v1253 = vadd.f32 %v1252, %v1190
  %v1254 = vadd.f32 %v1253, %v1191
  %v1255 = vrot.slane %v1254, 4
  %v1256 = vadd.f32 %v1254, %v1255
  %v1257 = vrot.slane %v1256, 2
  %v1258 = vadd.f32 %v1256, %v1257
  %v1259 = vrot.slane %v1258, 1
  %v1260 = vadd.f32 %v1258, %v1259
  %vm1261 = vcmask 1040384
  %v1262 = vsel %vm1261, %v1127, %v1260
  %1263 = vst [vmem:[%s5] sm:$0x3] %v1262
  // Predicated region
  $region18: #{bottleneck_forward.6} parent=0 // pred_check
    _
  $region19: #{bottleneck_forward.6} parent=0 // pred_check_branch
    %1265 = sbr.rel (0) target = $region21
  $region20: #{bottleneck_forward.6} parent=0 // pred_region
    _
  $region21: #{bottleneck_forward.6} parent=0 // pred_fallthru
    _
  // Predicated region
  $region22: #{bottleneck_forward.6} parent=0 // pred_check
    _
  $region23: #{bottleneck_forward.6} parent=0 // pred_check_branch
    %1267 = sbr.rel (0) target = $region25
  $region24: #{bottleneck_forward.6} parent=0 // pred_region
    _
  $region25: #{bottleneck_forward.6} parent=0 // pred_fallthru
    _
  // Predicated region
  $region26: #{bottleneck_forward.6} parent=0 // pred_check
    _
  $region27: #{bottleneck_forward.6} parent=0 // pred_check_branch
    %1269 = sbr.rel (0) target = $region29
  $region28: #{bottleneck_forward.6} parent=0 // pred_region
    _
  $region29: #{bottleneck_forward.6} parent=0 // pred_fallthru
    _
  // Predicated region
  $region30: #{bottleneck_forward.6} parent=0 // pred_check
    _
  $region31: #{bottleneck_forward.6} parent=0 // pred_check_branch
    %1271 = sbr.rel (0) target = $region33
  $region32: #{bottleneck_forward.6} parent=0 // pred_region
    _
  $region33: #{bottleneck_forward.6} parent=0 // pred_fallthru
    _

// kernel: bottleneck_forward.5
$region0: #{bottleneck_forward.5}
  #allocation0 [shape = 'u32[]', space=smem, size = 0x4, offset = 0x4, fixed_abs, tag = 'smem constant byte address 0x4 - core index']
  #allocation1 [shape = 'u32[144,128]{1,0:T(1,128)}', space=vmem, size = 0x12000, scoped, tag = 'internal scratch']
  %s0 = inlined_call_operand.vmem [shape: bf16[512,128], index: 0, kind: input, shape index: {}]
  %s1 = inlined_call_operand.vmem [shape: bf16[3,384,128], index: 1, kind: input, shape index: {}]
  %s2 = inlined_call_operand.vmem [shape: f32[1,128], index: 2, kind: input, shape index: {}]
  %s3 = inlined_call_operand.vmem [shape: f32[1,128], index: 3, kind: input, shape index: {}]
  %s4 = inlined_call_operand.vmem [shape: bf16[512,128], index: 4, kind: output, shape index: {0}]
  %s5 = inlined_call_operand.vmem [shape: f32[2,2,128], index: 5, kind: output, shape index: {1}]
  %6 = xla_tuple %s4, %s5
  %s7 = sld [smem:[#allocation0]]
  $region57: #{bottleneck_forward.5} parent=0
    _
  %s9 = ssub.s32 1, %s7
  %s10 = scalar_select 0, %s9, %s7
  loop: start=0, step=1, limit=4
  $region2: #{bottleneck_forward.5} parent=0 // loop_pre_header
    _
  $region3: #{bottleneck_forward.5} parent=0 // loop_header
    %s12 = sphi 0, %s16
    %p13 = scmp.ge.s32.totalorder %s12, 4
    %s22 = sphi 0, %s24
    %s25 = sphi 0, %s22
    %s26 = sphi 0, %s25
    %s42 = sphi 0, %s26
    %s46 = sphi 0, %s46
    %s48 = sphi 0, %s46
    %s49 = sphi 0, %s48
    %s63 = sphi 0, %s49
    %s67 = sphi 0, %s67
    %s69 = sphi 0, %s67
    %s70 = sphi 0, %s69
    %s84 = sphi 0, %s70
    %s88 = sphi 0, %s88
    %s90 = sphi 0, %s88
    %s91 = sphi 0, %s90
    %s105 = sphi 0, %s91
    %s111 = sphi 0, %s113
    %s114 = sphi 0, %s111
    %s115 = sphi 0, %s114
    %s131 = sphi 0, %s115
    %s137 = sphi 0, %s139
    %s140 = sphi 0, %s137
    %s141 = sphi 0, %s140
    %s157 = sphi 0, %s141
  $region4: #{bottleneck_forward.5} parent=0 // loop_header_branch
    %15 = sbr.rel (%p13) target = $region8
  $region5: #{bottleneck_forward.5} parent=0 // loop_body
    %s17 = ssub.s32 %s12, 1
    %s18 = ssub.s32 %s12, 2
    %s19 = sadd.s32 %s12, 1
    %s20 = ssub.s32 %s12, %s19
    %p21 = scmp.eq.s32.totalorder %s20, 0
    %s23 = sadd.s32 %s22, 1
    %s24 = scalar_select %p21, %s22, %s23
    %p27 = pneg %p21
    %p28 = scmp.eq.s32.totalorder %s12, 1
    %p29 = por %p27, %p28
    %p30 = scmp.ne.s32.totalorder %s22, %s25
    %p31 = scmp.eq.s32.totalorder %s12, 0
    %p32 = por %p30, %p31
    %p33 = scmp.ne.s32.totalorder %s22, %s25
    %p34 = scmp.eq.s32.totalorder %s17, 1
    %p35 = por %p33, %p34
    %p36 = scmp.ne.s32.totalorder %s25, %s26
    %p37 = scmp.eq.s32.totalorder %s17, 0
    %p38 = por %p36, %p37
    %p39 = scmp.ne.s32.totalorder %s25, %s26
    %p40 = scmp.eq.s32.totalorder %s18, 1
    %p41 = por %p39, %p40
    %p43 = scmp.ne.s32.totalorder %s26, %s42
    %p44 = scmp.eq.s32.totalorder %s18, 0
    %p45 = por %p43, %p44
    %s47 = sadd.s32 %s46, 1
    %p50 = scmp.eq.s32.totalorder %s12, 1
    %p51 = scmp.ne.s32.totalorder %s46, %s48
    %p52 = scmp.eq.s32.totalorder %s12, 0
    %p53 = por %p51, %p52
    %p54 = scmp.ne.s32.totalorder %s46, %s48
    %p55 = scmp.eq.s32.totalorder %s17, 1
    %p56 = por %p54, %p55
    %p57 = scmp.ne.s32.totalorder %s48, %s49
    %p58 = scmp.eq.s32.totalorder %s17, 0
    %p59 = por %p57, %p58
    %p60 = scmp.ne.s32.totalorder %s48, %s49
    %p61 = scmp.eq.s32.totalorder %s18, 1
    %p62 = por %p60, %p61
    %p64 = scmp.ne.s32.totalorder %s49, %s63
    %p65 = scmp.eq.s32.totalorder %s18, 0
    %p66 = por %p64, %p65
    %s68 = sadd.s32 %s67, 1
    %p71 = scmp.eq.s32.totalorder %s12, 1
    %p72 = scmp.ne.s32.totalorder %s67, %s69
    %p73 = scmp.eq.s32.totalorder %s12, 0
    %p74 = por %p72, %p73
    %p75 = scmp.ne.s32.totalorder %s67, %s69
    %p76 = scmp.eq.s32.totalorder %s17, 1
    %p77 = por %p75, %p76
    %p78 = scmp.ne.s32.totalorder %s69, %s70
    %p79 = scmp.eq.s32.totalorder %s17, 0
    %p80 = por %p78, %p79
    %p81 = scmp.ne.s32.totalorder %s69, %s70
    %p82 = scmp.eq.s32.totalorder %s18, 1
    %p83 = por %p81, %p82
    %p85 = scmp.ne.s32.totalorder %s70, %s84
    %p86 = scmp.eq.s32.totalorder %s18, 0
    %p87 = por %p85, %p86
    %s89 = sadd.s32 %s88, 1
    %p92 = scmp.eq.s32.totalorder %s12, 1
    %p93 = scmp.ne.s32.totalorder %s88, %s90
    %p94 = scmp.eq.s32.totalorder %s12, 0
    %p95 = por %p93, %p94
    %p96 = scmp.ne.s32.totalorder %s88, %s90
    %p97 = scmp.eq.s32.totalorder %s17, 1
    %p98 = por %p96, %p97
    %p99 = scmp.ne.s32.totalorder %s90, %s91
    %p100 = scmp.eq.s32.totalorder %s17, 0
    %p101 = por %p99, %p100
    %p102 = scmp.ne.s32.totalorder %s90, %s91
    %p103 = scmp.eq.s32.totalorder %s18, 1
    %p104 = por %p102, %p103
    %p106 = scmp.ne.s32.totalorder %s91, %s105
    %p107 = scmp.eq.s32.totalorder %s18, 0
    %p108 = por %p106, %p107
    %s109 = ssub.s32 %s12, %s19
    %p110 = scmp.eq.s32.totalorder %s109, 0
    %s112 = sadd.s32 %s111, 1
    %s113 = scalar_select %p110, %s111, %s112
    %p116 = pneg %p110
    %p117 = scmp.eq.s32.totalorder %s12, 1
    %p118 = por %p116, %p117
    %p119 = scmp.ne.s32.totalorder %s111, %s114
    %p120 = scmp.eq.s32.totalorder %s12, 0
    %p121 = por %p119, %p120
    %p122 = scmp.ne.s32.totalorder %s111, %s114
    %p123 = scmp.eq.s32.totalorder %s17, 1
    %p124 = por %p122, %p123
    %p125 = scmp.ne.s32.totalorder %s114, %s115
    %p126 = scmp.eq.s32.totalorder %s17, 0
    %p127 = por %p125, %p126
    %p128 = scmp.ne.s32.totalorder %s114, %s115
    %p129 = scmp.eq.s32.totalorder %s18, 1
    %p130 = por %p128, %p129
    %p132 = scmp.ne.s32.totalorder %s115, %s131
    %p133 = scmp.eq.s32.totalorder %s18, 0
    %p134 = por %p132, %p133
    %s135 = ssub.s32 %s12, %s19
    %p136 = scmp.eq.s32.totalorder %s135, 0
    %s138 = sadd.s32 %s137, 1
    %s139 = scalar_select %p136, %s137, %s138
    %p142 = pneg %p136
    %p143 = scmp.eq.s32.totalorder %s12, 1
    %p144 = por %p142, %p143
    %p145 = scmp.ne.s32.totalorder %s137, %s140
    %p146 = scmp.eq.s32.totalorder %s12, 0
    %p147 = por %p145, %p146
    %p148 = scmp.ne.s32.totalorder %s137, %s140
    %p149 = scmp.eq.s32.totalorder %s17, 1
    %p150 = por %p148, %p149
    %p151 = scmp.ne.s32.totalorder %s140, %s141
    %p152 = scmp.eq.s32.totalorder %s17, 0
    %p153 = por %p151, %p152
    %p154 = scmp.ne.s32.totalorder %s140, %s141
    %p155 = scmp.eq.s32.totalorder %s18, 1
    %p156 = por %p154, %p155
    %p158 = scmp.ne.s32.totalorder %s141, %s157
    %p159 = scmp.eq.s32.totalorder %s18, 0
    %p160 = por %p158, %p159
    %p161 = scmp.le.s32.totalorder 1, %s12
    %p162 = scmp.lt.s32.totalorder %s12, 3
    %p163 = pnand %p161, %p162
    %p164 = pneg %p163
    // Predicated region
    $region9: #{bottleneck_forward.5} parent=5 // pred_check
      _
    $region10: #{bottleneck_forward.5} parent=5 // pred_check_branch
      %166 = sbr.rel (%p163) target = $region12
    $region11: #{bottleneck_forward.5} parent=5 // pred_region
      %s167 = ssub.s32 %s12, 1
      // Predicated region
      $region13: #{bottleneck_forward.5} parent=11 // pred_check
        %p168 = pneg %p59
      $region14: #{bottleneck_forward.5} parent=11 // pred_check_branch
        %170 = sbr.rel (%p168) target = $region16
      $region15: #{bottleneck_forward.5} parent=11 // pred_region
        _
      $region16: #{bottleneck_forward.5} parent=11 // pred_fallthru
        _
      // Predicated region
      $region17: #{bottleneck_forward.5} parent=11 // pred_check
        %p171 = pneg %p80
      $region18: #{bottleneck_forward.5} parent=11 // pred_check_branch
        %173 = sbr.rel (%p171) target = $region20
      $region19: #{bottleneck_forward.5} parent=11 // pred_region
        _
      $region20: #{bottleneck_forward.5} parent=11 // pred_fallthru
        _
      // Predicated region
      $region21: #{bottleneck_forward.5} parent=11 // pred_check
        %p174 = pneg %p101
      $region22: #{bottleneck_forward.5} parent=11 // pred_check_branch
        %176 = sbr.rel (%p174) target = $region24
      $region23: #{bottleneck_forward.5} parent=11 // pred_region
        _
      $region24: #{bottleneck_forward.5} parent=11 // pred_fallthru
        _
    $region12: #{bottleneck_forward.5} parent=5 // pred_fallthru
      _
    %p177 = scmp.lt.s32.totalorder %s12, 2
    // Predicated region
    $region25: #{bottleneck_forward.5} parent=5 // pred_check
      %p178 = pneg %p177
    $region26: #{bottleneck_forward.5} parent=5 // pred_check_branch
      %180 = sbr.rel (%p178) target = $region28
    $region27: #{bottleneck_forward.5} parent=5 // pred_region
      // Predicated region
      $region29: #{bottleneck_forward.5} parent=27 // pred_check
        %p181 = pneg %p32
      $region30: #{bottleneck_forward.5} parent=27 // pred_check_branch
        %183 = sbr.rel (%p181) target = $region32
      $region31: #{bottleneck_forward.5} parent=27 // pred_region
        %s184 = smul.u32 32, %s12
        %p185 = scmp.lt.s32.totalorder %s184, 63
        %s186 = scalar_select %p185, %s184, 63
        %s187 = smul.addr %s186, 4
        %s188 = scalar_lea.vmem %s0, %s187
        %s189 = smul.u32 32, %s12
      $region32: #{bottleneck_forward.5} parent=27 // pred_fallthru
        _
    $region28: #{bottleneck_forward.5} parent=5 // pred_fallthru
      _
    %p190 = scmp.le.s32.totalorder 1, %s12
    %p191 = scmp.lt.s32.totalorder %s12, 3
    %p192 = pnand %p190, %p191
    %p193 = pneg %p192
    // Predicated region
    $region33: #{bottleneck_forward.5} parent=5 // pred_check
      _
    $region34: #{bottleneck_forward.5} parent=5 // pred_check_branch
      %195 = sbr.rel (%p192) target = $region36
    $region35: #{bottleneck_forward.5} parent=5 // pred_region
      %s196 = ssub.s32 %s12, 1
      %s197 = smul.u32 32, %s17
      %p198 = scmp.lt.s32.totalorder %s197, 63
      %s199 = scalar_select %p198, %s197, 63
      %s200 = smul.addr %s199, 4
      %s201 = scalar_lea.vmem %s0, %s200
      %p202 = pneg %p38
      %p203 = pneg %p35
      %p204 = pneg %p59
      %p205 = pneg %p56
      %p206 = pneg %p80
      %p207 = pneg %p77
      %p208 = pneg %p101
      %p209 = pneg %p98
      %p210 = pneg %p127
      %p211 = pneg %p124
      %s212 = smul.u32 32, %s17
      %p213 = scmp.lt.s32.totalorder %s212, 63
      %s214 = scalar_select %p213, %s212, 63
      %s215 = smul.addr %s214, 4
      %s216 = scalar_lea.vmem %s4, %s215
      %p217 = pneg %p153
      %p218 = pneg %p150
      %p219 = scmp.lt.s32.totalorder %s17, 1
      %s220 = scalar_select %p219, %s17, 1
      %s221 = smul.addr %s220, 2
      %s222 = scalar_lea.vmem %s5, %s221
      %s223 = smul.u32 32, %s17
      %p224 = scmp.lt.s32.totalorder %s223, 63
      %s225 = scalar_select %p224, %s223, 63
      %s226 = smul.addr %s225, 4
      %s227 = scalar_lea.vmem %s0, %s226
      %s228 = smul.u32 32, %s17
      %s229 = smul.u32 32, %s17
      %p230 = scmp.lt.s32.totalorder %s229, 63
      %s231 = scalar_select %p230, %s229, 63
      %s232 = smul.addr %s231, 4
      %s233 = scalar_lea.vmem %s4, %s232
      %s234 = smul.u32 32, %s17
      %p235 = scmp.lt.s32.totalorder %s17, 1
      %s236 = scalar_select %p235, %s17, 1
      %s237 = smul.addr %s236, 2
      %s238 = scalar_lea.vmem %s5, %s237
      %v240 = vld [vmem:[%s2] sm:$0x1]
      %v241 = vld [vmem:[%s227] sm:$0xf]
      %v242 = vld [vmem:[%s227 + $0x4] sm:$0xf]
      %v243 = vld [vmem:[%s227 + $0x8] sm:$0xf]
      %v244 = vld [vmem:[%s227 + $0xc] sm:$0xf]
      %v245 = vld [vmem:[%s227 + $0x10] sm:$0xf]
      %v246 = vld [vmem:[%s227 + $0x14] sm:$0xf]
      %v247 = vld [vmem:[%s227 + $0x18] sm:$0xf]
      %v248 = vld [vmem:[%s227 + $0x1c] sm:$0xf]
      %v249 = vld [vmem:[%s227 + $0x20] sm:$0xf]
      %v250 = vld [vmem:[%s227 + $0x24] sm:$0xf]
      %v251 = vld [vmem:[%s227 + $0x28] sm:$0xf]
      %v252 = vld [vmem:[%s227 + $0x2c] sm:$0xf]
      %v253 = vld [vmem:[%s227 + $0x30] sm:$0xf]
      %v254 = vld [vmem:[%s227 + $0x34] sm:$0xf]
      %v255 = vld [vmem:[%s227 + $0x38] sm:$0xf]
      %v256 = vld [vmem:[%s227 + $0x3c] sm:$0xf]
      %v257 = vld [vmem:[%s227 + $0x40] sm:$0xf]
      %v258 = vld [vmem:[%s227 + $0x44] sm:$0xf]
      %v259 = vld [vmem:[%s227 + $0x48] sm:$0xf]
      %v260 = vld [vmem:[%s227 + $0x4c] sm:$0xf]
      %v261 = vld [vmem:[%s227 + $0x50] sm:$0xf]
      %v262 = vld [vmem:[%s227 + $0x54] sm:$0xf]
      %v263 = vld [vmem:[%s227 + $0x58] sm:$0xf]
      %v264 = vld [vmem:[%s227 + $0x5c] sm:$0xf]
      %v265 = vld [vmem:[%s227 + $0x60] sm:$0xf]
      %v266 = vld [vmem:[%s227 + $0x64] sm:$0xf]
      %v267 = vld [vmem:[%s227 + $0x68] sm:$0xf]
      %v268 = vld [vmem:[%s227 + $0x6c] sm:$0xf]
      %v269 = vld [vmem:[%s227 + $0x70] sm:$0xf]
      %v270 = vld [vmem:[%s227 + $0x74] sm:$0xf]
      %v271 = vld [vmem:[%s227 + $0x78] sm:$0xf]
      %v272 = vld [vmem:[%s227 + $0x7c] sm:$0xf]
      %v273 = vunpack.c.l.bf16 %v241
      %v274 = vunpack.c.l.bf16 %v242
      %v275 = vunpack.c.l.bf16 %v243
      %v276 = vunpack.c.l.bf16 %v244
      %v277 = vunpack.c.l.bf16 %v245
      %v278 = vunpack.c.l.bf16 %v246
      %v279 = vunpack.c.l.bf16 %v247
      %v280 = vunpack.c.l.bf16 %v248
      %v281 = vunpack.c.l.bf16 %v249
      %v282 = vunpack.c.l.bf16 %v250
      %v283 = vunpack.c.l.bf16 %v251
      %v284 = vunpack.c.l.bf16 %v252
      %v285 = vunpack.c.l.bf16 %v253
      %v286 = vunpack.c.l.bf16 %v254
      %v287 = vunpack.c.l.bf16 %v255
      %v288 = vunpack.c.l.bf16 %v256
      %v289 = vunpack.c.l.bf16 %v257
      %v290 = vunpack.c.l.bf16 %v258
      %v291 = vunpack.c.l.bf16 %v259
      %v292 = vunpack.c.l.bf16 %v260
      %v293 = vunpack.c.l.bf16 %v261
      %v294 = vunpack.c.l.bf16 %v262
      %v295 = vunpack.c.l.bf16 %v263
      %v296 = vunpack.c.l.bf16 %v264
      %v297 = vunpack.c.l.bf16 %v265
      %v298 = vunpack.c.l.bf16 %v266
      %v299 = vunpack.c.l.bf16 %v267
      %v300 = vunpack.c.l.bf16 %v268
      %v301 = vunpack.c.l.bf16 %v269
      %v302 = vunpack.c.l.bf16 %v270
      %v303 = vunpack.c.l.bf16 %v271
      %v304 = vunpack.c.l.bf16 %v272
      %v306 = vlaneseq
      %v307 = vshrl.u32 %v306, 7
      %v308 = vsub.s32 0, %v307
      %v309 = vrot.slane %v240, %v308
      %v311 = vmul.f32 %v309, %v273
      %v312 = vmul.f32 %v309, %v274
      %v313 = vmul.f32 %v309, %v275
      %v314 = vmul.f32 %v309, %v276
      %v315 = vmul.f32 %v309, %v277
      %v316 = vmul.f32 %v309, %v278
      %v317 = vmul.f32 %v309, %v279
      %v318 = vmul.f32 %v309, %v280
      %v319 = vmul.f32 %v309, %v281
      %v320 = vmul.f32 %v309, %v282
      %v321 = vmul.f32 %v309, %v283
      %v322 = vmul.f32 %v309, %v284
      %v323 = vmul.f32 %v309, %v285
      %v324 = vmul.f32 %v309, %v286
      %v325 = vmul.f32 %v309, %v287
      %v326 = vmul.f32 %v309, %v288
      %v327 = vmul.f32 %v309, %v289
      %v328 = vmul.f32 %v309, %v290
      %v329 = vmul.f32 %v309, %v291
      %v330 = vmul.f32 %v309, %v292
      %v331 = vmul.f32 %v309, %v293
      %v332 = vmul.f32 %v309, %v294
      %v333 = vmul.f32 %v309, %v295
      %v334 = vmul.f32 %v309, %v296
      %v335 = vmul.f32 %v309, %v297
      %v336 = vmul.f32 %v309, %v298
      %v337 = vmul.f32 %v309, %v299
      %v338 = vmul.f32 %v309, %v300
      %v339 = vmul.f32 %v309, %v301
      %v340 = vmul.f32 %v309, %v302
      %v341 = vmul.f32 %v309, %v303
      %v342 = vmul.f32 %v309, %v304
      %v343 = vld [vmem:[%s3] sm:$0x1]
      %v345 = vlaneseq
      %v346 = vshrl.u32 %v345, 7
      %v347 = vsub.s32 0, %v346
      %v348 = vrot.slane %v343, %v347
      %v350 = vadd.f32 %v311, %v348
      %v351 = vadd.f32 %v312, %v348
      %v352 = vadd.f32 %v313, %v348
      %v353 = vadd.f32 %v314, %v348
      %v354 = vadd.f32 %v315, %v348
      %v355 = vadd.f32 %v316, %v348
      %v356 = vadd.f32 %v317, %v348
      %v357 = vadd.f32 %v318, %v348
      %v358 = vadd.f32 %v319, %v348
      %v359 = vadd.f32 %v320, %v348
      %v360 = vadd.f32 %v321, %v348
      %v361 = vadd.f32 %v322, %v348
      %v362 = vadd.f32 %v323, %v348
      %v363 = vadd.f32 %v324, %v348
      %v364 = vadd.f32 %v325, %v348
      %v365 = vadd.f32 %v326, %v348
      %v366 = vadd.f32 %v327, %v348
      %v367 = vadd.f32 %v328, %v348
      %v368 = vadd.f32 %v329, %v348
      %v369 = vadd.f32 %v330, %v348
      %v370 = vadd.f32 %v331, %v348
      %v371 = vadd.f32 %v332, %v348
      %v372 = vadd.f32 %v333, %v348
      %v373 = vadd.f32 %v334, %v348
      %v374 = vadd.f32 %v335, %v348
      %v375 = vadd.f32 %v336, %v348
      %v376 = vadd.f32 %v337, %v348
      %v377 = vadd.f32 %v338, %v348
      %v378 = vadd.f32 %v339, %v348
      %v379 = vadd.f32 %v340, %v348
      %v380 = vadd.f32 %v341, %v348
      %v381 = vadd.f32 %v342, %v348
      %v382 = vmax.f32 %v350, 0.0
      %v383 = vmax.f32 %v351, 0.0
      %v384 = vmax.f32 %v352, 0.0
      %v385 = vmax.f32 %v353, 0.0
      %v386 = vmax.f32 %v354, 0.0
      %v387 = vmax.f32 %v355, 0.0
      %v388 = vmax.f32 %v356, 0.0
      %v389 = vmax.f32 %v357, 0.0
      %v390 = vmax.f32 %v358, 0.0
      %v391 = vmax.f32 %v359, 0.0
      %v392 = vmax.f32 %v360, 0.0
      %v393 = vmax.f32 %v361, 0.0
      %v394 = vmax.f32 %v362, 0.0
      %v395 = vmax.f32 %v363, 0.0
      %v396 = vmax.f32 %v364, 0.0
      %v397 = vmax.f32 %v365, 0.0
      %v398 = vmax.f32 %v366, 0.0
      %v399 = vmax.f32 %v367, 0.0
      %v400 = vmax.f32 %v368, 0.0
      %v401 = vmax.f32 %v369, 0.0
      %v402 = vmax.f32 %v370, 0.0
      %v403 = vmax.f32 %v371, 0.0
      %v404 = vmax.f32 %v372, 0.0
      %v405 = vmax.f32 %v373, 0.0
      %v406 = vmax.f32 %v374, 0.0
      %v407 = vmax.f32 %v375, 0.0
      %v408 = vmax.f32 %v376, 0.0
      %v409 = vmax.f32 %v377, 0.0
      %v410 = vmax.f32 %v378, 0.0
      %v411 = vmax.f32 %v379, 0.0
      %v412 = vmax.f32 %v380, 0.0
      %v413 = vmax.f32 %v381, 0.0
      %v414 = vpack.c.bf16 %v383, %v382
      %v415 = vpack.c.bf16 %v385, %v384
      %v416 = vpack.c.bf16 %v387, %v386
      %v417 = vpack.c.bf16 %v389, %v388
      %v418 = vpack.c.bf16 %v391, %v390
      %v419 = vpack.c.bf16 %v393, %v392
      %v420 = vpack.c.bf16 %v395, %v394
      %v421 = vpack.c.bf16 %v397, %v396
      %v422 = vpack.c.bf16 %v399, %v398
      %v423 = vpack.c.bf16 %v401, %v400
      %v424 = vpack.c.bf16 %v403, %v402
      %v425 = vpack.c.bf16 %v405, %v404
      %v426 = vpack.c.bf16 %v407, %v406
      %v427 = vpack.c.bf16 %v409, %v408
      %v428 = vpack.c.bf16 %v411, %v410
      %v429 = vpack.c.bf16 %v413, %v412
      %v431 = vshrl.u32 0, 16
      %v433 = vrot.slane %v431, 7
      %v434 = vshll.u32 0, 16
      %v436 = vor.u32 %v433, %v434
      %v438 = vshrl.u32 %v414, 16
      %v440 = vrot.slane %v438, 7
      %v441 = vshll.u32 %v414, 16
      %v443 = vor.u32 %v440, %v441
      %v445 = vshrl.u32 %v415, 16
      %v447 = vrot.slane %v445, 7
      %v448 = vshll.u32 %v415, 16
      %v450 = vor.u32 %v447, %v448
      %v452 = vshrl.u32 %v416, 16
      %v454 = vrot.slane %v452, 7
      %v455 = vshll.u32 %v416, 16
      %v457 = vor.u32 %v454, %v455
      %v459 = vshrl.u32 %v417, 16
      %v461 = vrot.slane %v459, 7
      %v462 = vshll.u32 %v417, 16
      %v464 = vor.u32 %v461, %v462
      %v466 = vshrl.u32 %v418, 16
      %v468 = vrot.slane %v466, 7
      %v469 = vshll.u32 %v418, 16
      %v471 = vor.u32 %v468, %v469
      %v473 = vshrl.u32 %v419, 16
      %v475 = vrot.slane %v473, 7
      %v476 = vshll.u32 %v419, 16
      %v478 = vor.u32 %v475, %v476
      %v480 = vshrl.u32 %v420, 16
      %v482 = vrot.slane %v480, 7
      %v483 = vshll.u32 %v420, 16
      %v485 = vor.u32 %v482, %v483
      %v487 = vshrl.u32 %v421, 16
      %v489 = vrot.slane %v487, 7
      %v490 = vshll.u32 %v421, 16
      %v492 = vor.u32 %v489, %v490
      %v494 = vshrl.u32 %v422, 16
      %v496 = vrot.slane %v494, 7
      %v497 = vshll.u32 %v422, 16
      %v499 = vor.u32 %v496, %v497
      %v501 = vshrl.u32 %v423, 16
      %v503 = vrot.slane %v501, 7
      %v504 = vshll.u32 %v423, 16
      %v506 = vor.u32 %v503, %v504
      %v508 = vshrl.u32 %v424, 16
      %v510 = vrot.slane %v508, 7
      %v511 = vshll.u32 %v424, 16
      %v513 = vor.u32 %v510, %v511
      %v515 = vshrl.u32 %v425, 16
      %v517 = vrot.slane %v515, 7
      %v518 = vshll.u32 %v425, 16
      %v520 = vor.u32 %v517, %v518
      %v522 = vshrl.u32 %v426, 16
      %v524 = vrot.slane %v522, 7
      %v525 = vshll.u32 %v426, 16
      %v527 = vor.u32 %v524, %v525
      %v529 = vshrl.u32 %v427, 16
      %v531 = vrot.slane %v529, 7
      %v532 = vshll.u32 %v427, 16
      %v534 = vor.u32 %v531, %v532
      %v536 = vshrl.u32 %v428, 16
      %v538 = vrot.slane %v536, 7
      %v539 = vshll.u32 %v428, 16
      %v541 = vor.u32 %v538, %v539
      %v543 = vshrl.u32 %v429, 16
      %v545 = vrot.slane %v543, 7
      %v546 = vshll.u32 %v429, 16
      %v548 = vor.u32 %v545, %v546
      %vm583 = vcmask 1040384
      %vm584 = vsmask.f32 256
      %vm585 = vmand %vm583, %vm584
      %v586 = vsel %vm585, 0, %v436
      %v587 = vsel %vm585, 0, %v443
      %v588 = vsel %vm585, 0, %v450
      %v589 = vsel %vm585, 0, %v457
      %v590 = vsel %vm585, 0, %v464
      %v591 = vsel %vm585, 0, %v471
      %v592 = vsel %vm585, 0, %v478
      %v593 = vsel %vm585, 0, %v485
      %v594 = vsel %vm585, 0, %v492
      %v595 = vsel %vm585, 0, %v499
      %v596 = vsel %vm585, 0, %v506
      %v597 = vsel %vm585, 0, %v513
      %v598 = vsel %vm585, 0, %v520
      %v599 = vsel %vm585, 0, %v527
      %v600 = vsel %vm585, 0, %v534
      %v601 = vsel %vm585, 0, %v541
      %v602 = vsel %vm585, 0, %v548
      %v603 = vsel %vm585, %v433, 0
      %v604 = vsel %vm585, %v440, 0
      %v605 = vsel %vm585, %v447, 0
      %v606 = vsel %vm585, %v454, 0
      %v607 = vsel %vm585, %v461, 0
      %v608 = vsel %vm585, %v468, 0
      %v609 = vsel %vm585, %v475, 0
      %v610 = vsel %vm585, %v482, 0
      %v611 = vsel %vm585, %v489, 0
      %v612 = vsel %vm585, %v496, 0
      %v613 = vsel %vm585, %v503, 0
      %v614 = vsel %vm585, %v510, 0
      %v615 = vsel %vm585, %v517, 0
      %v616 = vsel %vm585, %v524, 0
      %v617 = vsel %vm585, %v531, 0
      %v618 = vsel %vm585, %v538, 0
      %v619 = vsel %vm585, %v545, 0
      %vm620 = vsmask.f32 7424
      %v622 = vshrl.u32 %v586, 16
      %v624 = vshll.u32 %v586, 16
      %v626 = vrot.slane %v624, 1
      %v627 = vor.u32 %v622, %v626
      %v629 = vshll.u32 %v603, 16
      %v631 = vrot.slane %v629, 1
      %v632 = vsel %vm620, %v627, %v631
      %v634 = vshrl.u32 %v587, 16
      %v636 = vshll.u32 %v587, 16
      %v638 = vrot.slane %v636, 1
      %v639 = vor.u32 %v634, %v638
      %v641 = vshll.u32 %v604, 16
      %v643 = vrot.slane %v641, 1
      %v644 = vsel %vm620, %v639, %v643
      %v646 = vshrl.u32 %v588, 16
      %v648 = vshll.u32 %v588, 16
      %v650 = vrot.slane %v648, 1
      %v651 = vor.u32 %v646, %v650
      %v653 = vshll.u32 %v605, 16
      %v655 = vrot.slane %v653, 1
      %v656 = vsel %vm620, %v651, %v655
      %v658 = vshrl.u32 %v589, 16
      %v660 = vshll.u32 %v589, 16
      %v662 = vrot.slane %v660, 1
      %v663 = vor.u32 %v658, %v662
      %v665 = vshll.u32 %v606, 16
      %v667 = vrot.slane %v665, 1
      %v668 = vsel %vm620, %v663, %v667
      %v670 = vshrl.u32 %v590, 16
      %v672 = vshll.u32 %v590, 16
      %v674 = vrot.slane %v672, 1
      %v675 = vor.u32 %v670, %v674
      %v677 = vshll.u32 %v607, 16
      %v679 = vrot.slane %v677, 1
      %v680 = vsel %vm620, %v675, %v679
      %v682 = vshrl.u32 %v591, 16
      %v684 = vshll.u32 %v591, 16
      %v686 = vrot.slane %v684, 1
      %v687 = vor.u32 %v682, %v686
      %v689 = vshll.u32 %v608, 16
      %v691 = vrot.slane %v689, 1
      %v692 = vsel %vm620, %v687, %v691
      %v694 = vshrl.u32 %v592, 16
      %v696 = vshll.u32 %v592, 16
      %v698 = vrot.slane %v696, 1
      %v699 = vor.u32 %v694, %v698
      %v701 = vshll.u32 %v609, 16
      %v703 = vrot.slane %v701, 1
      %v704 = vsel %vm620, %v699, %v703
      %v706 = vshrl.u32 %v593, 16
      %v708 = vshll.u32 %v593, 16
      %v710 = vrot.slane %v708, 1
      %v711 = vor.u32 %v706, %v710
      %v713 = vshll.u32 %v610, 16
      %v715 = vrot.slane %v713, 1
      %v716 = vsel %vm620, %v711, %v715
      %v718 = vshrl.u32 %v594, 16
      %v720 = vshll.u32 %v594, 16
      %v722 = vrot.slane %v720, 1
      %v723 = vor.u32 %v718, %v722
      %v725 = vshll.u32 %v611, 16
      %v727 = vrot.slane %v725, 1
      %v728 = vsel %vm620, %v723, %v727
      %v730 = vshrl.u32 %v595, 16
      %v732 = vshll.u32 %v595, 16
      %v734 = vrot.slane %v732, 1
      %v735 = vor.u32 %v730, %v734
      %v737 = vshll.u32 %v612, 16
      %v739 = vrot.slane %v737, 1
      %v740 = vsel %vm620, %v735, %v739
      %v742 = vshrl.u32 %v596, 16
      %v744 = vshll.u32 %v596, 16
      %v746 = vrot.slane %v744, 1
      %v747 = vor.u32 %v742, %v746
      %v749 = vshll.u32 %v613, 16
      %v751 = vrot.slane %v749, 1
      %v752 = vsel %vm620, %v747, %v751
      %v754 = vshrl.u32 %v597, 16
      %v756 = vshll.u32 %v597, 16
      %v758 = vrot.slane %v756, 1
      %v759 = vor.u32 %v754, %v758
      %v761 = vshll.u32 %v614, 16
      %v763 = vrot.slane %v761, 1
      %v764 = vsel %vm620, %v759, %v763
      %v766 = vshrl.u32 %v598, 16
      %v768 = vshll.u32 %v598, 16
      %v770 = vrot.slane %v768, 1
      %v771 = vor.u32 %v766, %v770
      %v773 = vshll.u32 %v615, 16
      %v775 = vrot.slane %v773, 1
      %v776 = vsel %vm620, %v771, %v775
      %v778 = vshrl.u32 %v599, 16
      %v780 = vshll.u32 %v599, 16
      %v782 = vrot.slane %v780, 1
      %v783 = vor.u32 %v778, %v782
      %v785 = vshll.u32 %v616, 16
      %v787 = vrot.slane %v785, 1
      %v788 = vsel %vm620, %v783, %v787
      %v790 = vshrl.u32 %v600, 16
      %v792 = vshll.u32 %v600, 16
      %v794 = vrot.slane %v792, 1
      %v795 = vor.u32 %v790, %v794
      %v797 = vshll.u32 %v617, 16
      %v799 = vrot.slane %v797, 1
      %v800 = vsel %vm620, %v795, %v799
      %v802 = vshrl.u32 %v601, 16
      %v804 = vshll.u32 %v601, 16
      %v806 = vrot.slane %v804, 1
      %v807 = vor.u32 %v802, %v806
      %v809 = vshll.u32 %v618, 16
      %v811 = vrot.slane %v809, 1
      %v812 = vsel %vm620, %v807, %v811
      %vm861 = vcmask 1046528
      %v862 = vrot.slane %v586, 1
      %v863 = vrot.slane %v603, 1
      %v864 = vsel %vm861, %v862, %v863
      %v865 = vrot.slane %v587, 1
      %v866 = vrot.slane %v604, 1
      %v867 = vsel %vm861, %v865, %v866
      %v868 = vrot.slane %v588, 1
      %v869 = vrot.slane %v605, 1
      %v870 = vsel %vm861, %v868, %v869
      %v871 = vrot.slane %v589, 1
      %v872 = vrot.slane %v606, 1
      %v873 = vsel %vm861, %v871, %v872
      %v874 = vrot.slane %v590, 1
      %v875 = vrot.slane %v607, 1
      %v876 = vsel %vm861, %v874, %v875
      %v877 = vrot.slane %v591, 1
      %v878 = vrot.slane %v608, 1
      %v879 = vsel %vm861, %v877, %v878
      %v880 = vrot.slane %v592, 1
      %v881 = vrot.slane %v609, 1
      %v882 = vsel %vm861, %v880, %v881
      %v883 = vrot.slane %v593, 1
      %v884 = vrot.slane %v610, 1
      %v885 = vsel %vm861, %v883, %v884
      %v886 = vrot.slane %v594, 1
      %v887 = vrot.slane %v611, 1
      %v888 = vsel %vm861, %v886, %v887
      %v889 = vrot.slane %v595, 1
      %v890 = vrot.slane %v612, 1
      %v891 = vsel %vm861, %v889, %v890
      %v892 = vrot.slane %v596, 1
      %v893 = vrot.slane %v613, 1
      %v894 = vsel %vm861, %v892, %v893
      %v895 = vrot.slane %v597, 1
      %v896 = vrot.slane %v614, 1
      %v897 = vsel %vm861, %v895, %v896
      %v898 = vrot.slane %v598, 1
      %v899 = vrot.slane %v615, 1
      %v900 = vsel %vm861, %v898, %v899
      %v901 = vrot.slane %v599, 1
      %v902 = vrot.slane %v616, 1
      %v903 = vsel %vm861, %v901, %v902
      %v904 = vrot.slane %v600, 1
      %v905 = vrot.slane %v617, 1
      %v906 = vsel %vm861, %v904, %v905
      %v907 = vrot.slane %v601, 1
      %v908 = vrot.slane %v618, 1
      %v909 = vsel %vm861, %v907, %v908
      %v926 = vld [vmem:[%s1] sm:$0xf]
      %v927 = vld [vmem:[%s1 + $0x4] sm:$0xf]
      %v928 = vld [vmem:[%s1 + $0x8] sm:$0xf]
      %v929 = vld [vmem:[%s1 + $0xc] sm:$0xf]
      %v930 = vld [vmem:[%s1 + $0x10] sm:$0xf]
      %v931 = vld [vmem:[%s1 + $0x14] sm:$0xf]
      %v932 = vld [vmem:[%s1 + $0x18] sm:$0xf]
      %v933 = vld [vmem:[%s1 + $0x1c] sm:$0xf]
      %v934 = vld [vmem:[%s1 + $0x20] sm:$0xf]
      %v935 = vld [vmem:[%s1 + $0x24] sm:$0xf]
      %v936 = vld [vmem:[%s1 + $0x28] sm:$0xf]
      %v937 = vld [vmem:[%s1 + $0x2c] sm:$0xf]
      %v938 = vld [vmem:[%s1 + $0x30] sm:$0xf]
      %v939 = vld [vmem:[%s1 + $0x34] sm:$0xf]
      %v940 = vld [vmem:[%s1 + $0x38] sm:$0xf]
      %v941 = vld [vmem:[%s1 + $0x3c] sm:$0xf]
      %v942 = vld [vmem:[%s1 + $0x40] sm:$0xf]
      %v943 = vld [vmem:[%s1 + $0x44] sm:$0xf]
      %v944 = vld [vmem:[%s1 + $0x48] sm:$0xf]
      %v945 = vld [vmem:[%s1 + $0x4c] sm:$0xf]
      %v946 = vld [vmem:[%s1 + $0x50] sm:$0xf]
      %v947 = vld [vmem:[%s1 + $0x54] sm:$0xf]
      %v948 = vld [vmem:[%s1 + $0x58] sm:$0xf]
      %v949 = vld [vmem:[%s1 + $0x5c] sm:$0xf]
      %v950 = vld [vmem:[%s1 + $0x60] sm:$0xf]
      %v951 = vld [vmem:[%s1 + $0x64] sm:$0xf]
      %v952 = vld [vmem:[%s1 + $0x68] sm:$0xf]
      %v953 = vld [vmem:[%s1 + $0x6c] sm:$0xf]
      %v954 = vld [vmem:[%s1 + $0x70] sm:$0xf]
      %v955 = vld [vmem:[%s1 + $0x74] sm:$0xf]
      %v956 = vld [vmem:[%s1 + $0x78] sm:$0xf]
      %v957 = vld [vmem:[%s1 + $0x7c] sm:$0xf]
      %v958 = vld [vmem:[%s1 + $0x80] sm:$0xf]
      %v959 = vld [vmem:[%s1 + $0x84] sm:$0xf]
      %v960 = vld [vmem:[%s1 + $0x88] sm:$0xf]
      %v961 = vld [vmem:[%s1 + $0x8c] sm:$0xf]
      %v962 = vld [vmem:[%s1 + $0x90] sm:$0xf]
      %v963 = vld [vmem:[%s1 + $0x94] sm:$0xf]
      %v964 = vld [vmem:[%s1 + $0x98] sm:$0xf]
      %v965 = vld [vmem:[%s1 + $0x9c] sm:$0xf]
      %v966 = vld [vmem:[%s1 + $0xa0] sm:$0xf]
      %v967 = vld [vmem:[%s1 + $0xa4] sm:$0xf]
      %v968 = vld [vmem:[%s1 + $0xa8] sm:$0xf]
      %v969 = vld [vmem:[%s1 + $0xac] sm:$0xf]
      %v970 = vld [vmem:[%s1 + $0xb0] sm:$0xf]
      %v971 = vld [vmem:[%s1 + $0xb4] sm:$0xf]
      %v972 = vld [vmem:[%s1 + $0xb8] sm:$0xf]
      %v973 = vld [vmem:[%s1 + $0xbc] sm:$0xf]
      %v975 = vshrl.u32 %v602, 16
      %v977 = vshll.u32 %v602, 16
      %v979 = vrot.slane %v977, 1
      %v980 = vor.u32 %v975, %v979
      %v982 = vshll.u32 %v619, 16
      %v984 = vrot.slane %v982, 1
      %v985 = vsel %vm620, %v980, %v984
      %v989 = vrot.slane %v602, 1
      %v990 = vrot.slane %v619, 1
      %v991 = vsel %vm861, %v989, %v990
      %s993 = scalar_lea.vmem %s1, 192
      %v994 = vld [vmem:[%s993] sm:$0xf]
      %v995 = vld [vmem:[%s993 + $0x4] sm:$0xf]
      %v996 = vld [vmem:[%s993 + $0x8] sm:$0xf]
      %v997 = vld [vmem:[%s993 + $0xc] sm:$0xf]
      %v998 = vld [vmem:[%s993 + $0x10] sm:$0xf]
      %v999 = vld [vmem:[%s993 + $0x14] sm:$0xf]
      %v1000 = vld [vmem:[%s993 + $0x18] sm:$0xf]
      %v1001 = vld [vmem:[%s993 + $0x1c] sm:$0xf]
      %v1002 = vld [vmem:[%s993 + $0x20] sm:$0xf]
      %v1003 = vld [vmem:[%s993 + $0x24] sm:$0xf]
      %v1004 = vld [vmem:[%s993 + $0x28] sm:$0xf]
      %v1005 = vld [vmem:[%s993 + $0x2c] sm:$0xf]
      %v1006 = vld [vmem:[%s993 + $0x30] sm:$0xf]
      %v1007 = vld [vmem:[%s993 + $0x34] sm:$0xf]
      %v1008 = vld [vmem:[%s993 + $0x38] sm:$0xf]
      %v1009 = vld [vmem:[%s993 + $0x3c] sm:$0xf]
      %v1010 = vld [vmem:[%s993 + $0x40] sm:$0xf]
      %v1011 = vld [vmem:[%s993 + $0x44] sm:$0xf]
      %v1012 = vld [vmem:[%s993 + $0x48] sm:$0xf]
      %v1013 = vld [vmem:[%s993 + $0x4c] sm:$0xf]
      %v1014 = vld [vmem:[%s993 + $0x50] sm:$0xf]
      %v1015 = vld [vmem:[%s993 + $0x54] sm:$0xf]
      %v1016 = vld [vmem:[%s993 + $0x58] sm:$0xf]
      %v1017 = vld [vmem:[%s993 + $0x5c] sm:$0xf]
      %v1018 = vld [vmem:[%s993 + $0x60] sm:$0xf]
      %v1019 = vld [vmem:[%s993 + $0x64] sm:$0xf]
      %v1020 = vld [vmem:[%s993 + $0x68] sm:$0xf]
      %v1021 = vld [vmem:[%s993 + $0x6c] sm:$0xf]
      %v1022 = vld [vmem:[%s993 + $0x70] sm:$0xf]
      %v1023 = vld [vmem:[%s993 + $0x74] sm:$0xf]
      %v1024 = vld [vmem:[%s993 + $0x78] sm:$0xf]
      %v1025 = vld [vmem:[%s993 + $0x7c] sm:$0xf]
      %v1026 = vld [vmem:[%s993 + $0x80] sm:$0xf]
      %v1027 = vld [vmem:[%s993 + $0x84] sm:$0xf]
      %v1028 = vld [vmem:[%s993 + $0x88] sm:$0xf]
      %v1029 = vld [vmem:[%s993 + $0x8c] sm:$0xf]
      %v1030 = vld [vmem:[%s993 + $0x90] sm:$0xf]
      %v1031 = vld [vmem:[%s993 + $0x94] sm:$0xf]
      %v1032 = vld [vmem:[%s993 + $0x98] sm:$0xf]
      %v1033 = vld [vmem:[%s993 + $0x9c] sm:$0xf]
      %v1034 = vld [vmem:[%s993 + $0xa0] sm:$0xf]
      %v1035 = vld [vmem:[%s993 + $0xa4] sm:$0xf]
      %v1036 = vld [vmem:[%s993 + $0xa8] sm:$0xf]
      %v1037 = vld [vmem:[%s993 + $0xac] sm:$0xf]
      %v1038 = vld [vmem:[%s993 + $0xb0] sm:$0xf]
      %v1039 = vld [vmem:[%s993 + $0xb4] sm:$0xf]
      %v1040 = vld [vmem:[%s993 + $0xb8] sm:$0xf]
      %v1041 = vld [vmem:[%s993 + $0xbc] sm:$0xf]
      %v1090 = vunpack.c.l.b16 %v994
      %v1091 = vunpack.c.l.b16 %v995
      %v1092 = vunpack.c.l.b16 %v996
      %v1093 = vunpack.c.l.b16 %v997
      %v1094 = vunpack.c.l.b16 %v998
      %v1095 = vunpack.c.l.b16 %v999
      %v1096 = vunpack.c.l.b16 %v1000
      %v1097 = vunpack.c.l.b16 %v1001
      %v1098 = vunpack.c.l.b16 %v1002
      %v1099 = vunpack.c.l.b16 %v1003
      %v1100 = vunpack.c.l.b16 %v1004
      %v1101 = vunpack.c.l.b16 %v1005
      %v1102 = vunpack.c.l.b16 %v1006
      %v1103 = vunpack.c.l.b16 %v1007
      %v1104 = vunpack.c.l.b16 %v1008
      %v1105 = vunpack.c.l.b16 %v1009
      %v1106 = vunpack.c.l.b16 %v1010
      %v1107 = vunpack.c.l.b16 %v1011
      %v1108 = vunpack.c.l.b16 %v1012
      %v1109 = vunpack.c.l.b16 %v1013
      %v1110 = vunpack.c.l.b16 %v1014
      %v1111 = vunpack.c.l.b16 %v1015
      %v1112 = vunpack.c.l.b16 %v1016
      %v1113 = vunpack.c.l.b16 %v1017
      %v1114 = vunpack.c.l.b16 %v1018
      %v1115 = vunpack.c.l.b16 %v1019
      %v1116 = vunpack.c.l.b16 %v1020
      %v1117 = vunpack.c.l.b16 %v1021
      %v1118 = vunpack.c.l.b16 %v1022
      %v1119 = vunpack.c.l.b16 %v1023
      %v1120 = vunpack.c.l.b16 %v1024
      %v1121 = vunpack.c.l.b16 %v1025
      %v1122 = vunpack.c.l.b16 %v1026
      %v1123 = vunpack.c.l.b16 %v1027
      %v1124 = vunpack.c.l.b16 %v1028
      %v1125 = vunpack.c.l.b16 %v1029
      %v1126 = vunpack.c.l.b16 %v1030
      %v1127 = vunpack.c.l.b16 %v1031
      %v1128 = vunpack.c.l.b16 %v1032
      %v1129 = vunpack.c.l.b16 %v1033
      %v1130 = vunpack.c.l.b16 %v1034
      %v1131 = vunpack.c.l.b16 %v1035
      %v1132 = vunpack.c.l.b16 %v1036
      %v1133 = vunpack.c.l.b16 %v1037
      %v1134 = vunpack.c.l.b16 %v1038
      %v1135 = vunpack.c.l.b16 %v1039
      %v1136 = vunpack.c.l.b16 %v1040
      %v1137 = vunpack.c.l.b16 %v1041
      %v1138 = vpack.c.b16 %v1091, %v1090
      %v1139 = vpack.c.b16 %v1093, %v1092
      %v1140 = vpack.c.b16 %v1095, %v1094
      %v1141 = vpack.c.b16 %v1097, %v1096
      %v1142 = vpack.c.b16 %v1099, %v1098
      %v1143 = vpack.c.b16 %v1101, %v1100
      %v1144 = vpack.c.b16 %v1103, %v1102
      %v1145 = vpack.c.b16 %v1105, %v1104
      %v1146 = vpack.c.b16 %v1107, %v1106
      %v1147 = vpack.c.b16 %v1109, %v1108
      %v1148 = vpack.c.b16 %v1111, %v1110
      %v1149 = vpack.c.b16 %v1113, %v1112
      %v1150 = vpack.c.b16 %v1115, %v1114
      %v1151 = vpack.c.b16 %v1117, %v1116
      %v1152 = vpack.c.b16 %v1119, %v1118
      %v1153 = vpack.c.b16 %v1121, %v1120
      %v1154 = vpack.c.b16 %v1123, %v1122
      %v1155 = vpack.c.b16 %v1125, %v1124
      %v1156 = vpack.c.b16 %v1127, %v1126
      %v1157 = vpack.c.b16 %v1129, %v1128
      %v1158 = vpack.c.b16 %v1131, %v1130
      %v1159 = vpack.c.b16 %v1133, %v1132
      %v1160 = vpack.c.b16 %v1135, %v1134
      %v1161 = vpack.c.b16 %v1137, %v1136
      %1186 = vmatprep.subr.bf16.mxu0 0
      %1187 = vmatpush1.bf16.msra.mxu0 %v1145
      %1188 = vmatprep.subr.bf16.mxu0 0
      %1189 = vmatpush1.bf16.msra.mxu0 %v1144
      %1190 = vmatprep.subr.bf16.mxu0 0
      %1191 = vmatpush1.bf16.msra.mxu0 %v1143
      %1192 = vmatprep.subr.bf16.mxu0 0
      %1193 = vmatpush1.bf16.msra.mxu0 %v1142
      %1194 = vmatprep.subr.bf16.mxu0 0
      %1195 = vmatpush1.bf16.msra.mxu0 %v1141
      %1196 = vmatprep.subr.bf16.mxu0 0
      %1197 = vmatpush1.bf16.msra.mxu0 %v1140
      %1198 = vmatprep.subr.bf16.mxu0 0
      %1199 = vmatpush1.bf16.msra.mxu0 %v1139
      %1200 = vmatprep.subr.bf16.mxu0 0
      %1201 = vmatpush1.bf16.msra.mxu0 %v1138
      %1202 = vmatprep.subr.bf16.mxu0 0
      %1203 = vmatpush2.bf16.msra.mxu0 %v1153
      %1204 = vmatprep.subr.bf16.mxu0 0
      %1205 = vmatpush2.bf16.msra.mxu0 %v1152
      %1206 = vmatprep.subr.bf16.mxu0 0
      %1207 = vmatpush2.bf16.msra.mxu0 %v1151
      %1208 = vmatprep.subr.bf16.mxu0 0
      %1209 = vmatpush2.bf16.msra.mxu0 %v1150
      %1210 = vmatprep.subr.bf16.mxu0 0
      %1211 = vmatpush2.bf16.msra.mxu0 %v1149
      %1212 = vmatprep.subr.bf16.mxu0 0
      %1213 = vmatpush2.bf16.msra.mxu0 %v1148
      %1214 = vmatprep.subr.bf16.mxu0 0
      %1215 = vmatpush2.bf16.msra.mxu0 %v1147
      %1216 = vmatprep.subr.bf16.mxu0 0
      %1217 = vmatpush2.bf16.msra.mxu0 %v1146
      %1218 = vmatprep.mubr.bf16.mxu0 %v644
      %1219 = vmatmul.mubr.bf16.gmra.mxu0 %v587
      %v1220 = vpop.f32.mrf.mxu0
      %v1221 = vadd.f32 0.0, %v1220
      %v1222 = vpop.f32.mrf.mxu0
      %v1223 = vpop.f32.mrf.mxu0
      %v1224 = vadd.f32 0.0, %v1223
      %v1225 = vpop.f32.mrf.mxu0
      %1226 = vmatprep.mubr.bf16.mxu0 %v656
      %1227 = vmatmul.mubr.bf16.gmra.mxu0 %v588
      %v1228 = vpop.f32.mrf.mxu0
      %v1229 = vadd.f32 0.0, %v1228
      %v1230 = vpop.f32.mrf.mxu0
      %v1231 = vpop.f32.mrf.mxu0
      %v1232 = vadd.f32 0.0, %v1231
      %v1233 = vpop.f32.mrf.mxu0
      %1234 = vmatprep.mubr.bf16.mxu0 %v668
      %1235 = vmatmul.mubr.bf16.gmra.mxu0 %v589
      %v1236 = vpop.f32.mrf.mxu0
      %v1237 = vadd.f32 0.0, %v1236
      %v1238 = vpop.f32.mrf.mxu0
      %v1239 = vpop.f32.mrf.mxu0
      %v1240 = vadd.f32 0.0, %v1239
      %v1241 = vpop.f32.mrf.mxu0
      %1242 = vmatprep.mubr.bf16.mxu0 %v680
      %1243 = vmatmul.mubr.bf16.gmra.mxu0 %v590
      %v1244 = vpop.f32.mrf.mxu0
      %v1245 = vadd.f32 0.0, %v1244
      %v1246 = vpop.f32.mrf.mxu0
      %v1247 = vpop.f32.mrf.mxu0
      %v1248 = vadd.f32 0.0, %v1247
      %v1249 = vpop.f32.mrf.mxu0
      %1250 = vmatprep.mubr.bf16.mxu0 %v692
      %1251 = vmatmul.mubr.bf16.gmra.mxu0 %v591
      %v1252 = vpop.f32.mrf.mxu0
      %v1253 = vadd.f32 0.0, %v1252
      %v1254 = vpop.f32.mrf.mxu0
      %v1255 = vpop.f32.mrf.mxu0
      %v1256 = vadd.f32 0.0, %v1255
      %v1257 = vpop.f32.mrf.mxu0
      %1258 = vmatprep.mubr.bf16.mxu0 %v704
      %1259 = vmatmul.mubr.bf16.gmra.mxu0 %v592
      %v1260 = vpop.f32.mrf.mxu0
      %v1261 = vadd.f32 0.0, %v1260
      %v1262 = vpop.f32.mrf.mxu0
      %v1263 = vpop.f32.mrf.mxu0
      %v1264 = vadd.f32 0.0, %v1263
      %v1265 = vpop.f32.mrf.mxu0
      %1266 = vmatprep.mubr.bf16.mxu0 %v716
      %1267 = vmatmul.mubr.bf16.gmra.mxu0 %v593
      %v1268 = vpop.f32.mrf.mxu0
      %v1269 = vadd.f32 0.0, %v1268
      %v1270 = vpop.f32.mrf.mxu0
      %v1271 = vpop.f32.mrf.mxu0
      %v1272 = vadd.f32 0.0, %v1271
      %v1273 = vpop.f32.mrf.mxu0
      %1274 = vmatprep.mubr.bf16.mxu0 %v728
      %1275 = vmatmul.mubr.bf16.gmra.mxu0 %v594
      %v1276 = vpop.f32.mrf.mxu0
      %v1277 = vadd.f32 0.0, %v1276
      %v1278 = vpop.f32.mrf.mxu0
      %v1279 = vpop.f32.mrf.mxu0
      %v1280 = vadd.f32 0.0, %v1279
      %v1281 = vpop.f32.mrf.mxu0
      %1282 = vmatprep.mubr.bf16.mxu0 %v740
      %1283 = vmatmul.mubr.bf16.gmra.mxu0 %v595
      %v1284 = vpop.f32.mrf.mxu0
      %v1285 = vadd.f32 0.0, %v1284
      %v1286 = vpop.f32.mrf.mxu0
      %v1287 = vpop.f32.mrf.mxu0
      %v1288 = vadd.f32 0.0, %v1287
      %v1289 = vpop.f32.mrf.mxu0
      %1290 = vmatprep.mubr.bf16.mxu0 %v752
      %1291 = vmatmul.mubr.bf16.gmra.mxu0 %v596
      %v1292 = vpop.f32.mrf.mxu0
      %v1293 = vadd.f32 0.0, %v1292
      %v1294 = vpop.f32.mrf.mxu0
      %v1295 = vpop.f32.mrf.mxu0
      %v1296 = vadd.f32 0.0, %v1295
      %v1297 = vpop.f32.mrf.mxu0
      %1298 = vmatprep.mubr.bf16.mxu0 %v764
      %1299 = vmatmul.mubr.bf16.gmra.mxu0 %v597
      %v1300 = vpop.f32.mrf.mxu0
      %v1301 = vadd.f32 0.0, %v1300
      %v1302 = vpop.f32.mrf.mxu0
      %v1303 = vpop.f32.mrf.mxu0
      %v1304 = vadd.f32 0.0, %v1303
      %v1305 = vpop.f32.mrf.mxu0
      %1306 = vmatprep.mubr.bf16.mxu0 %v776
      %1307 = vmatmul.mubr.bf16.gmra.mxu0 %v598
      %v1308 = vpop.f32.mrf.mxu0
      %v1309 = vadd.f32 0.0, %v1308
      %v1310 = vpop.f32.mrf.mxu0
      %v1311 = vpop.f32.mrf.mxu0
      %v1312 = vadd.f32 0.0, %v1311
      %v1313 = vpop.f32.mrf.mxu0
      %1314 = vmatprep.mubr.bf16.mxu0 %v788
      %1315 = vmatmul.mubr.bf16.gmra.mxu0 %v599
      %v1316 = vpop.f32.mrf.mxu0
      %v1317 = vadd.f32 0.0, %v1316
      %v1318 = vpop.f32.mrf.mxu0
      %v1319 = vpop.f32.mrf.mxu0
      %v1320 = vadd.f32 0.0, %v1319
      %v1321 = vpop.f32.mrf.mxu0
      %1322 = vmatprep.mubr.bf16.mxu0 %v800
      %1323 = vmatmul.mubr.bf16.gmra.mxu0 %v600
      %v1324 = vpop.f32.mrf.mxu0
      %v1325 = vadd.f32 0.0, %v1324
      %v1326 = vpop.f32.mrf.mxu0
      %v1327 = vpop.f32.mrf.mxu0
      %v1328 = vadd.f32 0.0, %v1327
      %v1329 = vpop.f32.mrf.mxu0
      %1330 = vmatprep.mubr.bf16.mxu0 %v812
      %1331 = vmatmul.mubr.bf16.gmra.mxu0 %v601
      %v1332 = vpop.f32.mrf.mxu0
      %v1333 = vadd.f32 0.0, %v1332
      %v1334 = vpop.f32.mrf.mxu0
      %v1335 = vpop.f32.mrf.mxu0
      %v1336 = vadd.f32 0.0, %v1335
      %v1337 = vpop.f32.mrf.mxu0
      %1338 = vmatprep.mubr.bf16.mxu0 %v985
      %1339 = vmatmul.mubr.bf16.gmra.mxu0 %v602
      %v1340 = vpop.f32.mrf.mxu0
      %v1341 = vadd.f32 0.0, %v1340
      %v1342 = vpop.f32.mrf.mxu0
      %v1343 = vpop.f32.mrf.mxu0
      %v1344 = vadd.f32 0.0, %v1343
      %v1345 = vpop.f32.mrf.mxu0
      %1346 = vdwg.mxu0
      %1347 = vmatprep.subr.bf16.mxu0 0
      %1348 = vmatpush1.bf16.msra.mxu0 %v1161
      %1349 = vmatprep.subr.bf16.mxu0 0
      %1350 = vmatpush1.bf16.msra.mxu0 %v1160
      %1351 = vmatprep.subr.bf16.mxu0 0
      %1352 = vmatpush1.bf16.msra.mxu0 %v1159
      %1353 = vmatprep.subr.bf16.mxu0 0
      %1354 = vmatpush1.bf16.msra.mxu0 %v1158
      %1355 = vmatprep.subr.bf16.mxu0 0
      %1356 = vmatpush1.bf16.msra.mxu0 %v1157
      %1357 = vmatprep.subr.bf16.mxu0 0
      %1358 = vmatpush1.bf16.msra.mxu0 %v1156
      %1359 = vmatprep.subr.bf16.mxu0 0
      %1360 = vmatpush1.bf16.msra.mxu0 %v1155
      %1361 = vmatprep.subr.bf16.mxu0 0
      %1362 = vmatpush1.bf16.msra.mxu0 %v1154
      %1363 = vmatprep.subr.bf16.mxu0 0
      %1364 = vmatpush2.bf16.msra.mxu0 0
      %1365 = vmatprep.subr.bf16.mxu0 0
      %1366 = vmatpush2.bf16.msra.mxu0 0
      %1367 = vmatprep.subr.bf16.mxu0 0
      %1368 = vmatpush2.bf16.msra.mxu0 0
      %1369 = vmatprep.subr.bf16.mxu0 0
      %1370 = vmatpush2.bf16.msra.mxu0 0
      %1371 = vmatprep.subr.bf16.mxu0 0
      %1372 = vmatpush2.bf16.msra.mxu0 0
      %1373 = vmatprep.subr.bf16.mxu0 0
      %1374 = vmatpush2.bf16.msra.mxu0 0
      %1375 = vmatprep.subr.bf16.mxu0 0
      %1376 = vmatpush2.bf16.msra.mxu0 0
      %1377 = vmatprep.subr.bf16.mxu0 0
      %1378 = vmatpush2.bf16.msra.mxu0 0
      %1379 = vmatprep.mubr.bf16.mxu0 0
      %1380 = vmatmul.mubr.bf16.gmra.mxu0 %v867
      %v1381 = vpop.f32.mrf.mxu0
      %v1382 = vadd.f32 %v1221, %v1381
      %v1383 = vpop.f32.mrf.mxu0
      %v1384 = vpop.f32.mrf.mxu0
      %v1385 = vadd.f32 %v1224, %v1384
      %v1386 = vpop.f32.mrf.mxu0
      %1387 = vmatprep.mubr.bf16.mxu0 0
      %1388 = vmatmul.mubr.bf16.gmra.mxu0 %v870
      %v1389 = vpop.f32.mrf.mxu0
      %v1390 = vadd.f32 %v1229, %v1389
      %v1391 = vpop.f32.mrf.mxu0
      %v1392 = vpop.f32.mrf.mxu0
      %v1393 = vadd.f32 %v1232, %v1392
      %v1394 = vpop.f32.mrf.mxu0
      %1395 = vmatprep.mubr.bf16.mxu0 0
      %1396 = vmatmul.mubr.bf16.gmra.mxu0 %v873
      %v1397 = vpop.f32.mrf.mxu0
      %v1398 = vadd.f32 %v1237, %v1397
      %v1399 = vpop.f32.mrf.mxu0
      %v1400 = vpop.f32.mrf.mxu0
      %v1401 = vadd.f32 %v1240, %v1400
      %v1402 = vpop.f32.mrf.mxu0
      %1403 = vmatprep.mubr.bf16.mxu0 0
      %1404 = vmatmul.mubr.bf16.gmra.mxu0 %v876
      %v1405 = vpop.f32.mrf.mxu0
      %v1406 = vadd.f32 %v1245, %v1405
      %v1407 = vpop.f32.mrf.mxu0
      %v1408 = vpop.f32.mrf.mxu0
      %v1409 = vadd.f32 %v1248, %v1408
      %v1410 = vpop.f32.mrf.mxu0
      %1411 = vmatprep.mubr.bf16.mxu0 0
      %1412 = vmatmul.mubr.bf16.gmra.mxu0 %v879
      %v1413 = vpop.f32.mrf.mxu0
      %v1414 = vadd.f32 %v1253, %v1413
      %v1415 = vpop.f32.mrf.mxu0
      %v1416 = vpop.f32.mrf.mxu0
      %v1417 = vadd.f32 %v1256, %v1416
      %v1418 = vpop.f32.mrf.mxu0
      %1419 = vmatprep.mubr.bf16.mxu0 0
      %1420 = vmatmul.mubr.bf16.gmra.mxu0 %v882
      %v1421 = vpop.f32.mrf.mxu0
      %v1422 = vadd.f32 %v1261, %v1421
      %v1423 = vpop.f32.mrf.mxu0
      %v1424 = vpop.f32.mrf.mxu0
      %v1425 = vadd.f32 %v1264, %v1424
      %v1426 = vpop.f32.mrf.mxu0
      %1427 = vmatprep.mubr.bf16.mxu0 0
      %1428 = vmatmul.mubr.bf16.gmra.mxu0 %v885
      %v1429 = vpop.f32.mrf.mxu0
      %v1430 = vadd.f32 %v1269, %v1429
      %v1431 = vpop.f32.mrf.mxu0
      %v1432 = vpop.f32.mrf.mxu0
      %v1433 = vadd.f32 %v1272, %v1432
      %v1434 = vpop.f32.mrf.mxu0
      %1435 = vmatprep.mubr.bf16.mxu0 0
      %1436 = vmatmul.mubr.bf16.gmra.mxu0 %v888
      %v1437 = vpop.f32.mrf.mxu0
      %v1438 = vadd.f32 %v1277, %v1437
      %v1439 = vpop.f32.mrf.mxu0
      %v1440 = vpop.f32.mrf.mxu0
      %v1441 = vadd.f32 %v1280, %v1440
      %v1442 = vpop.f32.mrf.mxu0
      %1443 = vmatprep.mubr.bf16.mxu0 0
      %1444 = vmatmul.mubr.bf16.gmra.mxu0 %v891
      %v1445 = vpop.f32.mrf.mxu0
      %v1446 = vadd.f32 %v1285, %v1445
      %v1447 = vpop.f32.mrf.mxu0
      %v1448 = vpop.f32.mrf.mxu0
      %v1449 = vadd.f32 %v1288, %v1448
      %v1450 = vpop.f32.mrf.mxu0
      %1451 = vmatprep.mubr.bf16.mxu0 0
      %1452 = vmatmul.mubr.bf16.gmra.mxu0 %v894
      %v1453 = vpop.f32.mrf.mxu0
      %v1454 = vadd.f32 %v1293, %v1453
      %v1455 = vpop.f32.mrf.mxu0
      %v1456 = vpop.f32.mrf.mxu0
      %v1457 = vadd.f32 %v1296, %v1456
      %v1458 = vpop.f32.mrf.mxu0
      %1459 = vmatprep.mubr.bf16.mxu0 0
      %1460 = vmatmul.mubr.bf16.gmra.mxu0 %v897
      %v1461 = vpop.f32.mrf.mxu0
      %v1462 = vadd.f32 %v1301, %v1461
      %v1463 = vpop.f32.mrf.mxu0
      %v1464 = vpop.f32.mrf.mxu0
      %v1465 = vadd.f32 %v1304, %v1464
      %v1466 = vpop.f32.mrf.mxu0
      %1467 = vmatprep.mubr.bf16.mxu0 0
      %1468 = vmatmul.mubr.bf16.gmra.mxu0 %v900
      %v1469 = vpop.f32.mrf.mxu0
      %v1470 = vadd.f32 %v1309, %v1469
      %v1471 = vpop.f32.mrf.mxu0
      %v1472 = vpop.f32.mrf.mxu0
      %v1473 = vadd.f32 %v1312, %v1472
      %v1474 = vpop.f32.mrf.mxu0
      %1475 = vmatprep.mubr.bf16.mxu0 0
      %1476 = vmatmul.mubr.bf16.gmra.mxu0 %v903
      %v1477 = vpop.f32.mrf.mxu0
      %v1478 = vadd.f32 %v1317, %v1477
      %v1479 = vpop.f32.mrf.mxu0
      %v1480 = vpop.f32.mrf.mxu0
      %v1481 = vadd.f32 %v1320, %v1480
      %v1482 = vpop.f32.mrf.mxu0
      %1483 = vmatprep.mubr.bf16.mxu0 0
      %1484 = vmatmul.mubr.bf16.gmra.mxu0 %v906
      %v1485 = vpop.f32.mrf.mxu0
      %v1486 = vadd.f32 %v1325, %v1485
      %v1487 = vpop.f32.mrf.mxu0
      %v1488 = vpop.f32.mrf.mxu0
      %v1489 = vadd.f32 %v1328, %v1488
      %v1490 = vpop.f32.mrf.mxu0
      %1491 = vmatprep.mubr.bf16.mxu0 0
      %1492 = vmatmul.mubr.bf16.gmra.mxu0 %v909
      %v1493 = vpop.f32.mrf.mxu0
      %v1494 = vadd.f32 %v1333, %v1493
      %v1495 = vpop.f32.mrf.mxu0
      %v1496 = vpop.f32.mrf.mxu0
      %v1497 = vadd.f32 %v1336, %v1496
      %v1498 = vpop.f32.mrf.mxu0
      %1499 = vmatprep.mubr.bf16.mxu0 0
      %1500 = vmatmul.mubr.bf16.gmra.mxu0 %v991
      %v1501 = vpop.f32.mrf.mxu0
      %v1502 = vadd.f32 %v1341, %v1501
      %v1503 = vpop.f32.mrf.mxu0
      %v1504 = vpop.f32.mrf.mxu0
      %v1505 = vadd.f32 %v1344, %v1504
      %v1506 = vpop.f32.mrf.mxu0
      %1507 = vdwg.mxu0
      %v1556 = vunpack.c.l.b16 %v926
      %v1557 = vunpack.c.l.b16 %v927
      %v1558 = vunpack.c.l.b16 %v928
      %v1559 = vunpack.c.l.b16 %v929
      %v1560 = vunpack.c.l.b16 %v930
      %v1561 = vunpack.c.l.b16 %v931
      %v1562 = vunpack.c.l.b16 %v932
      %v1563 = vunpack.c.l.b16 %v933
      %v1564 = vunpack.c.l.b16 %v934
      %v1565 = vunpack.c.l.b16 %v935
      %v1566 = vunpack.c.l.b16 %v936
      %v1567 = vunpack.c.l.b16 %v937
      %v1568 = vunpack.c.l.b16 %v938
      %v1569 = vunpack.c.l.b16 %v939
      %v1570 = vunpack.c.l.b16 %v940
      %v1571 = vunpack.c.l.b16 %v941
      %v1572 = vunpack.c.l.b16 %v942
      %v1573 = vunpack.c.l.b16 %v943
      %v1574 = vunpack.c.l.b16 %v944
      %v1575 = vunpack.c.l.b16 %v945
      %v1576 = vunpack.c.l.b16 %v946
      %v1577 = vunpack.c.l.b16 %v947
      %v1578 = vunpack.c.l.b16 %v948
      %v1579 = vunpack.c.l.b16 %v949
      %v1580 = vunpack.c.l.b16 %v950
      %v1581 = vunpack.c.l.b16 %v951
      %v1582 = vunpack.c.l.b16 %v952
      %v1583 = vunpack.c.l.b16 %v953
      %v1584 = vunpack.c.l.b16 %v954
      %v1585 = vunpack.c.l.b16 %v955
      %v1586 = vunpack.c.l.b16 %v956
      %v1587 = vunpack.c.l.b16 %v957
      %v1588 = vunpack.c.l.b16 %v958
      %v1589 = vunpack.c.l.b16 %v959
      %v1590 = vunpack.c.l.b16 %v960
      %v1591 = vunpack.c.l.b16 %v961
      %v1592 = vunpack.c.l.b16 %v962
      %v1593 = vunpack.c.l.b16 %v963
      %v1594 = vunpack.c.l.b16 %v964
      %v1595 = vunpack.c.l.b16 %v965
      %v1596 = vunpack.c.l.b16 %v966
      %v1597 = vunpack.c.l.b16 %v967
      %v1598 = vunpack.c.l.b16 %v968
      %v1599 = vunpack.c.l.b16 %v969
      %v1600 = vunpack.c.l.b16 %v970
      %v1601 = vunpack.c.l.b16 %v971
      %v1602 = vunpack.c.l.b16 %v972
      %v1603 = vunpack.c.l.b16 %v973
      %v1604 = vpack.c.b16 %v1557, %v1556
      %v1605 = vpack.c.b16 %v1559, %v1558
      %v1606 = vpack.c.b16 %v1561, %v1560
      %v1607 = vpack.c.b16 %v1563, %v1562
      %v1608 = vpack.c.b16 %v1565, %v1564
      %v1609 = vpack.c.b16 %v1567, %v1566
      %v1610 = vpack.c.b16 %v1569, %v1568
      %v1611 = vpack.c.b16 %v1571, %v1570
      %v1612 = vpack.c.b16 %v1573, %v1572
      %v1613 = vpack.c.b16 %v1575, %v1574
      %v1614 = vpack.c.b16 %v1577, %v1576
      %v1615 = vpack.c.b16 %v1579, %v1578
      %v1616 = vpack.c.b16 %v1581, %v1580
      %v1617 = vpack.c.b16 %v1583, %v1582
      %v1618 = vpack.c.b16 %v1585, %v1584
      %v1619 = vpack.c.b16 %v1587, %v1586
      %v1620 = vpack.c.b16 %v1589, %v1588
      %v1621 = vpack.c.b16 %v1591, %v1590
      %v1622 = vpack.c.b16 %v1593, %v1592
      %v1623 = vpack.c.b16 %v1595, %v1594
      %v1624 = vpack.c.b16 %v1597, %v1596
      %v1625 = vpack.c.b16 %v1599, %v1598
      %v1626 = vpack.c.b16 %v1601, %v1600
      %v1627 = vpack.c.b16 %v1603, %v1602
      %1652 = vmatprep.subr.bf16.mxu0 0
      %1653 = vmatpush1.bf16.msra.mxu0 %v1611
      %1654 = vmatprep.subr.bf16.mxu0 0
      %1655 = vmatpush1.bf16.msra.mxu0 %v1610
      %1656 = vmatprep.subr.bf16.mxu0 0
      %1657 = vmatpush1.bf16.msra.mxu0 %v1609
      %1658 = vmatprep.subr.bf16.mxu0 0
      %1659 = vmatpush1.bf16.msra.mxu0 %v1608
      %1660 = vmatprep.subr.bf16.mxu0 0
      %1661 = vmatpush1.bf16.msra.mxu0 %v1607
      %1662 = vmatprep.subr.bf16.mxu0 0
      %1663 = vmatpush1.bf16.msra.mxu0 %v1606
      %1664 = vmatprep.subr.bf16.mxu0 0
      %1665 = vmatpush1.bf16.msra.mxu0 %v1605
      %1666 = vmatprep.subr.bf16.mxu0 0
      %1667 = vmatpush1.bf16.msra.mxu0 %v1604
      %1668 = vmatprep.subr.bf16.mxu0 0
      %1669 = vmatpush2.bf16.msra.mxu0 %v1619
      %1670 = vmatprep.subr.bf16.mxu0 0
      %1671 = vmatpush2.bf16.msra.mxu0 %v1618
      %1672 = vmatprep.subr.bf16.mxu0 0
      %1673 = vmatpush2.bf16.msra.mxu0 %v1617
      %1674 = vmatprep.subr.bf16.mxu0 0
      %1675 = vmatpush2.bf16.msra.mxu0 %v1616
      %1676 = vmatprep.subr.bf16.mxu0 0
      %1677 = vmatpush2.bf16.msra.mxu0 %v1615
      %1678 = vmatprep.subr.bf16.mxu0 0
      %1679 = vmatpush2.bf16.msra.mxu0 %v1614
      %1680 = vmatprep.subr.bf16.mxu0 0
      %1681 = vmatpush2.bf16.msra.mxu0 %v1613
      %1682 = vmatprep.subr.bf16.mxu0 0
      %1683 = vmatpush2.bf16.msra.mxu0 %v1612
      %1684 = vmatprep.mubr.bf16.mxu0 %v632
      %1685 = vmatmul.mubr.bf16.gmra.mxu0 %v586
      %v1686 = vpop.f32.mrf.mxu0
      %v1687 = vadd.f32 %v1382, %v1686
      %v1688 = vpop.f32.mrf.mxu0
      %v1689 = vpop.f32.mrf.mxu0
      %v1690 = vadd.f32 %v1385, %v1689
      %v1691 = vpop.f32.mrf.mxu0
      %1692 = vmatprep.mubr.bf16.mxu0 %v644
      %1693 = vmatmul.mubr.bf16.gmra.mxu0 %v587
      %v1694 = vpop.f32.mrf.mxu0
      %v1695 = vadd.f32 %v1390, %v1694
      %v1696 = vpop.f32.mrf.mxu0
      %v1697 = vpop.f32.mrf.mxu0
      %v1698 = vadd.f32 %v1393, %v1697
      %v1699 = vpop.f32.mrf.mxu0
      %1700 = vmatprep.mubr.bf16.mxu0 %v656
      %1701 = vmatmul.mubr.bf16.gmra.mxu0 %v588
      %v1702 = vpop.f32.mrf.mxu0
      %v1703 = vadd.f32 %v1398, %v1702
      %v1704 = vpop.f32.mrf.mxu0
      %v1705 = vpop.f32.mrf.mxu0
      %v1706 = vadd.f32 %v1401, %v1705
      %v1707 = vpop.f32.mrf.mxu0
      %1708 = vmatprep.mubr.bf16.mxu0 %v668
      %1709 = vmatmul.mubr.bf16.gmra.mxu0 %v589
      %v1710 = vpop.f32.mrf.mxu0
      %v1711 = vadd.f32 %v1406, %v1710
      %v1712 = vpop.f32.mrf.mxu0
      %v1713 = vpop.f32.mrf.mxu0
      %v1714 = vadd.f32 %v1409, %v1713
      %v1715 = vpop.f32.mrf.mxu0
      %1716 = vmatprep.mubr.bf16.mxu0 %v680
      %1717 = vmatmul.mubr.bf16.gmra.mxu0 %v590
      %v1718 = vpop.f32.mrf.mxu0
      %v1719 = vadd.f32 %v1414, %v1718
      %v1720 = vpop.f32.mrf.mxu0
      %v1721 = vpop.f32.mrf.mxu0
      %v1722 = vadd.f32 %v1417, %v1721
      %v1723 = vpop.f32.mrf.mxu0
      %1724 = vmatprep.mubr.bf16.mxu0 %v692
      %1725 = vmatmul.mubr.bf16.gmra.mxu0 %v591
      %v1726 = vpop.f32.mrf.mxu0
      %v1727 = vadd.f32 %v1422, %v1726
      %v1728 = vpop.f32.mrf.mxu0
      %v1729 = vpop.f32.mrf.mxu0
      %v1730 = vadd.f32 %v1425, %v1729
      %v1731 = vpop.f32.mrf.mxu0
      %1732 = vmatprep.mubr.bf16.mxu0 %v704
      %1733 = vmatmul.mubr.bf16.gmra.mxu0 %v592
      %v1734 = vpop.f32.mrf.mxu0
      %v1735 = vadd.f32 %v1430, %v1734
      %v1736 = vpop.f32.mrf.mxu0
      %v1737 = vpop.f32.mrf.mxu0
      %v1738 = vadd.f32 %v1433, %v1737
      %v1739 = vpop.f32.mrf.mxu0
      %1740 = vmatprep.mubr.bf16.mxu0 %v716
      %1741 = vmatmul.mubr.bf16.gmra.mxu0 %v593
      %v1742 = vpop.f32.mrf.mxu0
      %v1743 = vadd.f32 %v1438, %v1742
      %v1744 = vpop.f32.mrf.mxu0
      %v1745 = vpop.f32.mrf.mxu0
      %v1746 = vadd.f32 %v1441, %v1745
      %v1747 = vpop.f32.mrf.mxu0
      %1748 = vmatprep.mubr.bf16.mxu0 %v728
      %1749 = vmatmul.mubr.bf16.gmra.mxu0 %v594
      %v1750 = vpop.f32.mrf.mxu0
      %v1751 = vadd.f32 %v1446, %v1750
      %v1752 = vpop.f32.mrf.mxu0
      %v1753 = vpop.f32.mrf.mxu0
      %v1754 = vadd.f32 %v1449, %v1753
      %v1755 = vpop.f32.mrf.mxu0
      %1756 = vmatprep.mubr.bf16.mxu0 %v740
      %1757 = vmatmul.mubr.bf16.gmra.mxu0 %v595
      %v1758 = vpop.f32.mrf.mxu0
      %v1759 = vadd.f32 %v1454, %v1758
      %v1760 = vpop.f32.mrf.mxu0
      %v1761 = vpop.f32.mrf.mxu0
      %v1762 = vadd.f32 %v1457, %v1761
      %v1763 = vpop.f32.mrf.mxu0
      %1764 = vmatprep.mubr.bf16.mxu0 %v752
      %1765 = vmatmul.mubr.bf16.gmra.mxu0 %v596
      %v1766 = vpop.f32.mrf.mxu0
      %v1767 = vadd.f32 %v1462, %v1766
      %v1768 = vpop.f32.mrf.mxu0
      %v1769 = vpop.f32.mrf.mxu0
      %v1770 = vadd.f32 %v1465, %v1769
      %v1771 = vpop.f32.mrf.mxu0
      %1772 = vmatprep.mubr.bf16.mxu0 %v764
      %1773 = vmatmul.mubr.bf16.gmra.mxu0 %v597
      %v1774 = vpop.f32.mrf.mxu0
      %v1775 = vadd.f32 %v1470, %v1774
      %v1776 = vpop.f32.mrf.mxu0
      %v1777 = vpop.f32.mrf.mxu0
      %v1778 = vadd.f32 %v1473, %v1777
      %v1779 = vpop.f32.mrf.mxu0
      %1780 = vmatprep.mubr.bf16.mxu0 %v776
      %1781 = vmatmul.mubr.bf16.gmra.mxu0 %v598
      %v1782 = vpop.f32.mrf.mxu0
      %v1783 = vadd.f32 %v1478, %v1782
      %v1784 = vpop.f32.mrf.mxu0
      %v1785 = vpop.f32.mrf.mxu0
      %v1786 = vadd.f32 %v1481, %v1785
      %v1787 = vpop.f32.mrf.mxu0
      %1788 = vmatprep.mubr.bf16.mxu0 %v788
      %1789 = vmatmul.mubr.bf16.gmra.mxu0 %v599
      %v1790 = vpop.f32.mrf.mxu0
      %v1791 = vadd.f32 %v1486, %v1790
      %v1792 = vpop.f32.mrf.mxu0
      %v1793 = vpop.f32.mrf.mxu0
      %v1794 = vadd.f32 %v1489, %v1793
      %v1795 = vpop.f32.mrf.mxu0
      %1796 = vmatprep.mubr.bf16.mxu0 %v800
      %1797 = vmatmul.mubr.bf16.gmra.mxu0 %v600
      %v1798 = vpop.f32.mrf.mxu0
      %v1799 = vadd.f32 %v1494, %v1798
      %v1800 = vpop.f32.mrf.mxu0
      %v1801 = vpop.f32.mrf.mxu0
      %v1802 = vadd.f32 %v1497, %v1801
      %v1803 = vpop.f32.mrf.mxu0
      %1804 = vmatprep.mubr.bf16.mxu0 %v812
      %1805 = vmatmul.mubr.bf16.gmra.mxu0 %v601
      %v1806 = vpop.f32.mrf.mxu0
      %v1807 = vadd.f32 %v1502, %v1806
      %v1808 = vpop.f32.mrf.mxu0
      %v1809 = vpop.f32.mrf.mxu0
      %v1810 = vadd.f32 %v1505, %v1809
      %v1811 = vpop.f32.mrf.mxu0
      %1812 = vdwg.mxu0
      %1813 = vmatprep.subr.bf16.mxu0 0
      %1814 = vmatpush1.bf16.msra.mxu0 %v1627
      %1815 = vmatprep.subr.bf16.mxu0 0
      %1816 = vmatpush1.bf16.msra.mxu0 %v1626
      %1817 = vmatprep.subr.bf16.mxu0 0
      %1818 = vmatpush1.bf16.msra.mxu0 %v1625
      %1819 = vmatprep.subr.bf16.mxu0 0
      %1820 = vmatpush1.bf16.msra.mxu0 %v1624
      %1821 = vmatprep.subr.bf16.mxu0 0
      %1822 = vmatpush1.bf16.msra.mxu0 %v1623
      %1823 = vmatprep.subr.bf16.mxu0 0
      %1824 = vmatpush1.bf16.msra.mxu0 %v1622
      %1825 = vmatprep.subr.bf16.mxu0 0
      %1826 = vmatpush1.bf16.msra.mxu0 %v1621
      %1827 = vmatprep.subr.bf16.mxu0 0
      %1828 = vmatpush1.bf16.msra.mxu0 %v1620
      %1829 = vmatprep.subr.bf16.mxu0 0
      %1830 = vmatpush2.bf16.msra.mxu0 0
      %1831 = vmatprep.subr.bf16.mxu0 0
      %1832 = vmatpush2.bf16.msra.mxu0 0
      %1833 = vmatprep.subr.bf16.mxu0 0
      %1834 = vmatpush2.bf16.msra.mxu0 0
      %1835 = vmatprep.subr.bf16.mxu0 0
      %1836 = vmatpush2.bf16.msra.mxu0 0
      %1837 = vmatprep.subr.bf16.mxu0 0
      %1838 = vmatpush2.bf16.msra.mxu0 0
      %1839 = vmatprep.subr.bf16.mxu0 0
      %1840 = vmatpush2.bf16.msra.mxu0 0
      %1841 = vmatprep.subr.bf16.mxu0 0
      %1842 = vmatpush2.bf16.msra.mxu0 0
      %1843 = vmatprep.subr.bf16.mxu0 0
      %1844 = vmatpush2.bf16.msra.mxu0 0
      %1845 = vmatprep.mubr.bf16.mxu0 0
      %1846 = vmatmul.mubr.bf16.gmra.mxu0 %v864
      %v1847 = vpop.f32.mrf.mxu0
      %v1848 = vadd.f32 %v1687, %v1847
      %v1849 = vpop.f32.mrf.mxu0
      %v1850 = vpop.f32.mrf.mxu0
      %v1851 = vadd.f32 %v1690, %v1850
      %v1852 = vpop.f32.mrf.mxu0
      %1853 = vmatprep.mubr.bf16.mxu0 0
      %1854 = vmatmul.mubr.bf16.gmra.mxu0 %v867
      %v1855 = vpop.f32.mrf.mxu0
      %v1856 = vadd.f32 %v1695, %v1855
      %v1857 = vpop.f32.mrf.mxu0
      %v1858 = vpop.f32.mrf.mxu0
      %v1859 = vadd.f32 %v1698, %v1858
      %v1860 = vpop.f32.mrf.mxu0
      %1861 = vmatprep.mubr.bf16.mxu0 0
      %1862 = vmatmul.mubr.bf16.gmra.mxu0 %v870
      %v1863 = vpop.f32.mrf.mxu0
      %v1864 = vadd.f32 %v1703, %v1863
      %v1865 = vpop.f32.mrf.mxu0
      %v1866 = vpop.f32.mrf.mxu0
      %v1867 = vadd.f32 %v1706, %v1866
      %v1868 = vpop.f32.mrf.mxu0
      %1869 = vmatprep.mubr.bf16.mxu0 0
      %1870 = vmatmul.mubr.bf16.gmra.mxu0 %v873
      %v1871 = vpop.f32.mrf.mxu0
      %v1872 = vadd.f32 %v1711, %v1871
      %v1873 = vpop.f32.mrf.mxu0
      %v1874 = vpop.f32.mrf.mxu0
      %v1875 = vadd.f32 %v1714, %v1874
      %v1876 = vpop.f32.mrf.mxu0
      %1877 = vmatprep.mubr.bf16.mxu0 0
      %1878 = vmatmul.mubr.bf16.gmra.mxu0 %v876
      %v1879 = vpop.f32.mrf.mxu0
      %v1880 = vadd.f32 %v1719, %v1879
      %v1881 = vpop.f32.mrf.mxu0
      %v1882 = vpop.f32.mrf.mxu0
      %v1883 = vadd.f32 %v1722, %v1882
      %v1884 = vpop.f32.mrf.mxu0
      %1885 = vmatprep.mubr.bf16.mxu0 0
      %1886 = vmatmul.mubr.bf16.gmra.mxu0 %v879
      %v1887 = vpop.f32.mrf.mxu0
      %v1888 = vadd.f32 %v1727, %v1887
      %v1889 = vpop.f32.mrf.mxu0
      %v1890 = vpop.f32.mrf.mxu0
      %v1891 = vadd.f32 %v1730, %v1890
      %v1892 = vpop.f32.mrf.mxu0
      %1893 = vmatprep.mubr.bf16.mxu0 0
      %1894 = vmatmul.mubr.bf16.gmra.mxu0 %v882
      %v1895 = vpop.f32.mrf.mxu0
      %v1896 = vadd.f32 %v1735, %v1895
      %v1897 = vpop.f32.mrf.mxu0
      %v1898 = vpop.f32.mrf.mxu0
      %v1899 = vadd.f32 %v1738, %v1898
      %v1900 = vpop.f32.mrf.mxu0
      %1901 = vmatprep.mubr.bf16.mxu0 0
      %1902 = vmatmul.mubr.bf16.gmra.mxu0 %v885
      %v1903 = vpop.f32.mrf.mxu0
      %v1904 = vadd.f32 %v1743, %v1903
      %v1905 = vpop.f32.mrf.mxu0
      %v1906 = vpop.f32.mrf.mxu0
      %v1907 = vadd.f32 %v1746, %v1906
      %v1908 = vpop.f32.mrf.mxu0
      %1909 = vmatprep.mubr.bf16.mxu0 0
      %1910 = vmatmul.mubr.bf16.gmra.mxu0 %v888
      %v1911 = vpop.f32.mrf.mxu0
      %v1912 = vadd.f32 %v1751, %v1911
      %v1913 = vpop.f32.mrf.mxu0
      %v1914 = vpop.f32.mrf.mxu0
      %v1915 = vadd.f32 %v1754, %v1914
      %v1916 = vpop.f32.mrf.mxu0
      %1917 = vmatprep.mubr.bf16.mxu0 0
      %1918 = vmatmul.mubr.bf16.gmra.mxu0 %v891
      %v1919 = vpop.f32.mrf.mxu0
      %v1920 = vadd.f32 %v1759, %v1919
      %v1921 = vpop.f32.mrf.mxu0
      %v1922 = vpop.f32.mrf.mxu0
      %v1923 = vadd.f32 %v1762, %v1922
      %v1924 = vpop.f32.mrf.mxu0
      %1925 = vmatprep.mubr.bf16.mxu0 0
      %1926 = vmatmul.mubr.bf16.gmra.mxu0 %v894
      %v1927 = vpop.f32.mrf.mxu0
      %v1928 = vadd.f32 %v1767, %v1927
      %v1929 = vpop.f32.mrf.mxu0
      %v1930 = vpop.f32.mrf.mxu0
      %v1931 = vadd.f32 %v1770, %v1930
      %v1932 = vpop.f32.mrf.mxu0
      %1933 = vmatprep.mubr.bf16.mxu0 0
      %1934 = vmatmul.mubr.bf16.gmra.mxu0 %v897
      %v1935 = vpop.f32.mrf.mxu0
      %v1936 = vadd.f32 %v1775, %v1935
      %v1937 = vpop.f32.mrf.mxu0
      %v1938 = vpop.f32.mrf.mxu0
      %v1939 = vadd.f32 %v1778, %v1938
      %v1940 = vpop.f32.mrf.mxu0
      %1941 = vmatprep.mubr.bf16.mxu0 0
      %1942 = vmatmul.mubr.bf16.gmra.mxu0 %v900
      %v1943 = vpop.f32.mrf.mxu0
      %v1944 = vadd.f32 %v1783, %v1943
      %v1945 = vpop.f32.mrf.mxu0
      %v1946 = vpop.f32.mrf.mxu0
      %v1947 = vadd.f32 %v1786, %v1946
      %v1948 = vpop.f32.mrf.mxu0
      %1949 = vmatprep.mubr.bf16.mxu0 0
      %1950 = vmatmul.mubr.bf16.gmra.mxu0 %v903
      %v1951 = vpop.f32.mrf.mxu0
      %v1952 = vadd.f32 %v1791, %v1951
      %v1953 = vpop.f32.mrf.mxu0
      %v1954 = vpop.f32.mrf.mxu0
      %v1955 = vadd.f32 %v1794, %v1954
      %v1956 = vpop.f32.mrf.mxu0
      %1957 = vmatprep.mubr.bf16.mxu0 0
      %1958 = vmatmul.mubr.bf16.gmra.mxu0 %v906
      %v1959 = vpop.f32.mrf.mxu0
      %v1960 = vadd.f32 %v1799, %v1959
      %v1961 = vpop.f32.mrf.mxu0
      %v1962 = vpop.f32.mrf.mxu0
      %v1963 = vadd.f32 %v1802, %v1962
      %v1964 = vpop.f32.mrf.mxu0
      %1965 = vmatprep.mubr.bf16.mxu0 0
      %1966 = vmatmul.mubr.bf16.gmra.mxu0 %v909
      %v1967 = vpop.f32.mrf.mxu0
      %v1968 = vadd.f32 %v1807, %v1967
      %v1969 = vpop.f32.mrf.mxu0
      %v1970 = vpop.f32.mrf.mxu0
      %v1971 = vadd.f32 %v1810, %v1970
      %v1972 = vpop.f32.mrf.mxu0
      %1973 = vdwg.mxu0
      %s1974 = scalar_lea.vmem %s1, 384
      %v1975 = vld [vmem:[%s1974] sm:$0xf]
      %v1976 = vld [vmem:[%s1974 + $0x4] sm:$0xf]
      %v1977 = vld [vmem:[%s1974 + $0x8] sm:$0xf]
      %v1978 = vld [vmem:[%s1974 + $0xc] sm:$0xf]
      %v1979 = vld [vmem:[%s1974 + $0x10] sm:$0xf]
      %v1980 = vld [vmem:[%s1974 + $0x14] sm:$0xf]
      %v1981 = vld [vmem:[%s1974 + $0x18] sm:$0xf]
      %v1982 = vld [vmem:[%s1974 + $0x1c] sm:$0xf]
      %v1983 = vld [vmem:[%s1974 + $0x20] sm:$0xf]
      %v1984 = vld [vmem:[%s1974 + $0x24] sm:$0xf]
      %v1985 = vld [vmem:[%s1974 + $0x28] sm:$0xf]
      %v1986 = vld [vmem:[%s1974 + $0x2c] sm:$0xf]
      %v1987 = vld [vmem:[%s1974 + $0x30] sm:$0xf]
      %v1988 = vld [vmem:[%s1974 + $0x34] sm:$0xf]
      %v1989 = vld [vmem:[%s1974 + $0x38] sm:$0xf]
      %v1990 = vld [vmem:[%s1974 + $0x3c] sm:$0xf]
      %v1991 = vld [vmem:[%s1974 + $0x40] sm:$0xf]
      %v1992 = vld [vmem:[%s1974 + $0x44] sm:$0xf]
      %v1993 = vld [vmem:[%s1974 + $0x48] sm:$0xf]
      %v1994 = vld [vmem:[%s1974 + $0x4c] sm:$0xf]
      %v1995 = vld [vmem:[%s1974 + $0x50] sm:$0xf]
      %v1996 = vld [vmem:[%s1974 + $0x54] sm:$0xf]
      %v1997 = vld [vmem:[%s1974 + $0x58] sm:$0xf]
      %v1998 = vld [vmem:[%s1974 + $0x5c] sm:$0xf]
      %v1999 = vld [vmem:[%s1974 + $0x60] sm:$0xf]
      %v2000 = vld [vmem:[%s1974 + $0x64] sm:$0xf]
      %v2001 = vld [vmem:[%s1974 + $0x68] sm:$0xf]
      %v2002 = vld [vmem:[%s1974 + $0x6c] sm:$0xf]
      %v2003 = vld [vmem:[%s1974 + $0x70] sm:$0xf]
      %v2004 = vld [vmem:[%s1974 + $0x74] sm:$0xf]
      %v2005 = vld [vmem:[%s1974 + $0x78] sm:$0xf]
      %v2006 = vld [vmem:[%s1974 + $0x7c] sm:$0xf]
      %v2007 = vld [vmem:[%s1974 + $0x80] sm:$0xf]
      %v2008 = vld [vmem:[%s1974 + $0x84] sm:$0xf]
      %v2009 = vld [vmem:[%s1974 + $0x88] sm:$0xf]
      %v2010 = vld [vmem:[%s1974 + $0x8c] sm:$0xf]
      %v2011 = vld [vmem:[%s1974 + $0x90] sm:$0xf]
      %v2012 = vld [vmem:[%s1974 + $0x94] sm:$0xf]
      %v2013 = vld [vmem:[%s1974 + $0x98] sm:$0xf]
      %v2014 = vld [vmem:[%s1974 + $0x9c] sm:$0xf]
      %v2015 = vld [vmem:[%s1974 + $0xa0] sm:$0xf]
      %v2016 = vld [vmem:[%s1974 + $0xa4] sm:$0xf]
      %v2017 = vld [vmem:[%s1974 + $0xa8] sm:$0xf]
      %v2018 = vld [vmem:[%s1974 + $0xac] sm:$0xf]
      %v2019 = vld [vmem:[%s1974 + $0xb0] sm:$0xf]
      %v2020 = vld [vmem:[%s1974 + $0xb4] sm:$0xf]
      %v2021 = vld [vmem:[%s1974 + $0xb8] sm:$0xf]
      %v2022 = vld [vmem:[%s1974 + $0xbc] sm:$0xf]
      %v2071 = vunpack.c.l.b16 %v1975
      %v2072 = vunpack.c.l.b16 %v1976
      %v2073 = vunpack.c.l.b16 %v1977
      %v2074 = vunpack.c.l.b16 %v1978
      %v2075 = vunpack.c.l.b16 %v1979
      %v2076 = vunpack.c.l.b16 %v1980
      %v2077 = vunpack.c.l.b16 %v1981
      %v2078 = vunpack.c.l.b16 %v1982
      %v2079 = vunpack.c.l.b16 %v1983
      %v2080 = vunpack.c.l.b16 %v1984
      %v2081 = vunpack.c.l.b16 %v1985
      %v2082 = vunpack.c.l.b16 %v1986
      %v2083 = vunpack.c.l.b16 %v1987
      %v2084 = vunpack.c.l.b16 %v1988
      %v2085 = vunpack.c.l.b16 %v1989
      %v2086 = vunpack.c.l.b16 %v1990
      %v2087 = vunpack.c.l.b16 %v1991
      %v2088 = vunpack.c.l.b16 %v1992
      %v2089 = vunpack.c.l.b16 %v1993
      %v2090 = vunpack.c.l.b16 %v1994
      %v2091 = vunpack.c.l.b16 %v1995
      %v2092 = vunpack.c.l.b16 %v1996
      %v2093 = vunpack.c.l.b16 %v1997
      %v2094 = vunpack.c.l.b16 %v1998
      %v2095 = vunpack.c.l.b16 %v1999
      %v2096 = vunpack.c.l.b16 %v2000
      %v2097 = vunpack.c.l.b16 %v2001
      %v2098 = vunpack.c.l.b16 %v2002
      %v2099 = vunpack.c.l.b16 %v2003
      %v2100 = vunpack.c.l.b16 %v2004
      %v2101 = vunpack.c.l.b16 %v2005
      %v2102 = vunpack.c.l.b16 %v2006
      %v2103 = vunpack.c.l.b16 %v2007
      %v2104 = vunpack.c.l.b16 %v2008
      %v2105 = vunpack.c.l.b16 %v2009
      %v2106 = vunpack.c.l.b16 %v2010
      %v2107 = vunpack.c.l.b16 %v2011
      %v2108 = vunpack.c.l.b16 %v2012
      %v2109 = vunpack.c.l.b16 %v2013
      %v2110 = vunpack.c.l.b16 %v2014
      %v2111 = vunpack.c.l.b16 %v2015
      %v2112 = vunpack.c.l.b16 %v2016
      %v2113 = vunpack.c.l.b16 %v2017
      %v2114 = vunpack.c.l.b16 %v2018
      %v2115 = vunpack.c.l.b16 %v2019
      %v2116 = vunpack.c.l.b16 %v2020
      %v2117 = vunpack.c.l.b16 %v2021
      %v2118 = vunpack.c.l.b16 %v2022
      %v2119 = vpack.c.b16 %v2072, %v2071
      %v2120 = vpack.c.b16 %v2074, %v2073
      %v2121 = vpack.c.b16 %v2076, %v2075
      %v2122 = vpack.c.b16 %v2078, %v2077
      %v2123 = vpack.c.b16 %v2080, %v2079
      %v2124 = vpack.c.b16 %v2082, %v2081
      %v2125 = vpack.c.b16 %v2084, %v2083
      %v2126 = vpack.c.b16 %v2086, %v2085
      %v2127 = vpack.c.b16 %v2088, %v2087
      %v2128 = vpack.c.b16 %v2090, %v2089
      %v2129 = vpack.c.b16 %v2092, %v2091
      %v2130 = vpack.c.b16 %v2094, %v2093
      %v2131 = vpack.c.b16 %v2096, %v2095
      %v2132 = vpack.c.b16 %v2098, %v2097
      %v2133 = vpack.c.b16 %v2100, %v2099
      %v2134 = vpack.c.b16 %v2102, %v2101
      %v2135 = vpack.c.b16 %v2104, %v2103
      %v2136 = vpack.c.b16 %v2106, %v2105
      %v2137 = vpack.c.b16 %v2108, %v2107
      %v2138 = vpack.c.b16 %v2110, %v2109
      %v2139 = vpack.c.b16 %v2112, %v2111
      %v2140 = vpack.c.b16 %v2114, %v2113
      %v2141 = vpack.c.b16 %v2116, %v2115
      %v2142 = vpack.c.b16 %v2118, %v2117
      %2167 = vmatprep.subr.bf16.mxu0 0
      %2168 = vmatpush1.bf16.msra.mxu0 %v2126
      %2169 = vmatprep.subr.bf16.mxu0 0
      %2170 = vmatpush1.bf16.msra.mxu0 %v2125
      %2171 = vmatprep.subr.bf16.mxu0 0
      %2172 = vmatpush1.bf16.msra.mxu0 %v2124
      %2173 = vmatprep.subr.bf16.mxu0 0
      %2174 = vmatpush1.bf16.msra.mxu0 %v2123
      %2175 = vmatprep.subr.bf16.mxu0 0
      %2176 = vmatpush1.bf16.msra.mxu0 %v2122
      %2177 = vmatprep.subr.bf16.mxu0 0
      %2178 = vmatpush1.bf16.msra.mxu0 %v2121
      %2179 = vmatprep.subr.bf16.mxu0 0
      %2180 = vmatpush1.bf16.msra.mxu0 %v2120
      %2181 = vmatprep.subr.bf16.mxu0 0
      %2182 = vmatpush1.bf16.msra.mxu0 %v2119
      %2183 = vmatprep.subr.bf16.mxu0 0
      %2184 = vmatpush2.bf16.msra.mxu0 %v2134
      %2185 = vmatprep.subr.bf16.mxu0 0
      %2186 = vmatpush2.bf16.msra.mxu0 %v2133
      %2187 = vmatprep.subr.bf16.mxu0 0
      %2188 = vmatpush2.bf16.msra.mxu0 %v2132
      %2189 = vmatprep.subr.bf16.mxu0 0
      %2190 = vmatpush2.bf16.msra.mxu0 %v2131
      %2191 = vmatprep.subr.bf16.mxu0 0
      %2192 = vmatpush2.bf16.msra.mxu0 %v2130
      %2193 = vmatprep.subr.bf16.mxu0 0
      %2194 = vmatpush2.bf16.msra.mxu0 %v2129
      %2195 = vmatprep.subr.bf16.mxu0 0
      %2196 = vmatpush2.bf16.msra.mxu0 %v2128
      %2197 = vmatprep.subr.bf16.mxu0 0
      %2198 = vmatpush2.bf16.msra.mxu0 %v2127
      %2199 = vmatprep.mubr.bf16.mxu0 %v656
      %2200 = vmatmul.mubr.bf16.gmra.mxu0 %v588
      %v2201 = vpop.f32.mrf.mxu0
      %v2202 = vadd.f32 0.0, %v2201
      %v2203 = vpop.f32.mrf.mxu0
      %v2204 = vpop.f32.mrf.mxu0
      %v2205 = vadd.f32 0.0, %v2204
      %v2206 = vpop.f32.mrf.mxu0
      %2207 = vmatprep.mubr.bf16.mxu0 %v668
      %2208 = vmatmul.mubr.bf16.gmra.mxu0 %v589
      %v2209 = vpop.f32.mrf.mxu0
      %v2210 = vadd.f32 0.0, %v2209
      %v2211 = vpop.f32.mrf.mxu0
      %v2212 = vpop.f32.mrf.mxu0
      %v2213 = vadd.f32 0.0, %v2212
      %v2214 = vpop.f32.mrf.mxu0
      %2215 = vmatprep.mubr.bf16.mxu0 %v680
      %2216 = vmatmul.mubr.bf16.gmra.mxu0 %v590
      %v2217 = vpop.f32.mrf.mxu0
      %v2218 = vadd.f32 0.0, %v2217
      %v2219 = vpop.f32.mrf.mxu0
      %v2220 = vpop.f32.mrf.mxu0
      %v2221 = vadd.f32 0.0, %v2220
      %v2222 = vpop.f32.mrf.mxu0
      %2223 = vmatprep.mubr.bf16.mxu0 %v692
      %2224 = vmatmul.mubr.bf16.gmra.mxu0 %v591
      %v2225 = vpop.f32.mrf.mxu0
      %v2226 = vadd.f32 0.0, %v2225
      %v2227 = vpop.f32.mrf.mxu0
      %v2228 = vpop.f32.mrf.mxu0
      %v2229 = vadd.f32 0.0, %v2228
      %v2230 = vpop.f32.mrf.mxu0
      %2231 = vmatprep.mubr.bf16.mxu0 %v704
      %2232 = vmatmul.mubr.bf16.gmra.mxu0 %v592
      %v2233 = vpop.f32.mrf.mxu0
      %v2234 = vadd.f32 0.0, %v2233
      %v2235 = vpop.f32.mrf.mxu0
      %v2236 = vpop.f32.mrf.mxu0
      %v2237 = vadd.f32 0.0, %v2236
      %v2238 = vpop.f32.mrf.mxu0
      %2239 = vmatprep.mubr.bf16.mxu0 %v716
      %2240 = vmatmul.mubr.bf16.gmra.mxu0 %v593
      %v2241 = vpop.f32.mrf.mxu0
      %v2242 = vadd.f32 0.0, %v2241
      %v2243 = vpop.f32.mrf.mxu0
      %v2244 = vpop.f32.mrf.mxu0
      %v2245 = vadd.f32 0.0, %v2244
      %v2246 = vpop.f32.mrf.mxu0
      %2247 = vmatprep.mubr.bf16.mxu0 %v728
      %2248 = vmatmul.mubr.bf16.gmra.mxu0 %v594
      %v2249 = vpop.f32.mrf.mxu0
      %v2250 = vadd.f32 0.0, %v2249
      %v2251 = vpop.f32.mrf.mxu0
      %v2252 = vpop.f32.mrf.mxu0
      %v2253 = vadd.f32 0.0, %v2252
      %v2254 = vpop.f32.mrf.mxu0
      %2255 = vmatprep.mubr.bf16.mxu0 %v740
      %2256 = vmatmul.mubr.bf16.gmra.mxu0 %v595
      %v2257 = vpop.f32.mrf.mxu0
      %v2258 = vadd.f32 0.0, %v2257
      %v2259 = vpop.f32.mrf.mxu0
      %v2260 = vpop.f32.mrf.mxu0
      %v2261 = vadd.f32 0.0, %v2260
      %v2262 = vpop.f32.mrf.mxu0
      %2263 = vmatprep.mubr.bf16.mxu0 %v752
      %2264 = vmatmul.mubr.bf16.gmra.mxu0 %v596
      %v2265 = vpop.f32.mrf.mxu0
      %v2266 = vadd.f32 0.0, %v2265
      %v2267 = vpop.f32.mrf.mxu0
      %v2268 = vpop.f32.mrf.mxu0
      %v2269 = vadd.f32 0.0, %v2268
      %v2270 = vpop.f32.mrf.mxu0
      %2271 = vmatprep.mubr.bf16.mxu0 %v764
      %2272 = vmatmul.mubr.bf16.gmra.mxu0 %v597
      %v2273 = vpop.f32.mrf.mxu0
      %v2274 = vadd.f32 0.0, %v2273
      %v2275 = vpop.f32.mrf.mxu0
      %v2276 = vpop.f32.mrf.mxu0
      %v2277 = vadd.f32 0.0, %v2276
      %v2278 = vpop.f32.mrf.mxu0
      %2279 = vmatprep.mubr.bf16.mxu0 %v776
      %2280 = vmatmul.mubr.bf16.gmra.mxu0 %v598
      %v2281 = vpop.f32.mrf.mxu0
      %v2282 = vadd.f32 0.0, %v2281
      %v2283 = vpop.f32.mrf.mxu0
      %v2284 = vpop.f32.mrf.mxu0
      %v2285 = vadd.f32 0.0, %v2284
      %v2286 = vpop.f32.mrf.mxu0
      %2287 = vmatprep.mubr.bf16.mxu0 %v788
      %2288 = vmatmul.mubr.bf16.gmra.mxu0 %v599
      %v2289 = vpop.f32.mrf.mxu0
      %v2290 = vadd.f32 0.0, %v2289
      %v2291 = vpop.f32.mrf.mxu0
      %v2292 = vpop.f32.mrf.mxu0
      %v2293 = vadd.f32 0.0, %v2292
      %v2294 = vpop.f32.mrf.mxu0
      %2295 = vmatprep.mubr.bf16.mxu0 %v800
      %2296 = vmatmul.mubr.bf16.gmra.mxu0 %v600
      %v2297 = vpop.f32.mrf.mxu0
      %v2298 = vadd.f32 0.0, %v2297
      %v2299 = vpop.f32.mrf.mxu0
      %v2300 = vpop.f32.mrf.mxu0
      %v2301 = vadd.f32 0.0, %v2300
      %v2302 = vpop.f32.mrf.mxu0
      %2303 = vmatprep.mubr.bf16.mxu0 %v812
      %2304 = vmatmul.mubr.bf16.gmra.mxu0 %v601
      %v2305 = vpop.f32.mrf.mxu0
      %v2306 = vadd.f32 0.0, %v2305
      %v2307 = vpop.f32.mrf.mxu0
      %v2308 = vpop.f32.mrf.mxu0
      %v2309 = vadd.f32 0.0, %v2308
      %v2310 = vpop.f32.mrf.mxu0
      %2311 = vmatprep.mubr.bf16.mxu0 %v985
      %2312 = vmatmul.mubr.bf16.gmra.mxu0 %v602
      %v2313 = vpop.f32.mrf.mxu0
      %v2314 = vadd.f32 0.0, %v2313
      %v2315 = vpop.f32.mrf.mxu0
      %v2316 = vpop.f32.mrf.mxu0
      %v2317 = vadd.f32 0.0, %v2316
      %v2318 = vpop.f32.mrf.mxu0
      %2319 = vmatprep.mubr.bf16.mxu0 %v632
      %2320 = vmatmul.mubr.bf16.gmra.mxu0 %v586
      %v2321 = vpop.f32.mrf.mxu0
      %v2322 = vadd.f32 0.0, %v2321
      %v2323 = vpop.f32.mrf.mxu0
      %v2324 = vpop.f32.mrf.mxu0
      %v2325 = vadd.f32 0.0, %v2324
      %v2326 = vpop.f32.mrf.mxu0
      %2327 = vdwg.mxu0
      %2328 = vmatprep.subr.bf16.mxu0 0
      %2329 = vmatpush1.bf16.msra.mxu0 %v2142
      %2330 = vmatprep.subr.bf16.mxu0 0
      %2331 = vmatpush1.bf16.msra.mxu0 %v2141
      %2332 = vmatprep.subr.bf16.mxu0 0
      %2333 = vmatpush1.bf16.msra.mxu0 %v2140
      %2334 = vmatprep.subr.bf16.mxu0 0
      %2335 = vmatpush1.bf16.msra.mxu0 %v2139
      %2336 = vmatprep.subr.bf16.mxu0 0
      %2337 = vmatpush1.bf16.msra.mxu0 %v2138
      %2338 = vmatprep.subr.bf16.mxu0 0
      %2339 = vmatpush1.bf16.msra.mxu0 %v2137
      %2340 = vmatprep.subr.bf16.mxu0 0
      %2341 = vmatpush1.bf16.msra.mxu0 %v2136
      %2342 = vmatprep.subr.bf16.mxu0 0
      %2343 = vmatpush1.bf16.msra.mxu0 %v2135
      %2344 = vmatprep.subr.bf16.mxu0 0
      %2345 = vmatpush2.bf16.msra.mxu0 0
      %2346 = vmatprep.subr.bf16.mxu0 0
      %2347 = vmatpush2.bf16.msra.mxu0 0
      %2348 = vmatprep.subr.bf16.mxu0 0
      %2349 = vmatpush2.bf16.msra.mxu0 0
      %2350 = vmatprep.subr.bf16.mxu0 0
      %2351 = vmatpush2.bf16.msra.mxu0 0
      %2352 = vmatprep.subr.bf16.mxu0 0
      %2353 = vmatpush2.bf16.msra.mxu0 0
      %2354 = vmatprep.subr.bf16.mxu0 0
      %2355 = vmatpush2.bf16.msra.mxu0 0
      %2356 = vmatprep.subr.bf16.mxu0 0
      %2357 = vmatpush2.bf16.msra.mxu0 0
      %2358 = vmatprep.subr.bf16.mxu0 0
      %2359 = vmatpush2.bf16.msra.mxu0 0
      %2360 = vmatprep.mubr.bf16.mxu0 0
      %2361 = vmatmul.mubr.bf16.gmra.mxu0 %v870
      %v2362 = vpop.f32.mrf.mxu0
      %v2363 = vadd.f32 %v2202, %v2362
      %v2364 = vpop.f32.mrf.mxu0
      %v2365 = vpop.f32.mrf.mxu0
      %v2366 = vadd.f32 %v2205, %v2365
      %v2367 = vpop.f32.mrf.mxu0
      %2368 = vmatprep.mubr.bf16.mxu0 0
      %2369 = vmatmul.mubr.bf16.gmra.mxu0 %v873
      %v2370 = vpop.f32.mrf.mxu0
      %v2371 = vadd.f32 %v2210, %v2370
      %v2372 = vpop.f32.mrf.mxu0
      %v2373 = vpop.f32.mrf.mxu0
      %v2374 = vadd.f32 %v2213, %v2373
      %v2375 = vpop.f32.mrf.mxu0
      %2376 = vmatprep.mubr.bf16.mxu0 0
      %2377 = vmatmul.mubr.bf16.gmra.mxu0 %v876
      %v2378 = vpop.f32.mrf.mxu0
      %v2379 = vadd.f32 %v2218, %v2378
      %v2380 = vpop.f32.mrf.mxu0
      %v2381 = vpop.f32.mrf.mxu0
      %v2382 = vadd.f32 %v2221, %v2381
      %v2383 = vpop.f32.mrf.mxu0
      %2384 = vmatprep.mubr.bf16.mxu0 0
      %2385 = vmatmul.mubr.bf16.gmra.mxu0 %v879
      %v2386 = vpop.f32.mrf.mxu0
      %v2387 = vadd.f32 %v2226, %v2386
      %v2388 = vpop.f32.mrf.mxu0
      %v2389 = vpop.f32.mrf.mxu0
      %v2390 = vadd.f32 %v2229, %v2389
      %v2391 = vpop.f32.mrf.mxu0
      %2392 = vmatprep.mubr.bf16.mxu0 0
      %2393 = vmatmul.mubr.bf16.gmra.mxu0 %v882
      %v2394 = vpop.f32.mrf.mxu0
      %v2395 = vadd.f32 %v2234, %v2394
      %v2396 = vpop.f32.mrf.mxu0
      %v2397 = vpop.f32.mrf.mxu0
      %v2398 = vadd.f32 %v2237, %v2397
      %v2399 = vpop.f32.mrf.mxu0
      %2400 = vmatprep.mubr.bf16.mxu0 0
      %2401 = vmatmul.mubr.bf16.gmra.mxu0 %v885
      %v2402 = vpop.f32.mrf.mxu0
      %v2403 = vadd.f32 %v2242, %v2402
      %v2404 = vpop.f32.mrf.mxu0
      %v2405 = vpop.f32.mrf.mxu0
      %v2406 = vadd.f32 %v2245, %v2405
      %v2407 = vpop.f32.mrf.mxu0
      %2408 = vmatprep.mubr.bf16.mxu0 0
      %2409 = vmatmul.mubr.bf16.gmra.mxu0 %v888
      %v2410 = vpop.f32.mrf.mxu0
      %v2411 = vadd.f32 %v2250, %v2410
      %v2412 = vpop.f32.mrf.mxu0
      %v2413 = vpop.f32.mrf.mxu0
      %v2414 = vadd.f32 %v2253, %v2413
      %v2415 = vpop.f32.mrf.mxu0
      %2416 = vmatprep.mubr.bf16.mxu0 0
      %2417 = vmatmul.mubr.bf16.gmra.mxu0 %v891
      %v2418 = vpop.f32.mrf.mxu0
      %v2419 = vadd.f32 %v2258, %v2418
      %v2420 = vpop.f32.mrf.mxu0
      %v2421 = vpop.f32.mrf.mxu0
      %v2422 = vadd.f32 %v2261, %v2421
      %v2423 = vpop.f32.mrf.mxu0
      %2424 = vmatprep.mubr.bf16.mxu0 0
      %2425 = vmatmul.mubr.bf16.gmra.mxu0 %v894
      %v2426 = vpop.f32.mrf.mxu0
      %v2427 = vadd.f32 %v2266, %v2426
      %v2428 = vpop.f32.mrf.mxu0
      %v2429 = vpop.f32.mrf.mxu0
      %v2430 = vadd.f32 %v2269, %v2429
      %v2431 = vpop.f32.mrf.mxu0
      %2432 = vmatprep.mubr.bf16.mxu0 0
      %2433 = vmatmul.mubr.bf16.gmra.mxu0 %v897
      %v2434 = vpop.f32.mrf.mxu0
      %v2435 = vadd.f32 %v2274, %v2434
      %v2436 = vpop.f32.mrf.mxu0
      %v2437 = vpop.f32.mrf.mxu0
      %v2438 = vadd.f32 %v2277, %v2437
      %v2439 = vpop.f32.mrf.mxu0
      %2440 = vmatprep.mubr.bf16.mxu0 0
      %2441 = vmatmul.mubr.bf16.gmra.mxu0 %v900
      %v2442 = vpop.f32.mrf.mxu0
      %v2443 = vadd.f32 %v2282, %v2442
      %v2444 = vpop.f32.mrf.mxu0
      %v2445 = vpop.f32.mrf.mxu0
      %v2446 = vadd.f32 %v2285, %v2445
      %v2447 = vpop.f32.mrf.mxu0
      %2448 = vmatprep.mubr.bf16.mxu0 0
      %2449 = vmatmul.mubr.bf16.gmra.mxu0 %v903
      %v2450 = vpop.f32.mrf.mxu0
      %v2451 = vadd.f32 %v2290, %v2450
      %v2452 = vpop.f32.mrf.mxu0
      %v2453 = vpop.f32.mrf.mxu0
      %v2454 = vadd.f32 %v2293, %v2453
      %v2455 = vpop.f32.mrf.mxu0
      %2456 = vmatprep.mubr.bf16.mxu0 0
      %2457 = vmatmul.mubr.bf16.gmra.mxu0 %v906
      %v2458 = vpop.f32.mrf.mxu0
      %v2459 = vadd.f32 %v2298, %v2458
      %v2460 = vpop.f32.mrf.mxu0
      %v2461 = vpop.f32.mrf.mxu0
      %v2462 = vadd.f32 %v2301, %v2461
      %v2463 = vpop.f32.mrf.mxu0
      %2464 = vmatprep.mubr.bf16.mxu0 0
      %2465 = vmatmul.mubr.bf16.gmra.mxu0 %v909
      %v2466 = vpop.f32.mrf.mxu0
      %v2467 = vadd.f32 %v2306, %v2466
      %v2468 = vpop.f32.mrf.mxu0
      %v2469 = vpop.f32.mrf.mxu0
      %v2470 = vadd.f32 %v2309, %v2469
      %v2471 = vpop.f32.mrf.mxu0
      %2472 = vmatprep.mubr.bf16.mxu0 0
      %2473 = vmatmul.mubr.bf16.gmra.mxu0 %v991
      %v2474 = vpop.f32.mrf.mxu0
      %v2475 = vadd.f32 %v2314, %v2474
      %v2476 = vpop.f32.mrf.mxu0
      %v2477 = vpop.f32.mrf.mxu0
      %v2478 = vadd.f32 %v2317, %v2477
      %v2479 = vpop.f32.mrf.mxu0
      %2480 = vmatprep.mubr.bf16.mxu0 0
      %2481 = vmatmul.mubr.bf16.gmra.mxu0 %v864
      %v2482 = vpop.f32.mrf.mxu0
      %v2483 = vadd.f32 %v2322, %v2482
      %v2484 = vpop.f32.mrf.mxu0
      %v2485 = vpop.f32.mrf.mxu0
      %v2486 = vadd.f32 %v2325, %v2485
      %v2487 = vpop.f32.mrf.mxu0
      %2488 = vdwg.mxu0
      %v2489 = vadd.f32 %v1848, %v2363
      %v2490 = vadd.f32 %v1851, %v2366
      %v2491 = vadd.f32 %v1856, %v2371
      %v2492 = vadd.f32 %v1859, %v2374
      %v2493 = vadd.f32 %v1864, %v2379
      %v2494 = vadd.f32 %v1867, %v2382
      %v2495 = vadd.f32 %v1872, %v2387
      %v2496 = vadd.f32 %v1875, %v2390
      %v2497 = vadd.f32 %v1880, %v2395
      %v2498 = vadd.f32 %v1883, %v2398
      %v2499 = vadd.f32 %v1888, %v2403
      %v2500 = vadd.f32 %v1891, %v2406
      %v2501 = vadd.f32 %v1896, %v2411
      %v2502 = vadd.f32 %v1899, %v2414
      %v2503 = vadd.f32 %v1904, %v2419
      %v2504 = vadd.f32 %v1907, %v2422
      %v2505 = vadd.f32 %v1912, %v2427
      %v2506 = vadd.f32 %v1915, %v2430
      %v2507 = vadd.f32 %v1920, %v2435
      %v2508 = vadd.f32 %v1923, %v2438
      %v2509 = vadd.f32 %v1928, %v2443
      %v2510 = vadd.f32 %v1931, %v2446
      %v2511 = vadd.f32 %v1936, %v2451
      %v2512 = vadd.f32 %v1939, %v2454
      %v2513 = vadd.f32 %v1944, %v2459
      %v2514 = vadd.f32 %v1947, %v2462
      %v2515 = vadd.f32 %v1952, %v2467
      %v2516 = vadd.f32 %v1955, %v2470
      %v2517 = vadd.f32 %v1960, %v2475
      %v2518 = vadd.f32 %v1963, %v2478
      %v2519 = vadd.f32 %v1968, %v2483
      %v2520 = vadd.f32 %v1971, %v2486
      %v2521 = vpack.c.bf16 %v2490, %v2489
      %v2522 = vpack.c.bf16 %v2492, %v2491
      %v2523 = vpack.c.bf16 %v2494, %v2493
      %v2524 = vpack.c.bf16 %v2496, %v2495
      %v2525 = vpack.c.bf16 %v2498, %v2497
      %v2526 = vpack.c.bf16 %v2500, %v2499
      %v2527 = vpack.c.bf16 %v2502, %v2501
      %v2528 = vpack.c.bf16 %v2504, %v2503
      %v2529 = vpack.c.bf16 %v2506, %v2505
      %v2530 = vpack.c.bf16 %v2508, %v2507
      %v2531 = vpack.c.bf16 %v2510, %v2509
      %v2532 = vpack.c.bf16 %v2512, %v2511
      %v2533 = vpack.c.bf16 %v2514, %v2513
      %v2534 = vpack.c.bf16 %v2516, %v2515
      %v2535 = vpack.c.bf16 %v2518, %v2517
      %v2536 = vpack.c.bf16 %v2520, %v2519
      %v2553 = vunpack.c.l.b16 %v2521
      %v2554 = vunpack.c.h.b16 %v2521
      %v2555 = vunpack.c.l.b16 %v2522
      %v2556 = vunpack.c.h.b16 %v2522
      %v2557 = vunpack.c.l.b16 %v2523
      %v2558 = vunpack.c.h.b16 %v2523
      %v2559 = vunpack.c.l.b16 %v2524
      %v2560 = vunpack.c.h.b16 %v2524
      %v2561 = vunpack.c.l.b16 %v2525
      %v2562 = vunpack.c.h.b16 %v2525
      %v2563 = vunpack.c.l.b16 %v2526
      %v2564 = vunpack.c.h.b16 %v2526
      %v2565 = vunpack.c.l.b16 %v2527
      %v2566 = vunpack.c.h.b16 %v2527
      %v2567 = vunpack.c.l.b16 %v2528
      %v2568 = vunpack.c.h.b16 %v2528
      %v2569 = vunpack.c.l.b16 %v2529
      %v2570 = vunpack.c.h.b16 %v2529
      %v2571 = vunpack.c.l.b16 %v2530
      %v2572 = vunpack.c.h.b16 %v2530
      %v2573 = vunpack.c.l.b16 %v2531
      %v2574 = vunpack.c.h.b16 %v2531
      %v2575 = vunpack.c.l.b16 %v2532
      %v2576 = vunpack.c.h.b16 %v2532
      %v2577 = vunpack.c.l.b16 %v2533
      %v2578 = vunpack.c.h.b16 %v2533
      %v2579 = vunpack.c.l.b16 %v2534
      %v2580 = vunpack.c.h.b16 %v2534
      %v2581 = vunpack.c.l.b16 %v2535
      %v2582 = vunpack.c.h.b16 %v2535
      %v2583 = vunpack.c.l.b16 %v2536
      %v2584 = vunpack.c.h.b16 %v2536
      %v2585 = vpack.c.b16 %v2553, %v2553
      %v2586 = vpack.c.b16 %v2554, %v2554
      %v2587 = vpack.c.b16 %v2555, %v2555
      %v2588 = vpack.c.b16 %v2556, %v2556
      %v2589 = vpack.c.b16 %v2557, %v2557
      %v2590 = vpack.c.b16 %v2558, %v2558
      %v2591 = vpack.c.b16 %v2559, %v2559
      %v2592 = vpack.c.b16 %v2560, %v2560
      %v2593 = vpack.c.b16 %v2561, %v2561
      %v2594 = vpack.c.b16 %v2562, %v2562
      %v2595 = vpack.c.b16 %v2563, %v2563
      %v2596 = vpack.c.b16 %v2564, %v2564
      %v2597 = vpack.c.b16 %v2565, %v2565
      %v2598 = vpack.c.b16 %v2566, %v2566
      %v2599 = vpack.c.b16 %v2567, %v2567
      %v2600 = vpack.c.b16 %v2568, %v2568
      %v2601 = vpack.c.b16 %v2569, %v2569
      %v2602 = vpack.c.b16 %v2570, %v2570
      %v2603 = vpack.c.b16 %v2571, %v2571
      %v2604 = vpack.c.b16 %v2572, %v2572
      %v2605 = vpack.c.b16 %v2573, %v2573
      %v2606 = vpack.c.b16 %v2574, %v2574
      %v2607 = vpack.c.b16 %v2575, %v2575
      %v2608 = vpack.c.b16 %v2576, %v2576
      %v2609 = vpack.c.b16 %v2577, %v2577
      %v2610 = vpack.c.b16 %v2578, %v2578
      %v2611 = vpack.c.b16 %v2579, %v2579
      %v2612 = vpack.c.b16 %v2580, %v2580
      %v2613 = vpack.c.b16 %v2581, %v2581
      %v2614 = vpack.c.b16 %v2582, %v2582
      %v2615 = vpack.c.b16 %v2583, %v2583
      %v2616 = vpack.c.b16 %v2584, %v2584
      %2649 = vst [vmem:[%s233] sm:$0xf] %v2585
      %2650 = vst [vmem:[%s233 + $0x4] sm:$0xf] %v2586
      %2651 = vst [vmem:[%s233 + $0x8] sm:$0xf] %v2587
      %2652 = vst [vmem:[%s233 + $0xc] sm:$0xf] %v2588
      %2653 = vst [vmem:[%s233 + $0x10] sm:$0xf] %v2589
      %2654 = vst [vmem:[%s233 + $0x14] sm:$0xf] %v2590
      %2655 = vst [vmem:[%s233 + $0x18] sm:$0xf] %v2591
      %2656 = vst [vmem:[%s233 + $0x1c] sm:$0xf] %v2592
      %2657 = vst [vmem:[%s233 + $0x20] sm:$0xf] %v2593
      %2658 = vst [vmem:[%s233 + $0x24] sm:$0xf] %v2594
      %2659 = vst [vmem:[%s233 + $0x28] sm:$0xf] %v2595
      %2660 = vst [vmem:[%s233 + $0x2c] sm:$0xf] %v2596
      %2661 = vst [vmem:[%s233 + $0x30] sm:$0xf] %v2597
      %2662 = vst [vmem:[%s233 + $0x34] sm:$0xf] %v2598
      %2663 = vst [vmem:[%s233 + $0x38] sm:$0xf] %v2599
      %2664 = vst [vmem:[%s233 + $0x3c] sm:$0xf] %v2600
      %2665 = vst [vmem:[%s233 + $0x40] sm:$0xf] %v2601
      %2666 = vst [vmem:[%s233 + $0x44] sm:$0xf] %v2602
      %2667 = vst [vmem:[%s233 + $0x48] sm:$0xf] %v2603
      %2668 = vst [vmem:[%s233 + $0x4c] sm:$0xf] %v2604
      %2669 = vst [vmem:[%s233 + $0x50] sm:$0xf] %v2605
      %2670 = vst [vmem:[%s233 + $0x54] sm:$0xf] %v2606
      %2671 = vst [vmem:[%s233 + $0x58] sm:$0xf] %v2607
      %2672 = vst [vmem:[%s233 + $0x5c] sm:$0xf] %v2608
      %2673 = vst [vmem:[%s233 + $0x60] sm:$0xf] %v2609
      %2674 = vst [vmem:[%s233 + $0x64] sm:$0xf] %v2610
      %2675 = vst [vmem:[%s233 + $0x68] sm:$0xf] %v2611
      %2676 = vst [vmem:[%s233 + $0x6c] sm:$0xf] %v2612
      %2677 = vst [vmem:[%s233 + $0x70] sm:$0xf] %v2613
      %2678 = vst [vmem:[%s233 + $0x74] sm:$0xf] %v2614
      %2679 = vst [vmem:[%s233 + $0x78] sm:$0xf] %v2615
      %2680 = vst [vmem:[%s233 + $0x7c] sm:$0xf] %v2616
      %v2681 = vadd.f32 %v2489, %v2490
      %v2682 = vadd.f32 %v2681, %v2491
      %v2683 = vadd.f32 %v2682, %v2492
      %v2684 = vadd.f32 %v2683, %v2493
      %v2685 = vadd.f32 %v2684, %v2494
      %v2686 = vadd.f32 %v2685, %v2495
      %v2687 = vadd.f32 %v2686, %v2496
      %v2688 = vadd.f32 %v2687, %v2497
      %v2689 = vadd.f32 %v2688, %v2498
      %v2690 = vadd.f32 %v2689, %v2499
      %v2691 = vadd.f32 %v2690, %v2500
      %v2692 = vadd.f32 %v2691, %v2501
      %v2693 = vadd.f32 %v2692, %v2502
      %v2694 = vadd.f32 %v2693, %v2503
      %v2695 = vadd.f32 %v2694, %v2504
      %v2696 = vadd.f32 %v2695, %v2505
      %v2697 = vadd.f32 %v2696, %v2506
      %v2698 = vadd.f32 %v2697, %v2507
      %v2699 = vadd.f32 %v2698, %v2508
      %v2700 = vadd.f32 %v2699, %v2509
      %v2701 = vadd.f32 %v2700, %v2510
      %v2702 = vadd.f32 %v2701, %v2511
      %v2703 = vadd.f32 %v2702, %v2512
      %v2704 = vadd.f32 %v2703, %v2513
      %v2705 = vadd.f32 %v2704, %v2514
      %v2706 = vadd.f32 %v2705, %v2515
      %v2707 = vadd.f32 %v2706, %v2516
      %v2708 = vadd.f32 %v2707, %v2517
      %v2709 = vadd.f32 %v2708, %v2518
      %v2710 = vadd.f32 %v2709, %v2519
      %v2711 = vadd.f32 %v2710, %v2520
      %v2712 = vrot.slane %v2711, 4
      %v2713 = vadd.f32 %v2711, %v2712
      %v2714 = vrot.slane %v2713, 2
      %v2715 = vadd.f32 %v2713, %v2714
      %v2716 = vrot.slane %v2715, 1
      %v2717 = vadd.f32 %v2715, %v2716
      %v2718 = vmul.f32 %v2489, %v2489
      %v2719 = vmul.f32 %v2490, %v2490
      %v2720 = vmul.f32 %v2491, %v2491
      %v2721 = vmul.f32 %v2492, %v2492
      %v2722 = vmul.f32 %v2493, %v2493
      %v2723 = vmul.f32 %v2494, %v2494
      %v2724 = vmul.f32 %v2495, %v2495
      %v2725 = vmul.f32 %v2496, %v2496
      %v2726 = vmul.f32 %v2497, %v2497
      %v2727 = vmul.f32 %v2498, %v2498
      %v2728 = vmul.f32 %v2499, %v2499
      %v2729 = vmul.f32 %v2500, %v2500
      %v2730 = vmul.f32 %v2501, %v2501
      %v2731 = vmul.f32 %v2502, %v2502
      %v2732 = vmul.f32 %v2503, %v2503
      %v2733 = vmul.f32 %v2504, %v2504
      %v2734 = vmul.f32 %v2505, %v2505
      %v2735 = vmul.f32 %v2506, %v2506
      %v2736 = vmul.f32 %v2507, %v2507
      %v2737 = vmul.f32 %v2508, %v2508
      %v2738 = vmul.f32 %v2509, %v2509
      %v2739 = vmul.f32 %v2510, %v2510
      %v2740 = vmul.f32 %v2511, %v2511
      %v2741 = vmul.f32 %v2512, %v2512
      %v2742 = vmul.f32 %v2513, %v2513
      %v2743 = vmul.f32 %v2514, %v2514
      %v2744 = vmul.f32 %v2515, %v2515
      %v2745 = vmul.f32 %v2516, %v2516
      %v2746 = vmul.f32 %v2517, %v2517
      %v2747 = vmul.f32 %v2518, %v2518
      %v2748 = vmul.f32 %v2519, %v2519
      %v2749 = vmul.f32 %v2520, %v2520
      %v2750 = vadd.f32 %v2718, %v2719
      %v2751 = vadd.f32 %v2750, %v2720
      %v2752 = vadd.f32 %v2751, %v2721
      %v2753 = vadd.f32 %v2752, %v2722
      %v2754 = vadd.f32 %v2753, %v2723
      %v2755 = vadd.f32 %v2754, %v2724
      %v2756 = vadd.f32 %v2755, %v2725
      %v2757 = vadd.f32 %v2756, %v2726
      %v2758 = vadd.f32 %v2757, %v2727
      %v2759 = vadd.f32 %v2758, %v2728
      %v2760 = vadd.f32 %v2759, %v2729
      %v2761 = vadd.f32 %v2760, %v2730
      %v2762 = vadd.f32 %v2761, %v2731
      %v2763 = vadd.f32 %v2762, %v2732
      %v2764 = vadd.f32 %v2763, %v2733
      %v2765 = vadd.f32 %v2764, %v2734
      %v2766 = vadd.f32 %v2765, %v2735
      %v2767 = vadd.f32 %v2766, %v2736
      %v2768 = vadd.f32 %v2767, %v2737
      %v2769 = vadd.f32 %v2768, %v2738
      %v2770 = vadd.f32 %v2769, %v2739
      %v2771 = vadd.f32 %v2770, %v2740
      %v2772 = vadd.f32 %v2771, %v2741
      %v2773 = vadd.f32 %v2772, %v2742
      %v2774 = vadd.f32 %v2773, %v2743
      %v2775 = vadd.f32 %v2774, %v2744
      %v2776 = vadd.f32 %v2775, %v2745
      %v2777 = vadd.f32 %v2776, %v2746
      %v2778 = vadd.f32 %v2777, %v2747
      %v2779 = vadd.f32 %v2778, %v2748
      %v2780 = vadd.f32 %v2779, %v2749
      %v2781 = vrot.slane %v2780, 4
      %v2782 = vadd.f32 %v2780, %v2781
      %v2783 = vrot.slane %v2782, 2
      %v2784 = vadd.f32 %v2782, %v2783
      %v2785 = vrot.slane %v2784, 1
      %v2786 = vadd.f32 %v2784, %v2785
      %vm2787 = vcmask 1040384
      %v2788 = vsel %vm2787, %v2717, %v2786
      %2789 = vst [vmem:[%s238] sm:$0x3] %v2788
      %s2790 = smul.u32 32, %s17
      %p2791 = scmp.lt.s32.totalorder %s2790, 63
      %s2792 = scalar_select %p2791, %s2790, 63
      %s2793 = smul.addr %s2792, 4
      %s2794 = scalar_lea.vmem %s4, %s2793
      %p2795 = scmp.lt.s32.totalorder %s17, 1
      %s2796 = scalar_select %p2795, %s17, 1
      %s2797 = smul.addr %s2796, 2
      %s2798 = scalar_lea.vmem %s5, %s2797
      // Predicated region
      $region37: #{bottleneck_forward.5} parent=35 // pred_check
        %p2799 = pneg %p124
      $region38: #{bottleneck_forward.5} parent=35 // pred_check_branch
        %2801 = sbr.rel (%p2799) target = $region40
      $region39: #{bottleneck_forward.5} parent=35 // pred_region
        %s2802 = smul.u32 32, %s17
      $region40: #{bottleneck_forward.5} parent=35 // pred_fallthru
        _
      // Predicated region
      $region41: #{bottleneck_forward.5} parent=35 // pred_check
        %p2803 = pneg %p150
      $region42: #{bottleneck_forward.5} parent=35 // pred_check_branch
        %2805 = sbr.rel (%p2803) target = $region44
      $region43: #{bottleneck_forward.5} parent=35 // pred_region
        _
      $region44: #{bottleneck_forward.5} parent=35 // pred_fallthru
        _
    $region36: #{bottleneck_forward.5} parent=5 // pred_fallthru
      _
    %p2806 = scmp.le.s32.totalorder 2, %s12
    // Predicated region
    $region45: #{bottleneck_forward.5} parent=5 // pred_check
      %p2807 = pneg %p2806
    $region46: #{bottleneck_forward.5} parent=5 // pred_check_branch
      %2809 = sbr.rel (%p2807) target = $region48
    $region47: #{bottleneck_forward.5} parent=5 // pred_region
      %s2810 = ssub.s32 %s12, 2
      // Predicated region
      $region49: #{bottleneck_forward.5} parent=47 // pred_check
        %p2811 = pneg %p130
      $region50: #{bottleneck_forward.5} parent=47 // pred_check_branch
        %2813 = sbr.rel (%p2811) target = $region52
      $region51: #{bottleneck_forward.5} parent=47 // pred_region
        %s2814 = smul.u32 32, %s18
        %p2815 = scmp.lt.s32.totalorder %s2814, 63
        %s2816 = scalar_select %p2815, %s2814, 63
        %s2817 = smul.addr %s2816, 4
        %s2818 = scalar_lea.vmem %s4, %s2817
      $region52: #{bottleneck_forward.5} parent=47 // pred_fallthru
        _
      // Predicated region
      $region53: #{bottleneck_forward.5} parent=47 // pred_check
        %p2819 = pneg %p156
      $region54: #{bottleneck_forward.5} parent=47 // pred_check_branch
        %2821 = sbr.rel (%p2819) target = $region56
      $region55: #{bottleneck_forward.5} parent=47 // pred_region
        %p2822 = scmp.lt.s32.totalorder %s18, 1
        %s2823 = scalar_select %p2822, %s18, 1
        %s2824 = smul.addr %s2823, 2
        %s2825 = scalar_lea.vmem %s5, %s2824
      $region56: #{bottleneck_forward.5} parent=47 // pred_fallthru
        _
    $region48: #{bottleneck_forward.5} parent=5 // pred_fallthru
      _
  $region6: #{bottleneck_forward.5} parent=0 // loop_footer
    %s16 = sadd.s32 1, %s12
  $region7: #{bottleneck_forward.5} parent=0 // loop_footer_branch
    %11 = sbr.rel target = $region3
  $region8: #{bottleneck_forward.5} parent=0 // loop_exit
    _

</llo_original>
